<compile_context>
chip_gen: v7x
topology: tpu7x:2x2x1
jax: 0.10.0
libtpu: 0.0.40
codegen_flags: <defaults>
</compile_context>

<pallas_src>
import functools

import jax
import jax.numpy as jnp
from jax.experimental import pallas as pl
from jax.experimental.pallas import tpu as pltpu


def _relu_conv_bn_kernel(p_ref, w_ref, invs_ref, gamma_ref, beta_ref, out_ref):
    # p_ref    : (M, 9*Cin) bf16  ReLU'd im2col patches (constant block -> resident)
    # w_ref    : (9*Cin, TC) int8 quantized weight tile for this Cout block
    # invs_ref : (1, TC) f32      per-output-channel dequant scale (1/quant_scale)
    # gamma_ref: (1, TC) f32      BN affine scale
    # beta_ref : (1, TC) f32      BN affine shift
    # out_ref  : (M, TC)          batch-normalized output tile
    w = w_ref[...].astype(jnp.bfloat16)  # int8 -> bf16 VPU cast, hides under weight DMA
    acc = jnp.dot(p_ref[...], w, preferred_element_type=jnp.float32)  # MXU, f32 acc
    acc = acc * invs_ref[...]            # exact per-channel dequant (keeps BN eps exact)

    # BatchNorm2d (training mode): per-channel batch mean / biased variance over the
    # N*H*W rows, computed in a single pass in f32.
    m_rows = acc.shape[0]
    s1 = jnp.sum(acc, axis=0, keepdims=True)
    s2 = jnp.sum(acc * acc, axis=0, keepdims=True)
    mean = s1 * (1.0 / m_rows)
    var = s2 * (1.0 / m_rows) - mean * mean
    scale = jax.lax.rsqrt(var + 1e-5) * gamma_ref[...]
    out_ref[...] = ((acc - mean) * scale + beta_ref[...]).astype(out_ref.dtype)


def prepare_conv_weight_int8(w_oihw):
    """One-time weight repack + quantization (hoisted out of the hot path):
    OIHW (Cout, Cin, 3, 3) -> (9*Cin, Cout) int8 with rows ordered (kh*3+kw)*Cin + cin,
    per-output-channel symmetric scale.  Returns (w_q int8, inv_scale f32 (1, Cout))."""
    cout, cin, kh, kw = w_oihw.shape
    w2d = jnp.transpose(w_oihw, (2, 3, 1, 0)).reshape(kh * kw * cin, cout)
    w2d = w2d.astype(jnp.float32)
    maxabs = jnp.max(jnp.abs(w2d), axis=0, keepdims=True)          # (1, Cout)
    scale = 127.0 / jnp.maximum(maxabs, 1e-30)
    w_q = jnp.clip(jnp.round(w2d * scale), -127.0, 127.0).astype(jnp.int8)
    inv_scale = (1.0 / scale).astype(jnp.float32)                  # (1, Cout)
    return w_q, inv_scale


def dequantize_weight(w_q, inv_scale, cin, cout):
    """Rebuild the effective OIHW weights used by the kernel (for reference checks)."""
    w2d = w_q.astype(jnp.float32) * inv_scale                      # (9*Cin, Cout)
    w4 = w2d.reshape(3, 3, cin, cout)                              # (kh, kw, cin, cout)
    return jnp.transpose(w4, (3, 2, 0, 1))                         # OIHW


def _pick_cout_tile(cout):
    # Finer Cout tiles -> more grid steps (better DMA/compute overlap, >=4 steps per
    # TensorCore under megacore on v7x); 128 keeps the output lane-dense.
    for tc in (128, 256):
        if cout > tc and cout % tc == 0:
            return tc
    return cout


@functools.partial(jax.jit, static_argnames=("cout_tile", "single_buffer_patches"))
def relu_conv_bn(x_nchw, w_q, inv_scale, gamma, beta, *,
                 cout_tile=None, single_buffer_patches=True):
    """x_nchw: (N, Cin, H, W) f32; w_q: (9*Cin, Cout) int8 from prepare_conv_weight_int8;
    inv_scale: (1, Cout) f32; gamma/beta: (Cout,).  Returns (N, Cout, H, W) f32."""
    N, Cin, H, W = x_nchw.shape
    K, Cout = w_q.shape
    assert K == 9 * Cin
    tc = cout_tile if cout_tile is not None else _pick_cout_tile(Cout)
    assert Cout % tc == 0
    M = N * H * W

    # ---- layout glue + hoisted ReLU / bf16 cast (done ONCE, not per grid step) ----
    x_nhwc = jnp.transpose(x_nchw, (0, 2, 3, 1))
    x_relu = jnp.maximum(x_nhwc, 0.0).astype(jnp.bfloat16)
    xpad = jnp.pad(x_relu, ((0, 0), (1, 1), (1, 1), (0, 0)))
    # im2col: tap order (kh*3 + kw), channel-fastest -> column index (kh*3+kw)*Cin + c
    taps = [xpad[:, kh:kh + H, kw:kw + W, :] for kh in range(3) for kw in range(3)]
    patches = jnp.concatenate(taps, axis=-1).reshape(M, K)

    invs2 = inv_scale.reshape(1, Cout).astype(jnp.float32)
    g2 = gamma.reshape(1, Cout).astype(jnp.float32)
    b2 = beta.reshape(1, Cout).astype(jnp.float32)

    patches_kwargs = {}
    if single_buffer_patches:
        # Constant index_map -> second pipeline buffer is pure waste; single-buffer it.
        patches_kwargs["pipeline_mode"] = pl.Buffered(buffer_count=1)

    flops = int(2 * M * K * Cout)
    bytes_accessed = int(
        patches.size * 2          # bf16 patch matrix (resident, read once)
        + w_q.size * 1            # int8 weights (dominant stream)
        + M * Cout * 4            # f32 output
        + 3 * Cout * 4)           # inv_scale / gamma / beta

    out2d = pl.pallas_call(
        _relu_conv_bn_kernel,
        out_shape=jax.ShapeDtypeStruct((M, Cout), x_nchw.dtype),
        grid=(Cout // tc,),
        in_specs=[
            pl.BlockSpec((M, K), lambda j: (0, 0), **patches_kwargs),  # resident patches
            pl.BlockSpec((K, tc), lambda j: (0, j)),                   # streamed int8 weights
            pl.BlockSpec((1, tc), lambda j: (0, j)),                   # dequant scale tile
            pl.BlockSpec((1, tc), lambda j: (0, j)),                   # gamma tile
            pl.BlockSpec((1, tc), lambda j: (0, j)),                   # beta tile
        ],
        out_specs=pl.BlockSpec((M, tc), lambda j: (0, j)),
        compiler_params=pltpu.CompilerParams(
            dimension_semantics=("parallel",),          # megacore split across TCs
            vmem_limit_bytes=32 * 1024 * 1024),         # v5e scoped-VMEM safety margin
        cost_estimate=pl.CostEstimate(
            flops=flops, transcendentals=int(Cout), bytes_accessed=bytes_accessed),
    )(patches, w_q, invs2, g2, b2)

    out_nhwc = out2d.reshape(N, H, W, Cout)
    return jnp.transpose(out_nhwc, (0, 3, 1, 2))


def _reference(x_nchw, w_oihw, gamma, beta):
    """Pure-JAX reference of the PyTorch forward (training-mode BN, f32 conv)."""
    xr = jnp.maximum(x_nchw, 0.0)
    y = jax.lax.conv_general_dilated(
        xr, w_oihw, window_strides=(1, 1), padding=((1, 1), (1, 1)),
        dimension_numbers=("NCHW", "OIHW", "NCHW"))
    mean = jnp.mean(y, axis=(0, 2, 3), keepdims=True)
    var = jnp.mean((y - mean) ** 2, axis=(0, 2, 3), keepdims=True)
    return ((y - mean) * jax.lax.rsqrt(var + 1e-5)
            * gamma.reshape(1, -1, 1, 1) + beta.reshape(1, -1, 1, 1))


if __name__ == "__main__":
    # Scaled-down version of the module's 1x1024x7x7 input (channels 1024 -> 256) so the
    # Cout grid has multiple tiles and the pipelined weight-streaming path is exercised.
    N, C, H, W = 1, 256, 7, 7

    key = jax.random.PRNGKey(0)
    kx, kw, kg, kb = jax.random.split(key, 4)
    x = jax.random.normal(kx, (N, C, H, W), jnp.float32)
    w = jax.random.normal(kw, (C, C, 3, 3), jnp.float32) * 0.05   # Conv2d weight, bias=False
    gamma = 1.0 + 0.1 * jax.random.normal(kg, (C,), jnp.float32)  # BN affine weight
    beta = 0.1 * jax.random.normal(kb, (C,), jnp.float32)         # BN affine bias

    w_q, inv_scale = prepare_conv_weight_int8(w)  # one-time repack + int8 quantization

    try:
        out = jax.block_until_ready(relu_conv_bn(x, w_q, inv_scale, gamma, beta))
    except Exception:
        # Fallback if this JAX build rejects pl.Buffered(1) on the resident patches block.
        out = jax.block_until_ready(
            relu_conv_bn(x, w_q, inv_scale, gamma, beta, single_buffer_patches=False))

    assert out.shape == (N, C, H, W)

    # Tight check: kernel vs an f32 reference that uses the SAME (dequantized) int8
    # weights — isolates kernel correctness from the deliberate weight quantization.
    w_deq = dequantize_weight(w_q, inv_scale, C, C)
    ref_q = _reference(x, w_deq, gamma, beta)
    err_q = float(jnp.max(jnp.abs(out - ref_q)))
    assert jnp.allclose(out, ref_q, atol=2e-2, rtol=2e-2), err_q

    # Loose check vs the full-precision module: int8 weights + bf16 patches feed the MXU
    # (f32 accumulation, exact per-channel dequant, f32 BN stats), so the tolerance vs the
    # f32 reference is relaxed accordingly (BN renormalizes per channel, bounding drift).
    ref = _reference(x, w, gamma, beta)
    err = float(jnp.max(jnp.abs(out - ref)))
    assert jnp.allclose(out, ref, atol=8e-2, rtol=8e-2), err

    print("KERNEL_OK")
</pallas_src>

<mosaic_0001>
module attributes {stable_mosaic.version = 11 : i64} {
  func.func @_relu_conv_bn_kernel(%arg0: i32, %arg1: memref<49x2304xbf16, #tpu.memory_space<vmem>>, %arg2: memref<2304x128xi8, #tpu.memory_space<vmem>>, %arg3: memref<1x128xf32, #tpu.memory_space<vmem>>, %arg4: memref<1x128xf32, #tpu.memory_space<vmem>>, %arg5: memref<1x128xf32, #tpu.memory_space<vmem>>, %arg6: memref<49x128xf32, #tpu.memory_space<vmem>>) attributes {dimension_semantics = [#tpu.dimension_semantics<parallel>], iteration_bounds = array<i64: 2>, scalar_prefetch = 0 : i64, scratch_operands = 0 : i64, tpu.core_type = #tpu.core_type<tc>, window_params = [{pipeline_mode = #tpu.pipeline_mode<synchronous>, transform_indices = @transform_0, window_bounds = array<i64: 49, 2304>}, {transform_indices = @transform_1, window_bounds = array<i64: 2304, 128>}, {transform_indices = @transform_2, window_bounds = array<i64: 1, 128>}, {transform_indices = @transform_3, window_bounds = array<i64: 1, 128>}, {transform_indices = @transform_4, window_bounds = array<i64: 1, 128>}, {transform_indices = @transform_5, window_bounds = array<i64: 49, 128>}]} {
    %c0 = arith.constant 0 : index
    %c0_0 = arith.constant 0 : index
    %0 = vector.load %arg2[%c0, %c0_0] : memref<2304x128xi8, #tpu.memory_space<vmem>>, vector<2304x128xi8>
    %1 = arith.sitofp %0 : vector<2304x128xi8> to vector<2304x128xbf16>
    %c0_1 = arith.constant 0 : index
    %c0_2 = arith.constant 0 : index
    %2 = vector.load %arg1[%c0_1, %c0_2] : memref<49x2304xbf16, #tpu.memory_space<vmem>>, vector<49x2304xbf16>
    %cst = arith.constant dense<0.000000e+00> : vector<49x128xf32>
    %3 = tpu.matmul %2, %1, %cst {dimension_numbers = #tpu.dot_dimension_numbers<[1], [0], [0], [1], [0, 0, 1, 1], [], []>} : vector<49x2304xbf16>, vector<2304x128xbf16>, vector<49x128xf32> -> vector<49x128xf32>
    %c0_3 = arith.constant 0 : index
    %c0_4 = arith.constant 0 : index
    %4 = vector.load %arg3[%c0_3, %c0_4] : memref<1x128xf32, #tpu.memory_space<vmem>>, vector<1x128xf32>
    %5 = vector.broadcast %4 : vector<1x128xf32> to vector<49x128xf32>
    %6 = arith.mulf %3, %5 : vector<49x128xf32>
    %cst_5 = arith.constant dense<0.000000e+00> : vector<128xf32>
    %7 = vector.multi_reduction <add>, %6, %cst_5 [0] : vector<49x128xf32> to vector<128xf32>
    %8 = vector.shape_cast %7 : vector<128xf32> to vector<1x128xf32>
    %9 = arith.mulf %6, %6 : vector<49x128xf32>
    %cst_6 = arith.constant dense<0.000000e+00> : vector<128xf32>
    %10 = vector.multi_reduction <add>, %9, %cst_6 [0] : vector<49x128xf32> to vector<128xf32>
    %11 = vector.shape_cast %10 : vector<128xf32> to vector<1x128xf32>
    %cst_7 = arith.constant 0.0204081628 : f32
    %12 = vector.broadcast %cst_7 : f32 to vector<1x128xf32>
    %13 = arith.mulf %8, %12 : vector<1x128xf32>
    %cst_8 = arith.constant 0.0204081628 : f32
    %14 = vector.broadcast %cst_8 : f32 to vector<1x128xf32>
    %15 = arith.mulf %11, %14 : vector<1x128xf32>
    %16 = arith.mulf %13, %13 : vector<1x128xf32>
    %17 = arith.subf %15, %16 : vector<1x128xf32>
    %cst_9 = arith.constant 9.99999974E-6 : f32
    %18 = vector.broadcast %cst_9 : f32 to vector<1x128xf32>
    %19 = arith.addf %17, %18 : vector<1x128xf32>
    %20 = math.rsqrt %19 : vector<1x128xf32>
    %c0_10 = arith.constant 0 : index
    %c0_11 = arith.constant 0 : index
    %21 = vector.load %arg4[%c0_10, %c0_11] : memref<1x128xf32, #tpu.memory_space<vmem>>, vector<1x128xf32>
    %22 = arith.mulf %20, %21 : vector<1x128xf32>
    %23 = vector.broadcast %13 : vector<1x128xf32> to vector<49x128xf32>
    %24 = arith.subf %6, %23 : vector<49x128xf32>
    %25 = vector.broadcast %22 : vector<1x128xf32> to vector<49x128xf32>
    %26 = arith.mulf %24, %25 : vector<49x128xf32>
    %c0_12 = arith.constant 0 : index
    %c0_13 = arith.constant 0 : index
    %27 = vector.load %arg5[%c0_12, %c0_13] : memref<1x128xf32, #tpu.memory_space<vmem>>, vector<1x128xf32>
    %28 = vector.broadcast %27 : vector<1x128xf32> to vector<49x128xf32>
    %29 = arith.addf %26, %28 : vector<49x128xf32>
    %c0_14 = arith.constant 0 : index
    %c0_15 = arith.constant 0 : index
    %30 = vector.load %arg6[%c0_14, %c0_15] : memref<49x128xf32, #tpu.memory_space<vmem>>, vector<49x128xf32>
    tpu.vector_store %arg6[%c0_14, %c0_15], %29 {strides = array<i32>} : memref<49x128xf32, #tpu.memory_space<vmem>>, vector<49x128xf32>,
    return
  }
  func.func @transform_0(%arg0: i32) -> (i32, i32) {
    %c0_i32 = arith.constant 0 : i32
    %c0_i32_0 = arith.constant 0 : i32
    %c0_i32_1 = arith.constant 0 : i32
    return %c0_i32, %c0_i32_0 : i32, i32
  }
  func.func @transform_1(%arg0: i32) -> (i32, i32) {
    %c0_i32 = arith.constant 0 : i32
    %c0_i32_0 = arith.constant 0 : i32
    return %c0_i32, %arg0 : i32, i32
  }
  func.func @transform_2(%arg0: i32) -> (i32, i32) {
    %c0_i32 = arith.constant 0 : i32
    %c0_i32_0 = arith.constant 0 : i32
    return %c0_i32, %arg0 : i32, i32
  }
  func.func @transform_3(%arg0: i32) -> (i32, i32) {
    %c0_i32 = arith.constant 0 : i32
    %c0_i32_0 = arith.constant 0 : i32
    return %c0_i32, %arg0 : i32, i32
  }
  func.func @transform_4(%arg0: i32) -> (i32, i32) {
    %c0_i32 = arith.constant 0 : i32
    %c0_i32_0 = arith.constant 0 : i32
    return %c0_i32, %arg0 : i32, i32
  }
  func.func @transform_5(%arg0: i32) -> (i32, i32) {
    %c0_i32 = arith.constant 0 : i32
    %c0_i32_0 = arith.constant 0 : i32
    return %c0_i32, %arg0 : i32, i32
  }
}

module attributes {stable_mosaic.version = 11 : i64} {
  func.func @_relu_conv_bn_kernel(%arg0: i32, %arg1: memref<49x2304xbf16, #tpu.memory_space<vmem>>, %arg2: memref<2304x128xi8, #tpu.memory_space<vmem>>, %arg3: memref<1x128xf32, #tpu.memory_space<vmem>>, %arg4: memref<1x128xf32, #tpu.memory_space<vmem>>, %arg5: memref<1x128xf32, #tpu.memory_space<vmem>>, %arg6: memref<49x128xf32, #tpu.memory_space<vmem>>) attributes {dimension_semantics = [#tpu.dimension_semantics<parallel>], iteration_bounds = array<i64: 2>, scalar_prefetch = 0 : i64, scratch_operands = 0 : i64, tpu.core_type = #tpu.core_type<tc>, window_params = [{pipeline_mode = #tpu.pipeline_mode<synchronous>, transform_indices = @transform_0, window_bounds = array<i64: 49, 2304>}, {transform_indices = @transform_1, window_bounds = array<i64: 2304, 128>}, {transform_indices = @transform_2, window_bounds = array<i64: 1, 128>}, {transform_indices = @transform_3, window_bounds = array<i64: 1, 128>}, {transform_indices = @transform_4, window_bounds = array<i64: 1, 128>}, {transform_indices = @transform_5, window_bounds = array<i64: 49, 128>}]} {
    %c0 = arith.constant 0 : index
    %c0_0 = arith.constant 0 : index
    %0 = vector.load %arg2[%c0, %c0_0] : memref<2304x128xi8, #tpu.memory_space<vmem>>, vector<2304x128xi8>
    %1 = arith.sitofp %0 : vector<2304x128xi8> to vector<2304x128xbf16>
    %c0_1 = arith.constant 0 : index
    %c0_2 = arith.constant 0 : index
    %2 = vector.load %arg1[%c0_1, %c0_2] : memref<49x2304xbf16, #tpu.memory_space<vmem>>, vector<49x2304xbf16>
    %cst = arith.constant dense<0.000000e+00> : vector<49x128xf32>
    %3 = tpu.matmul %2, %1, %cst {dimension_numbers = #tpu.dot_dimension_numbers<[1], [0], [0], [1], [0, 0, 1, 1], [], []>} : vector<49x2304xbf16>, vector<2304x128xbf16>, vector<49x128xf32> -> vector<49x128xf32>
    %c0_3 = arith.constant 0 : index
    %c0_4 = arith.constant 0 : index
    %4 = vector.load %arg3[%c0_3, %c0_4] : memref<1x128xf32, #tpu.memory_space<vmem>>, vector<1x128xf32>
    %5 = vector.broadcast %4 : vector<1x128xf32> to vector<49x128xf32>
    %6 = arith.mulf %3, %5 : vector<49x128xf32>
    %cst_5 = arith.constant dense<0.000000e+00> : vector<128xf32>
    %7 = vector.multi_reduction <add>, %6, %cst_5 [0] : vector<49x128xf32> to vector<128xf32>
    %8 = vector.shape_cast %7 : vector<128xf32> to vector<1x128xf32>
    %9 = arith.mulf %6, %6 : vector<49x128xf32>
    %cst_6 = arith.constant dense<0.000000e+00> : vector<128xf32>
    %10 = vector.multi_reduction <add>, %9, %cst_6 [0] : vector<49x128xf32> to vector<128xf32>
    %11 = vector.shape_cast %10 : vector<128xf32> to vector<1x128xf32>
    %cst_7 = arith.constant 0.0204081628 : f32
    %12 = vector.broadcast %cst_7 : f32 to vector<1x128xf32>
    %13 = arith.mulf %8, %12 : vector<1x128xf32>
    %cst_8 = arith.constant 0.0204081628 : f32
    %14 = vector.broadcast %cst_8 : f32 to vector<1x128xf32>
    %15 = arith.mulf %11, %14 : vector<1x128xf32>
    %16 = arith.mulf %13, %13 : vector<1x128xf32>
    %17 = arith.subf %15, %16 : vector<1x128xf32>
    %cst_9 = arith.constant 9.99999974E-6 : f32
    %18 = vector.broadcast %cst_9 : f32 to vector<1x128xf32>
    %19 = arith.addf %17, %18 : vector<1x128xf32>
    %20 = math.rsqrt %19 : vector<1x128xf32>
    %c0_10 = arith.constant 0 : index
    %c0_11 = arith.constant 0 : index
    %21 = vector.load %arg4[%c0_10, %c0_11] : memref<1x128xf32, #tpu.memory_space<vmem>>, vector<1x128xf32>
    %22 = arith.mulf %20, %21 : vector<1x128xf32>
    %23 = vector.broadcast %13 : vector<1x128xf32> to vector<49x128xf32>
    %24 = arith.subf %6, %23 : vector<49x128xf32>
    %25 = vector.broadcast %22 : vector<1x128xf32> to vector<49x128xf32>
    %26 = arith.mulf %24, %25 : vector<49x128xf32>
    %c0_12 = arith.constant 0 : index
    %c0_13 = arith.constant 0 : index
    %27 = vector.load %arg5[%c0_12, %c0_13] : memref<1x128xf32, #tpu.memory_space<vmem>>, vector<1x128xf32>
    %28 = vector.broadcast %27 : vector<1x128xf32> to vector<49x128xf32>
    %29 = arith.addf %26, %28 : vector<49x128xf32>
    %c0_14 = arith.constant 0 : index
    %c0_15 = arith.constant 0 : index
    %30 = vector.load %arg6[%c0_14, %c0_15] : memref<49x128xf32, #tpu.memory_space<vmem>>, vector<49x128xf32>
    tpu.vector_store %arg6[%c0_14, %c0_15], %29 {strides = array<i32>} : memref<49x128xf32, #tpu.memory_space<vmem>>, vector<49x128xf32>,
    return
  }
  func.func @transform_0(%arg0: i32) -> (i32, i32) {
    %c0_i32 = arith.constant 0 : i32
    %c0_i32_0 = arith.constant 0 : i32
    %c0_i32_1 = arith.constant 0 : i32
    return %c0_i32, %c0_i32_0 : i32, i32
  }
  func.func @transform_1(%arg0: i32) -> (i32, i32) {
    %c0_i32 = arith.constant 0 : i32
    %c0_i32_0 = arith.constant 0 : i32
    return %c0_i32, %arg0 : i32, i32
  }
  func.func @transform_2(%arg0: i32) -> (i32, i32) {
    %c0_i32 = arith.constant 0 : i32
    %c0_i32_0 = arith.constant 0 : i32
    return %c0_i32, %arg0 : i32, i32
  }
  func.func @transform_3(%arg0: i32) -> (i32, i32) {
    %c0_i32 = arith.constant 0 : i32
    %c0_i32_0 = arith.constant 0 : i32
    return %c0_i32, %arg0 : i32, i32
  }
  func.func @transform_4(%arg0: i32) -> (i32, i32) {
    %c0_i32 = arith.constant 0 : i32
    %c0_i32_0 = arith.constant 0 : i32
    return %c0_i32, %arg0 : i32, i32
  }
  func.func @transform_5(%arg0: i32) -> (i32, i32) {
    %c0_i32 = arith.constant 0 : i32
    %c0_i32_0 = arith.constant 0 : i32
    return %c0_i32, %arg0 : i32, i32
  }
}

</mosaic_0001>

<llo_original>
// kernel: relu_conv_bn.1
$region0: #{relu_conv_bn.1}
  #allocation0 [shape = 'u32[]', space=smem, size = 0x4, offset = 0x4, fixed_abs, tag = 'smem constant byte address 0x4 - core index']
  #allocation1 [shape = 'u32[144,128]{1,0:T(1,128)}', space=vmem, size = 0x12000, scoped, tag = 'internal scratch']
  %s0 = inlined_call_operand.vmem [shape: bf16[49,2304], index: 0, kind: input, shape index: {}]
  %s1 = inlined_call_operand.vmem [shape: s8[2304,256], index: 1, kind: input, shape index: {}]
  %s2 = inlined_call_operand.vmem [shape: f32[1,256], index: 2, kind: input, shape index: {}]
  %s3 = inlined_call_operand.vmem [shape: f32[1,256], index: 3, kind: input, shape index: {}]
  %s4 = inlined_call_operand.vmem [shape: f32[1,256], index: 4, kind: input, shape index: {}]
  %s5 = inlined_call_operand.vmem [shape: f32[49,256], index: 5, kind: output, shape index: {}]
  %s6 = sld [smem:[#allocation0]]
  $region125: #{relu_conv_bn.1} parent=0
    _
  %s8 = ssub.s32 1, %s6
  %s9 = scalar_select 0, %s8, %s6
  $region1: #{relu_conv_bn.1} parent=0
    #allocation2 [shape = 'u8[589824]{0}', space=vmem, size = 0x90000, scoped, tag = 'input window, operand 1']
    #allocation3 [shape = 'u8[57344]{0}', space=vmem, size = 0xe000, scoped, tag = 'output window, operand 0']
    loop: start=0, step=1, limit=4
    $region2: #{relu_conv_bn.1} parent=1 // loop_pre_header
      _
    $region3: #{relu_conv_bn.1} parent=1 // loop_header
      %s11 = sphi 0, %s15
      %p12 = scmp.ge.s32.totalorder %s11, 4
      %s19 = sphi 0, %s19
      %s21 = sphi 0, %s19
      %s22 = sphi 0, %s21
      %s36 = sphi 0, %s22
      %s42 = sphi 0, %s44
      %s45 = sphi 0, %s42
      %s46 = sphi 0, %s45
      %s62 = sphi 0, %s46
      %s68 = sphi 0, %s70
      %s71 = sphi 0, %s68
      %s72 = sphi 0, %s71
      %s88 = sphi 0, %s72
      %s94 = sphi 0, %s96
      %s97 = sphi 0, %s94
      %s98 = sphi 0, %s97
      %s114 = sphi 0, %s98
      %s120 = sphi 0, %s122
      %s123 = sphi 0, %s120
      %s124 = sphi 0, %s123
      %s140 = sphi 0, %s124
      %s146 = sphi 0, %s148
      %s149 = sphi 0, %s146
      %s150 = sphi 0, %s149
      %s166 = sphi 0, %s150
    $region4: #{relu_conv_bn.1} parent=1 // loop_header_branch
      %14 = sbr.rel (%p12) target = $region8
    $region5: #{relu_conv_bn.1} parent=1 // loop_body
      %s16 = ssub.s32 %s11, 1
      %s17 = ssub.s32 %s11, 2
      %s18 = sadd.s32 %s11, 1
      %s20 = sadd.s32 %s19, 1
      %p23 = scmp.eq.s32.totalorder %s11, 1
      %p24 = scmp.ne.s32.totalorder %s19, %s21
      %p25 = scmp.eq.s32.totalorder %s11, 0
      %p26 = por %p24, %p25
      %p27 = scmp.ne.s32.totalorder %s19, %s21
      %p28 = scmp.eq.s32.totalorder %s16, 1
      %p29 = por %p27, %p28
      %p30 = scmp.ne.s32.totalorder %s21, %s22
      %p31 = scmp.eq.s32.totalorder %s16, 0
      %p32 = por %p30, %p31
      %p33 = scmp.ne.s32.totalorder %s21, %s22
      %p34 = scmp.eq.s32.totalorder %s17, 1
      %p35 = por %p33, %p34
      %p37 = scmp.ne.s32.totalorder %s22, %s36
      %p38 = scmp.eq.s32.totalorder %s17, 0
      %p39 = por %p37, %p38
      %s40 = ssub.s32 %s11, %s18
      %p41 = scmp.eq.s32.totalorder %s40, 0
      %s43 = sadd.s32 %s42, 1
      %s44 = scalar_select %p41, %s42, %s43
      %p47 = pneg %p41
      %p48 = scmp.eq.s32.totalorder %s11, 1
      %p49 = por %p47, %p48
      %p50 = scmp.ne.s32.totalorder %s42, %s45
      %p51 = scmp.eq.s32.totalorder %s11, 0
      %p52 = por %p50, %p51
      %p53 = scmp.ne.s32.totalorder %s42, %s45
      %p54 = scmp.eq.s32.totalorder %s16, 1
      %p55 = por %p53, %p54
      %p56 = scmp.ne.s32.totalorder %s45, %s46
      %p57 = scmp.eq.s32.totalorder %s16, 0
      %p58 = por %p56, %p57
      %p59 = scmp.ne.s32.totalorder %s45, %s46
      %p60 = scmp.eq.s32.totalorder %s17, 1
      %p61 = por %p59, %p60
      %p63 = scmp.ne.s32.totalorder %s46, %s62
      %p64 = scmp.eq.s32.totalorder %s17, 0
      %p65 = por %p63, %p64
      %s66 = ssub.s32 %s11, %s18
      %p67 = scmp.eq.s32.totalorder %s66, 0
      %s69 = sadd.s32 %s68, 1
      %s70 = scalar_select %p67, %s68, %s69
      %p73 = pneg %p67
      %p74 = scmp.eq.s32.totalorder %s11, 1
      %p75 = por %p73, %p74
      %p76 = scmp.ne.s32.totalorder %s68, %s71
      %p77 = scmp.eq.s32.totalorder %s11, 0
      %p78 = por %p76, %p77
      %p79 = scmp.ne.s32.totalorder %s68, %s71
      %p80 = scmp.eq.s32.totalorder %s16, 1
      %p81 = por %p79, %p80
      %p82 = scmp.ne.s32.totalorder %s71, %s72
      %p83 = scmp.eq.s32.totalorder %s16, 0
      %p84 = por %p82, %p83
      %p85 = scmp.ne.s32.totalorder %s71, %s72
      %p86 = scmp.eq.s32.totalorder %s17, 1
      %p87 = por %p85, %p86
      %p89 = scmp.ne.s32.totalorder %s72, %s88
      %p90 = scmp.eq.s32.totalorder %s17, 0
      %p91 = por %p89, %p90
      %s92 = ssub.s32 %s11, %s18
      %p93 = scmp.eq.s32.totalorder %s92, 0
      %s95 = sadd.s32 %s94, 1
      %s96 = scalar_select %p93, %s94, %s95
      %p99 = pneg %p93
      %p100 = scmp.eq.s32.totalorder %s11, 1
      %p101 = por %p99, %p100
      %p102 = scmp.ne.s32.totalorder %s94, %s97
      %p103 = scmp.eq.s32.totalorder %s11, 0
      %p104 = por %p102, %p103
      %p105 = scmp.ne.s32.totalorder %s94, %s97
      %p106 = scmp.eq.s32.totalorder %s16, 1
      %p107 = por %p105, %p106
      %p108 = scmp.ne.s32.totalorder %s97, %s98
      %p109 = scmp.eq.s32.totalorder %s16, 0
      %p110 = por %p108, %p109
      %p111 = scmp.ne.s32.totalorder %s97, %s98
      %p112 = scmp.eq.s32.totalorder %s17, 1
      %p113 = por %p111, %p112
      %p115 = scmp.ne.s32.totalorder %s98, %s114
      %p116 = scmp.eq.s32.totalorder %s17, 0
      %p117 = por %p115, %p116
      %s118 = ssub.s32 %s11, %s18
      %p119 = scmp.eq.s32.totalorder %s118, 0
      %s121 = sadd.s32 %s120, 1
      %s122 = scalar_select %p119, %s120, %s121
      %p125 = pneg %p119
      %p126 = scmp.eq.s32.totalorder %s11, 1
      %p127 = por %p125, %p126
      %p128 = scmp.ne.s32.totalorder %s120, %s123
      %p129 = scmp.eq.s32.totalorder %s11, 0
      %p130 = por %p128, %p129
      %p131 = scmp.ne.s32.totalorder %s120, %s123
      %p132 = scmp.eq.s32.totalorder %s16, 1
      %p133 = por %p131, %p132
      %p134 = scmp.ne.s32.totalorder %s123, %s124
      %p135 = scmp.eq.s32.totalorder %s16, 0
      %p136 = por %p134, %p135
      %p137 = scmp.ne.s32.totalorder %s123, %s124
      %p138 = scmp.eq.s32.totalorder %s17, 1
      %p139 = por %p137, %p138
      %p141 = scmp.ne.s32.totalorder %s124, %s140
      %p142 = scmp.eq.s32.totalorder %s17, 0
      %p143 = por %p141, %p142
      %s144 = ssub.s32 %s11, %s18
      %p145 = scmp.eq.s32.totalorder %s144, 0
      %s147 = sadd.s32 %s146, 1
      %s148 = scalar_select %p145, %s146, %s147
      %p151 = pneg %p145
      %p152 = scmp.eq.s32.totalorder %s11, 1
      %p153 = por %p151, %p152
      %p154 = scmp.ne.s32.totalorder %s146, %s149
      %p155 = scmp.eq.s32.totalorder %s11, 0
      %p156 = por %p154, %p155
      %p157 = scmp.ne.s32.totalorder %s146, %s149
      %p158 = scmp.eq.s32.totalorder %s16, 1
      %p159 = por %p157, %p158
      %p160 = scmp.ne.s32.totalorder %s149, %s150
      %p161 = scmp.eq.s32.totalorder %s16, 0
      %p162 = por %p160, %p161
      %p163 = scmp.ne.s32.totalorder %s149, %s150
      %p164 = scmp.eq.s32.totalorder %s17, 1
      %p165 = por %p163, %p164
      %p167 = scmp.ne.s32.totalorder %s150, %s166
      %p168 = scmp.eq.s32.totalorder %s17, 0
      %p169 = por %p167, %p168
      %p170 = scmp.le.s32.totalorder 1, %s11
      %p171 = scmp.lt.s32.totalorder %s11, 3
      %p172 = pnand %p170, %p171
      %p173 = pneg %p172
      // Predicated region
      $region9: #{relu_conv_bn.1} parent=5 // pred_check
        _
      $region10: #{relu_conv_bn.1} parent=5 // pred_check_branch
        %175 = sbr.rel (%p172) target = $region12
      $region11: #{relu_conv_bn.1} parent=5 // pred_region
        %s176 = ssub.s32 %s11, 1
        // Predicated region
        $region13: #{relu_conv_bn.1} parent=11 // pred_check
          %p177 = pneg %p32
        $region14: #{relu_conv_bn.1} parent=11 // pred_check_branch
          %179 = sbr.rel (%p177) target = $region16
        $region15: #{relu_conv_bn.1} parent=11 // pred_region
          _
        $region16: #{relu_conv_bn.1} parent=11 // pred_fallthru
          _
      $region12: #{relu_conv_bn.1} parent=5 // pred_fallthru
        _
      %p180 = scmp.lt.s32.totalorder %s11, 2
      // Predicated region
      $region17: #{relu_conv_bn.1} parent=5 // pred_check
        %p181 = pneg %p180
      $region18: #{relu_conv_bn.1} parent=5 // pred_check_branch
        %183 = sbr.rel (%p181) target = $region20
      $region19: #{relu_conv_bn.1} parent=5 // pred_region
        // Predicated region
        $region21: #{relu_conv_bn.1} parent=19 // pred_check
          %p184 = pneg %p52
        $region22: #{relu_conv_bn.1} parent=19 // pred_check_branch
          %186 = sbr.rel (%p184) target = $region24
        $region23: #{relu_conv_bn.1} parent=19 // pred_region
          %s187 = sand.u32 %s42, 1
          %s188 = sand.u32 %s42, 1
          %s189 = smul.addr %s188, 576
          %s190 = scalar_lea.vmem [#allocation2], %s189
          %s191 = smul.addr %s11, 8
          %s192 = scalar_lea.vmem %s1, %s191
          // Predicated region
          $region25: #{relu_conv_bn.1} parent=23 // pred_check
            _
          $region26: #{relu_conv_bn.1} parent=23 // pred_check_branch
            %194 = sbr.rel (0) target = $region28
          $region27: #{relu_conv_bn.1} parent=23 // pred_region
            // Predicated region
            $region29: #{relu_conv_bn.1} parent=27 // pred_check
              _
            $region30: #{relu_conv_bn.1} parent=27 // pred_check_branch
              %196 = sbr.rel (0) target = $region32
            $region31: #{relu_conv_bn.1} parent=27 // pred_region
              // Predicated region
              $region44: #{relu_conv_bn.1} parent=31 // pred_check
                _
              $region45: #{relu_conv_bn.1} parent=31 // pred_check_branch
                %353 = sbr.rel (0) target = $region47
              $region46: #{relu_conv_bn.1} parent=31 // pred_region
                loop: start=0, step=1, limit=1
                $region48: #{relu_conv_bn.1} parent=46 // loop_pre_header
                  _
                $region49: #{relu_conv_bn.1} parent=46 // loop_header
                  %s355 = sphi 0, %s359
                  %p356 = scmp.ge.s32.totalorder %s355, 1
                  %s360 = sphi %s192, %s192
                  %s361 = sphi %s190, %s190
                $region50: #{relu_conv_bn.1} parent=46 // loop_header_branch
                  %358 = sbr.rel (%p356) target = $region54
                $region51: #{relu_conv_bn.1} parent=46 // loop_body
                  %v362 = vld [vmem:[%s360] sm:$0xff]
                  %363 = vst [vmem:[%s361] sm:$0xff] %v362
                  %v364 = vld [vmem:[%s360 + $0x10] sm:$0xff]
                  %365 = vst [vmem:[%s361 + $0x8] sm:$0xff] %v364
                  %v366 = vld [vmem:[%s360 + $0x20] sm:$0xff]
                  %367 = vst [vmem:[%s361 + $0x10] sm:$0xff] %v366
                  %v368 = vld [vmem:[%s360 + $0x30] sm:$0xff]
                  %369 = vst [vmem:[%s361 + $0x18] sm:$0xff] %v368
                  %v370 = vld [vmem:[%s360 + $0x40] sm:$0xff]
                  %371 = vst [vmem:[%s361 + $0x20] sm:$0xff] %v370
                  %v372 = vld [vmem:[%s360 + $0x50] sm:$0xff]
                  %373 = vst [vmem:[%s361 + $0x28] sm:$0xff] %v372
                  %v374 = vld [vmem:[%s360 + $0x60] sm:$0xff]
                  %375 = vst [vmem:[%s361 + $0x30] sm:$0xff] %v374
                  %v376 = vld [vmem:[%s360 + $0x70] sm:$0xff]
                  %377 = vst [vmem:[%s361 + $0x38] sm:$0xff] %v376
                  %v378 = vld [vmem:[%s360 + $0x80] sm:$0xff]
                  %379 = vst [vmem:[%s361 + $0x40] sm:$0xff] %v378
                  %v380 = vld [vmem:[%s360 + $0x90] sm:$0xff]
                  %381 = vst [vmem:[%s361 + $0x48] sm:$0xff] %v380
                  %v382 = vld [vmem:[%s360 + $0xa0] sm:$0xff]
                  %383 = vst [vmem:[%s361 + $0x50] sm:$0xff] %v382
                  %v384 = vld [vmem:[%s360 + $0xb0] sm:$0xff]
                  %385 = vst [vmem:[%s361 + $0x58] sm:$0xff] %v384
                  %v386 = vld [vmem:[%s360 + $0xc0] sm:$0xff]
                  %387 = vst [vmem:[%s361 + $0x60] sm:$0xff] %v386
                  %v388 = vld [vmem:[%s360 + $0xd0] sm:$0xff]
                  %389 = vst [vmem:[%s361 + $0x68] sm:$0xff] %v388
                  %v390 = vld [vmem:[%s360 + $0xe0] sm:$0xff]
                  %391 = vst [vmem:[%s361 + $0x70] sm:$0xff] %v390
                  %v392 = vld [vmem:[%s360 + $0xf0] sm:$0xff]
                  %393 = vst [vmem:[%s361 + $0x78] sm:$0xff] %v392
                  %v394 = vld [vmem:[%s360 + $0x100] sm:$0xff]
                  %395 = vst [vmem:[%s361 + $0x80] sm:$0xff] %v394
                  %v396 = vld [vmem:[%s360 + $0x110] sm:$0xff]
                  %397 = vst [vmem:[%s361 + $0x88] sm:$0xff] %v396
                  %v398 = vld [vmem:[%s360 + $0x120] sm:$0xff]
                  %399 = vst [vmem:[%s361 + $0x90] sm:$0xff] %v398
                  %v400 = vld [vmem:[%s360 + $0x130] sm:$0xff]
                  %401 = vst [vmem:[%s361 + $0x98] sm:$0xff] %v400
                  %v402 = vld [vmem:[%s360 + $0x140] sm:$0xff]
                  %403 = vst [vmem:[%s361 + $0xa0] sm:$0xff] %v402
                  %v404 = vld [vmem:[%s360 + $0x150] sm:$0xff]
                  %405 = vst [vmem:[%s361 + $0xa8] sm:$0xff] %v404
                  %v406 = vld [vmem:[%s360 + $0x160] sm:$0xff]
                  %407 = vst [vmem:[%s361 + $0xb0] sm:$0xff] %v406
                  %v408 = vld [vmem:[%s360 + $0x170] sm:$0xff]
                  %409 = vst [vmem:[%s361 + $0xb8] sm:$0xff] %v408
                  %v410 = vld [vmem:[%s360 + $0x180] sm:$0xff]
                  %411 = vst [vmem:[%s361 + $0xc0] sm:$0xff] %v410
                  %v412 = vld [vmem:[%s360 + $0x190] sm:$0xff]
                  %413 = vst [vmem:[%s361 + $0xc8] sm:$0xff] %v412
                  %v414 = vld [vmem:[%s360 + $0x1a0] sm:$0xff]
                  %415 = vst [vmem:[%s361 + $0xd0] sm:$0xff] %v414
                  %v416 = vld [vmem:[%s360 + $0x1b0] sm:$0xff]
                  %417 = vst [vmem:[%s361 + $0xd8] sm:$0xff] %v416
                  %v418 = vld [vmem:[%s360 + $0x1c0] sm:$0xff]
                  %419 = vst [vmem:[%s361 + $0xe0] sm:$0xff] %v418
                  %v420 = vld [vmem:[%s360 + $0x1d0] sm:$0xff]
                  %421 = vst [vmem:[%s361 + $0xe8] sm:$0xff] %v420
                  %v422 = vld [vmem:[%s360 + $0x1e0] sm:$0xff]
                  %423 = vst [vmem:[%s361 + $0xf0] sm:$0xff] %v422
                  %v424 = vld [vmem:[%s360 + $0x1f0] sm:$0xff]
                  %425 = vst [vmem:[%s361 + $0xf8] sm:$0xff] %v424
                  %v426 = vld [vmem:[%s360 + $0x200] sm:$0xff]
                  %427 = vst [vmem:[%s361 + $0x100] sm:$0xff] %v426
                  %v428 = vld [vmem:[%s360 + $0x210] sm:$0xff]
                  %429 = vst [vmem:[%s361 + $0x108] sm:$0xff] %v428
                  %v430 = vld [vmem:[%s360 + $0x220] sm:$0xff]
                  %431 = vst [vmem:[%s361 + $0x110] sm:$0xff] %v430
                  %v432 = vld [vmem:[%s360 + $0x230] sm:$0xff]
                  %433 = vst [vmem:[%s361 + $0x118] sm:$0xff] %v432
                  %v434 = vld [vmem:[%s360 + $0x240] sm:$0xff]
                  %435 = vst [vmem:[%s361 + $0x120] sm:$0xff] %v434
                  %v436 = vld [vmem:[%s360 + $0x250] sm:$0xff]
                  %437 = vst [vmem:[%s361 + $0x128] sm:$0xff] %v436
                  %v438 = vld [vmem:[%s360 + $0x260] sm:$0xff]
                  %439 = vst [vmem:[%s361 + $0x130] sm:$0xff] %v438
                  %v440 = vld [vmem:[%s360 + $0x270] sm:$0xff]
                  %441 = vst [vmem:[%s361 + $0x138] sm:$0xff] %v440
                  %v442 = vld [vmem:[%s360 + $0x280] sm:$0xff]
                  %443 = vst [vmem:[%s361 + $0x140] sm:$0xff] %v442
                  %v444 = vld [vmem:[%s360 + $0x290] sm:$0xff]
                  %445 = vst [vmem:[%s361 + $0x148] sm:$0xff] %v444
                  %v446 = vld [vmem:[%s360 + $0x2a0] sm:$0xff]
                  %447 = vst [vmem:[%s361 + $0x150] sm:$0xff] %v446
                  %v448 = vld [vmem:[%s360 + $0x2b0] sm:$0xff]
                  %449 = vst [vmem:[%s361 + $0x158] sm:$0xff] %v448
                  %v450 = vld [vmem:[%s360 + $0x2c0] sm:$0xff]
                  %451 = vst [vmem:[%s361 + $0x160] sm:$0xff] %v450
                  %v452 = vld [vmem:[%s360 + $0x2d0] sm:$0xff]
                  %453 = vst [vmem:[%s361 + $0x168] sm:$0xff] %v452
                  %v454 = vld [vmem:[%s360 + $0x2e0] sm:$0xff]
                  %455 = vst [vmem:[%s361 + $0x170] sm:$0xff] %v454
                  %v456 = vld [vmem:[%s360 + $0x2f0] sm:$0xff]
                  %457 = vst [vmem:[%s361 + $0x178] sm:$0xff] %v456
                  %v458 = vld [vmem:[%s360 + $0x300] sm:$0xff]
                  %459 = vst [vmem:[%s361 + $0x180] sm:$0xff] %v458
                  %v460 = vld [vmem:[%s360 + $0x310] sm:$0xff]
                  %461 = vst [vmem:[%s361 + $0x188] sm:$0xff] %v460
                  %v462 = vld [vmem:[%s360 + $0x320] sm:$0xff]
                  %463 = vst [vmem:[%s361 + $0x190] sm:$0xff] %v462
                  %v464 = vld [vmem:[%s360 + $0x330] sm:$0xff]
                  %465 = vst [vmem:[%s361 + $0x198] sm:$0xff] %v464
                  %v466 = vld [vmem:[%s360 + $0x340] sm:$0xff]
                  %467 = vst [vmem:[%s361 + $0x1a0] sm:$0xff] %v466
                  %v468 = vld [vmem:[%s360 + $0x350] sm:$0xff]
                  %469 = vst [vmem:[%s361 + $0x1a8] sm:$0xff] %v468
                  %v470 = vld [vmem:[%s360 + $0x360] sm:$0xff]
                  %471 = vst [vmem:[%s361 + $0x1b0] sm:$0xff] %v470
                  %v472 = vld [vmem:[%s360 + $0x370] sm:$0xff]
                  %473 = vst [vmem:[%s361 + $0x1b8] sm:$0xff] %v472
                  %v474 = vld [vmem:[%s360 + $0x380] sm:$0xff]
                  %475 = vst [vmem:[%s361 + $0x1c0] sm:$0xff] %v474
                  %v476 = vld [vmem:[%s360 + $0x390] sm:$0xff]
                  %477 = vst [vmem:[%s361 + $0x1c8] sm:$0xff] %v476
                  %v478 = vld [vmem:[%s360 + $0x3a0] sm:$0xff]
                  %479 = vst [vmem:[%s361 + $0x1d0] sm:$0xff] %v478
                  %v480 = vld [vmem:[%s360 + $0x3b0] sm:$0xff]
                  %481 = vst [vmem:[%s361 + $0x1d8] sm:$0xff] %v480
                  %v482 = vld [vmem:[%s360 + $0x3c0] sm:$0xff]
                  %483 = vst [vmem:[%s361 + $0x1e0] sm:$0xff] %v482
                  %v484 = vld [vmem:[%s360 + $0x3d0] sm:$0xff]
                  %485 = vst [vmem:[%s361 + $0x1e8] sm:$0xff] %v484
                  %v486 = vld [vmem:[%s360 + $0x3e0] sm:$0xff]
                  %487 = vst [vmem:[%s361 + $0x1f0] sm:$0xff] %v486
                  %v488 = vld [vmem:[%s360 + $0x3f0] sm:$0xff]
                  %489 = vst [vmem:[%s361 + $0x1f8] sm:$0xff] %v488
                  %v490 = vld [vmem:[%s360 + $0x400] sm:$0xff]
                  %491 = vst [vmem:[%s361 + $0x200] sm:$0xff] %v490
                  %v492 = vld [vmem:[%s360 + $0x410] sm:$0xff]
                  %493 = vst [vmem:[%s361 + $0x208] sm:$0xff] %v492
                  %v494 = vld [vmem:[%s360 + $0x420] sm:$0xff]
                  %495 = vst [vmem:[%s361 + $0x210] sm:$0xff] %v494
                  %v496 = vld [vmem:[%s360 + $0x430] sm:$0xff]
                  %497 = vst [vmem:[%s361 + $0x218] sm:$0xff] %v496
                  %v498 = vld [vmem:[%s360 + $0x440] sm:$0xff]
                  %499 = vst [vmem:[%s361 + $0x220] sm:$0xff] %v498
                  %v500 = vld [vmem:[%s360 + $0x450] sm:$0xff]
                  %501 = vst [vmem:[%s361 + $0x228] sm:$0xff] %v500
                  %v502 = vld [vmem:[%s360 + $0x460] sm:$0xff]
                  %503 = vst [vmem:[%s361 + $0x230] sm:$0xff] %v502
                  %v504 = vld [vmem:[%s360 + $0x470] sm:$0xff]
                  %505 = vst [vmem:[%s361 + $0x238] sm:$0xff] %v504
                $region52: #{relu_conv_bn.1} parent=46 // loop_footer
                  %s359 = sadd.s32 1, %s355
                $region53: #{relu_conv_bn.1} parent=46 // loop_footer_branch
                  %354 = sbr.rel target = $region49
                $region54: #{relu_conv_bn.1} parent=46 // loop_exit
                  _
              $region47: #{relu_conv_bn.1} parent=31 // pred_fallthru
                _
              // Predicated region
              $region55: #{relu_conv_bn.1} parent=31 // pred_check
                _
              $region56: #{relu_conv_bn.1} parent=31 // pred_check_branch
                %507 = sbr.rel target = $region58
              $region57: #{relu_conv_bn.1} parent=31 // pred_region
                _
              $region58: #{relu_conv_bn.1} parent=31 // pred_fallthru
                _
            $region32: #{relu_conv_bn.1} parent=27 // pred_fallthru
              _
            // Predicated region
            $region33: #{relu_conv_bn.1} parent=27 // pred_check
              _
            $region34: #{relu_conv_bn.1} parent=27 // pred_check_branch
              %198 = sbr.rel target = $region36
            $region35: #{relu_conv_bn.1} parent=27 // pred_region
              loop: start=0, step=1, limit=1
              $region37: #{relu_conv_bn.1} parent=35 // loop_pre_header
                _
              $region38: #{relu_conv_bn.1} parent=35 // loop_header
                %s201 = sphi 0, %s205
                %p202 = scmp.ge.s32.totalorder %s201, 1
                %s206 = sphi %s192, %s192
                %s207 = sphi %s190, %s190
              $region39: #{relu_conv_bn.1} parent=35 // loop_header_branch
                %204 = sbr.rel (%p202) target = $region43
              $region40: #{relu_conv_bn.1} parent=35 // loop_body
                %v208 = vld [vmem:[%s206] sm:$0xff]
                %209 = vst [vmem:[%s207] sm:$0xff] %v208
                %v210 = vld [vmem:[%s206 + $0x10] sm:$0xff]
                %211 = vst [vmem:[%s207 + $0x8] sm:$0xff] %v210
                %v212 = vld [vmem:[%s206 + $0x20] sm:$0xff]
                %213 = vst [vmem:[%s207 + $0x10] sm:$0xff] %v212
                %v214 = vld [vmem:[%s206 + $0x30] sm:$0xff]
                %215 = vst [vmem:[%s207 + $0x18] sm:$0xff] %v214
                %v216 = vld [vmem:[%s206 + $0x40] sm:$0xff]
                %217 = vst [vmem:[%s207 + $0x20] sm:$0xff] %v216
                %v218 = vld [vmem:[%s206 + $0x50] sm:$0xff]
                %219 = vst [vmem:[%s207 + $0x28] sm:$0xff] %v218
                %v220 = vld [vmem:[%s206 + $0x60] sm:$0xff]
                %221 = vst [vmem:[%s207 + $0x30] sm:$0xff] %v220
                %v222 = vld [vmem:[%s206 + $0x70] sm:$0xff]
                %223 = vst [vmem:[%s207 + $0x38] sm:$0xff] %v222
                %v224 = vld [vmem:[%s206 + $0x80] sm:$0xff]
                %225 = vst [vmem:[%s207 + $0x40] sm:$0xff] %v224
                %v226 = vld [vmem:[%s206 + $0x90] sm:$0xff]
                %227 = vst [vmem:[%s207 + $0x48] sm:$0xff] %v226
                %v228 = vld [vmem:[%s206 + $0xa0] sm:$0xff]
                %229 = vst [vmem:[%s207 + $0x50] sm:$0xff] %v228
                %v230 = vld [vmem:[%s206 + $0xb0] sm:$0xff]
                %231 = vst [vmem:[%s207 + $0x58] sm:$0xff] %v230
                %v232 = vld [vmem:[%s206 + $0xc0] sm:$0xff]
                %233 = vst [vmem:[%s207 + $0x60] sm:$0xff] %v232
                %v234 = vld [vmem:[%s206 + $0xd0] sm:$0xff]
                %235 = vst [vmem:[%s207 + $0x68] sm:$0xff] %v234
                %v236 = vld [vmem:[%s206 + $0xe0] sm:$0xff]
                %237 = vst [vmem:[%s207 + $0x70] sm:$0xff] %v236
                %v238 = vld [vmem:[%s206 + $0xf0] sm:$0xff]
                %239 = vst [vmem:[%s207 + $0x78] sm:$0xff] %v238
                %v240 = vld [vmem:[%s206 + $0x100] sm:$0xff]
                %241 = vst [vmem:[%s207 + $0x80] sm:$0xff] %v240
                %v242 = vld [vmem:[%s206 + $0x110] sm:$0xff]
                %243 = vst [vmem:[%s207 + $0x88] sm:$0xff] %v242
                %v244 = vld [vmem:[%s206 + $0x120] sm:$0xff]
                %245 = vst [vmem:[%s207 + $0x90] sm:$0xff] %v244
                %v246 = vld [vmem:[%s206 + $0x130] sm:$0xff]
                %247 = vst [vmem:[%s207 + $0x98] sm:$0xff] %v246
                %v248 = vld [vmem:[%s206 + $0x140] sm:$0xff]
                %249 = vst [vmem:[%s207 + $0xa0] sm:$0xff] %v248
                %v250 = vld [vmem:[%s206 + $0x150] sm:$0xff]
                %251 = vst [vmem:[%s207 + $0xa8] sm:$0xff] %v250
                %v252 = vld [vmem:[%s206 + $0x160] sm:$0xff]
                %253 = vst [vmem:[%s207 + $0xb0] sm:$0xff] %v252
                %v254 = vld [vmem:[%s206 + $0x170] sm:$0xff]
                %255 = vst [vmem:[%s207 + $0xb8] sm:$0xff] %v254
                %v256 = vld [vmem:[%s206 + $0x180] sm:$0xff]
                %257 = vst [vmem:[%s207 + $0xc0] sm:$0xff] %v256
                %v258 = vld [vmem:[%s206 + $0x190] sm:$0xff]
                %259 = vst [vmem:[%s207 + $0xc8] sm:$0xff] %v258
                %v260 = vld [vmem:[%s206 + $0x1a0] sm:$0xff]
                %261 = vst [vmem:[%s207 + $0xd0] sm:$0xff] %v260
                %v262 = vld [vmem:[%s206 + $0x1b0] sm:$0xff]
                %263 = vst [vmem:[%s207 + $0xd8] sm:$0xff] %v262
                %v264 = vld [vmem:[%s206 + $0x1c0] sm:$0xff]
                %265 = vst [vmem:[%s207 + $0xe0] sm:$0xff] %v264
                %v266 = vld [vmem:[%s206 + $0x1d0] sm:$0xff]
                %267 = vst [vmem:[%s207 + $0xe8] sm:$0xff] %v266
                %v268 = vld [vmem:[%s206 + $0x1e0] sm:$0xff]
                %269 = vst [vmem:[%s207 + $0xf0] sm:$0xff] %v268
                %v270 = vld [vmem:[%s206 + $0x1f0] sm:$0xff]
                %271 = vst [vmem:[%s207 + $0xf8] sm:$0xff] %v270
                %v272 = vld [vmem:[%s206 + $0x200] sm:$0xff]
                %273 = vst [vmem:[%s207 + $0x100] sm:$0xff] %v272
                %v274 = vld [vmem:[%s206 + $0x210] sm:$0xff]
                %275 = vst [vmem:[%s207 + $0x108] sm:$0xff] %v274
                %v276 = vld [vmem:[%s206 + $0x220] sm:$0xff]
                %277 = vst [vmem:[%s207 + $0x110] sm:$0xff] %v276
                %v278 = vld [vmem:[%s206 + $0x230] sm:$0xff]
                %279 = vst [vmem:[%s207 + $0x118] sm:$0xff] %v278
                %v280 = vld [vmem:[%s206 + $0x240] sm:$0xff]
                %281 = vst [vmem:[%s207 + $0x120] sm:$0xff] %v280
                %v282 = vld [vmem:[%s206 + $0x250] sm:$0xff]
                %283 = vst [vmem:[%s207 + $0x128] sm:$0xff] %v282
                %v284 = vld [vmem:[%s206 + $0x260] sm:$0xff]
                %285 = vst [vmem:[%s207 + $0x130] sm:$0xff] %v284
                %v286 = vld [vmem:[%s206 + $0x270] sm:$0xff]
                %287 = vst [vmem:[%s207 + $0x138] sm:$0xff] %v286
                %v288 = vld [vmem:[%s206 + $0x280] sm:$0xff]
                %289 = vst [vmem:[%s207 + $0x140] sm:$0xff] %v288
                %v290 = vld [vmem:[%s206 + $0x290] sm:$0xff]
                %291 = vst [vmem:[%s207 + $0x148] sm:$0xff] %v290
                %v292 = vld [vmem:[%s206 + $0x2a0] sm:$0xff]
                %293 = vst [vmem:[%s207 + $0x150] sm:$0xff] %v292
                %v294 = vld [vmem:[%s206 + $0x2b0] sm:$0xff]
                %295 = vst [vmem:[%s207 + $0x158] sm:$0xff] %v294
                %v296 = vld [vmem:[%s206 + $0x2c0] sm:$0xff]
                %297 = vst [vmem:[%s207 + $0x160] sm:$0xff] %v296
                %v298 = vld [vmem:[%s206 + $0x2d0] sm:$0xff]
                %299 = vst [vmem:[%s207 + $0x168] sm:$0xff] %v298
                %v300 = vld [vmem:[%s206 + $0x2e0] sm:$0xff]
                %301 = vst [vmem:[%s207 + $0x170] sm:$0xff] %v300
                %v302 = vld [vmem:[%s206 + $0x2f0] sm:$0xff]
                %303 = vst [vmem:[%s207 + $0x178] sm:$0xff] %v302
                %v304 = vld [vmem:[%s206 + $0x300] sm:$0xff]
                %305 = vst [vmem:[%s207 + $0x180] sm:$0xff] %v304
                %v306 = vld [vmem:[%s206 + $0x310] sm:$0xff]
                %307 = vst [vmem:[%s207 + $0x188] sm:$0xff] %v306
                %v308 = vld [vmem:[%s206 + $0x320] sm:$0xff]
                %309 = vst [vmem:[%s207 + $0x190] sm:$0xff] %v308
                %v310 = vld [vmem:[%s206 + $0x330] sm:$0xff]
                %311 = vst [vmem:[%s207 + $0x198] sm:$0xff] %v310
                %v312 = vld [vmem:[%s206 + $0x340] sm:$0xff]
                %313 = vst [vmem:[%s207 + $0x1a0] sm:$0xff] %v312
                %v314 = vld [vmem:[%s206 + $0x350] sm:$0xff]
                %315 = vst [vmem:[%s207 + $0x1a8] sm:$0xff] %v314
                %v316 = vld [vmem:[%s206 + $0x360] sm:$0xff]
                %317 = vst [vmem:[%s207 + $0x1b0] sm:$0xff] %v316
                %v318 = vld [vmem:[%s206 + $0x370] sm:$0xff]
                %319 = vst [vmem:[%s207 + $0x1b8] sm:$0xff] %v318
                %v320 = vld [vmem:[%s206 + $0x380] sm:$0xff]
                %321 = vst [vmem:[%s207 + $0x1c0] sm:$0xff] %v320
                %v322 = vld [vmem:[%s206 + $0x390] sm:$0xff]
                %323 = vst [vmem:[%s207 + $0x1c8] sm:$0xff] %v322
                %v324 = vld [vmem:[%s206 + $0x3a0] sm:$0xff]
                %325 = vst [vmem:[%s207 + $0x1d0] sm:$0xff] %v324
                %v326 = vld [vmem:[%s206 + $0x3b0] sm:$0xff]
                %327 = vst [vmem:[%s207 + $0x1d8] sm:$0xff] %v326
                %v328 = vld [vmem:[%s206 + $0x3c0] sm:$0xff]
                %329 = vst [vmem:[%s207 + $0x1e0] sm:$0xff] %v328
                %v330 = vld [vmem:[%s206 + $0x3d0] sm:$0xff]
                %331 = vst [vmem:[%s207 + $0x1e8] sm:$0xff] %v330
                %v332 = vld [vmem:[%s206 + $0x3e0] sm:$0xff]
                %333 = vst [vmem:[%s207 + $0x1f0] sm:$0xff] %v332
                %v334 = vld [vmem:[%s206 + $0x3f0] sm:$0xff]
                %335 = vst [vmem:[%s207 + $0x1f8] sm:$0xff] %v334
                %v336 = vld [vmem:[%s206 + $0x400] sm:$0xff]
                %337 = vst [vmem:[%s207 + $0x200] sm:$0xff] %v336
                %v338 = vld [vmem:[%s206 + $0x410] sm:$0xff]
                %339 = vst [vmem:[%s207 + $0x208] sm:$0xff] %v338
                %v340 = vld [vmem:[%s206 + $0x420] sm:$0xff]
                %341 = vst [vmem:[%s207 + $0x210] sm:$0xff] %v340
                %v342 = vld [vmem:[%s206 + $0x430] sm:$0xff]
                %343 = vst [vmem:[%s207 + $0x218] sm:$0xff] %v342
                %v344 = vld [vmem:[%s206 + $0x440] sm:$0xff]
                %345 = vst [vmem:[%s207 + $0x220] sm:$0xff] %v344
                %v346 = vld [vmem:[%s206 + $0x450] sm:$0xff]
                %347 = vst [vmem:[%s207 + $0x228] sm:$0xff] %v346
                %v348 = vld [vmem:[%s206 + $0x460] sm:$0xff]
                %349 = vst [vmem:[%s207 + $0x230] sm:$0xff] %v348
                %v350 = vld [vmem:[%s206 + $0x470] sm:$0xff]
                %351 = vst [vmem:[%s207 + $0x238] sm:$0xff] %v350
              $region41: #{relu_conv_bn.1} parent=35 // loop_footer
                %s205 = sadd.s32 1, %s201
              $region42: #{relu_conv_bn.1} parent=35 // loop_footer_branch
                %200 = sbr.rel target = $region38
              $region43: #{relu_conv_bn.1} parent=35 // loop_exit
                _
            $region36: #{relu_conv_bn.1} parent=27 // pred_fallthru
              _
          $region28: #{relu_conv_bn.1} parent=23 // pred_fallthru
            _
          %508 = vnop
        $region24: #{relu_conv_bn.1} parent=19 // pred_fallthru
          _
        // Predicated region
        $region59: #{relu_conv_bn.1} parent=19 // pred_check
          %p509 = pneg %p78
        $region60: #{relu_conv_bn.1} parent=19 // pred_check_branch
          %511 = sbr.rel (%p509) target = $region62
        $region61: #{relu_conv_bn.1} parent=19 // pred_region
          %p512 = scmp.lt.s32.totalorder %s11, 1
          %s513 = scalar_select %p512, %s11, 1
          %s514 = scalar_lea.vmem %s2, %s513
        $region62: #{relu_conv_bn.1} parent=19 // pred_fallthru
          _
        // Predicated region
        $region63: #{relu_conv_bn.1} parent=19 // pred_check
          %p515 = pneg %p104
        $region64: #{relu_conv_bn.1} parent=19 // pred_check_branch
          %517 = sbr.rel (%p515) target = $region66
        $region65: #{relu_conv_bn.1} parent=19 // pred_region
          %p518 = scmp.lt.s32.totalorder %s11, 1
          %s519 = scalar_select %p518, %s11, 1
          %s520 = scalar_lea.vmem %s3, %s519
        $region66: #{relu_conv_bn.1} parent=19 // pred_fallthru
          _
        // Predicated region
        $region67: #{relu_conv_bn.1} parent=19 // pred_check
          %p521 = pneg %p130
        $region68: #{relu_conv_bn.1} parent=19 // pred_check_branch
          %523 = sbr.rel (%p521) target = $region70
        $region69: #{relu_conv_bn.1} parent=19 // pred_region
          %p524 = scmp.lt.s32.totalorder %s11, 1
          %s525 = scalar_select %p524, %s11, 1
          %s526 = scalar_lea.vmem %s4, %s525
        $region70: #{relu_conv_bn.1} parent=19 // pred_fallthru
          _
      $region20: #{relu_conv_bn.1} parent=5 // pred_fallthru
        _
      %p527 = scmp.le.s32.totalorder 1, %s11
      %p528 = scmp.lt.s32.totalorder %s11, 3
      %p529 = pnand %p527, %p528
      %p530 = pneg %p529
      // Predicated region
      $region71: #{relu_conv_bn.1} parent=5 // pred_check
        _
      $region72: #{relu_conv_bn.1} parent=5 // pred_check_branch
        %532 = sbr.rel (%p529) target = $region74
      $region73: #{relu_conv_bn.1} parent=5 // pred_region
        %s533 = ssub.s32 %s11, 1
        %s534 = sand.u32 %s45, 1
        %s535 = sand.u32 %s45, 1
        %s536 = smul.addr %s535, 576
        %s537 = scalar_lea.vmem [#allocation2], %s536
        // Predicated region
        $region75: #{relu_conv_bn.1} parent=73 // pred_check
          %p538 = pneg %p58
        $region76: #{relu_conv_bn.1} parent=73 // pred_check_branch
          %540 = sbr.rel (%p538) target = $region78
        $region77: #{relu_conv_bn.1} parent=73 // pred_region
          _
        $region78: #{relu_conv_bn.1} parent=73 // pred_fallthru
          _
        %p541 = pneg %p32
        %p542 = pneg %p29
        %s543 = sand.u32 %s45, 1
        %s544 = sand.u32 %s45, 1
        %s545 = smul.addr %s544, 576
        %s546 = scalar_lea.vmem [#allocation2], %s545
        %p547 = pneg %p58
        %p548 = pneg %p55
        %p549 = scmp.lt.s32.totalorder %s16, 1
        %s550 = scalar_select %p549, %s16, 1
        %s551 = scalar_lea.vmem %s2, %s550
        %p552 = pneg %p84
        %p553 = pneg %p81
        %p554 = scmp.lt.s32.totalorder %s16, 1
        %s555 = scalar_select %p554, %s16, 1
        %s556 = scalar_lea.vmem %s3, %s555
        %p557 = pneg %p110
        %p558 = pneg %p107
        %p559 = scmp.lt.s32.totalorder %s16, 1
        %s560 = scalar_select %p559, %s16, 1
        %s561 = scalar_lea.vmem %s4, %s560
        %p562 = pneg %p136
        %p563 = pneg %p133
        %p564 = pneg %p162
        %p565 = pneg %p159
        %s566 = sand.u32 %s149, 1
        %s567 = sand.u32 %s149, 1
        %s568 = smul.addr %s567, 56
        %s569 = scalar_lea.vmem [#allocation3], %s568
        %p570 = scmp.lt.s32.totalorder %s16, 1
        %s571 = scalar_select %p570, %s16, 1
        %s572 = scalar_lea.vmem %s2, %s571
        %p573 = scmp.lt.s32.totalorder %s16, 1
        %s574 = scalar_select %p573, %s16, 1
        %s575 = scalar_lea.vmem %s3, %s574
        %p576 = scmp.lt.s32.totalorder %s16, 1
        %s577 = scalar_select %p576, %s16, 1
        %s578 = scalar_lea.vmem %s4, %s577
        %v580 = vld [vmem:[%s537] sm:$0xff]
        %v581 = vld [vmem:[%s537 + $0x8] sm:$0xff]
        %v582 = vld [vmem:[%s537 + $0x10] sm:$0xff]
        %v583 = vld [vmem:[%s537 + $0x18] sm:$0xff]
        %v584 = vld [vmem:[%s537 + $0x20] sm:$0xff]
        %v585 = vld [vmem:[%s537 + $0x28] sm:$0xff]
        %v586 = vld [vmem:[%s537 + $0x30] sm:$0xff]
        %v587 = vld [vmem:[%s537 + $0x38] sm:$0xff]
        %v588 = vld [vmem:[%s537 + $0x40] sm:$0xff]
        %v589 = vld [vmem:[%s537 + $0x48] sm:$0xff]
        %v590 = vld [vmem:[%s537 + $0x50] sm:$0xff]
        %v591 = vld [vmem:[%s537 + $0x58] sm:$0xff]
        %v592 = vld [vmem:[%s537 + $0x60] sm:$0xff]
        %v593 = vld [vmem:[%s537 + $0x68] sm:$0xff]
        %v594 = vld [vmem:[%s537 + $0x70] sm:$0xff]
        %v595 = vld [vmem:[%s537 + $0x78] sm:$0xff]
        %v596 = vld [vmem:[%s537 + $0x80] sm:$0xff]
        %v597 = vld [vmem:[%s537 + $0x88] sm:$0xff]
        %v598 = vld [vmem:[%s537 + $0x90] sm:$0xff]
        %v599 = vld [vmem:[%s537 + $0x98] sm:$0xff]
        %v600 = vld [vmem:[%s537 + $0xa0] sm:$0xff]
        %v601 = vld [vmem:[%s537 + $0xa8] sm:$0xff]
        %v602 = vld [vmem:[%s537 + $0xb0] sm:$0xff]
        %v603 = vld [vmem:[%s537 + $0xb8] sm:$0xff]
        %v604 = vld [vmem:[%s537 + $0xc0] sm:$0xff]
        %v605 = vld [vmem:[%s537 + $0xc8] sm:$0xff]
        %v606 = vld [vmem:[%s537 + $0xd0] sm:$0xff]
        %v607 = vld [vmem:[%s537 + $0xd8] sm:$0xff]
        %v608 = vld [vmem:[%s537 + $0xe0] sm:$0xff]
        %v609 = vld [vmem:[%s537 + $0xe8] sm:$0xff]
        %v610 = vld [vmem:[%s537 + $0xf0] sm:$0xff]
        %v611 = vld [vmem:[%s537 + $0xf8] sm:$0xff]
        %v612 = vld [vmem:[%s537 + $0x100] sm:$0xff]
        %v613 = vld [vmem:[%s537 + $0x108] sm:$0xff]
        %v614 = vld [vmem:[%s537 + $0x110] sm:$0xff]
        %v615 = vld [vmem:[%s537 + $0x118] sm:$0xff]
        %v616 = vld [vmem:[%s537 + $0x120] sm:$0xff]
        %v617 = vld [vmem:[%s537 + $0x128] sm:$0xff]
        %v618 = vld [vmem:[%s537 + $0x130] sm:$0xff]
        %v619 = vld [vmem:[%s537 + $0x138] sm:$0xff]
        %v620 = vld [vmem:[%s537 + $0x140] sm:$0xff]
        %v621 = vld [vmem:[%s537 + $0x148] sm:$0xff]
        %v622 = vld [vmem:[%s537 + $0x150] sm:$0xff]
        %v623 = vld [vmem:[%s537 + $0x158] sm:$0xff]
        %v624 = vld [vmem:[%s537 + $0x160] sm:$0xff]
        %v625 = vld [vmem:[%s537 + $0x168] sm:$0xff]
        %v626 = vld [vmem:[%s537 + $0x170] sm:$0xff]
        %v627 = vld [vmem:[%s537 + $0x178] sm:$0xff]
        %v628 = vld [vmem:[%s537 + $0x180] sm:$0xff]
        %v629 = vld [vmem:[%s537 + $0x188] sm:$0xff]
        %v630 = vld [vmem:[%s537 + $0x190] sm:$0xff]
        %v631 = vld [vmem:[%s537 + $0x198] sm:$0xff]
        %v632 = vld [vmem:[%s537 + $0x1a0] sm:$0xff]
        %v633 = vld [vmem:[%s537 + $0x1a8] sm:$0xff]
        %v634 = vld [vmem:[%s537 + $0x1b0] sm:$0xff]
        %v635 = vld [vmem:[%s537 + $0x1b8] sm:$0xff]
        %v636 = vld [vmem:[%s537 + $0x1c0] sm:$0xff]
        %v637 = vld [vmem:[%s537 + $0x1c8] sm:$0xff]
        %v638 = vld [vmem:[%s537 + $0x1d0] sm:$0xff]
        %v639 = vld [vmem:[%s537 + $0x1d8] sm:$0xff]
        %v640 = vld [vmem:[%s537 + $0x1e0] sm:$0xff]
        %v641 = vld [vmem:[%s537 + $0x1e8] sm:$0xff]
        %v642 = vld [vmem:[%s537 + $0x1f0] sm:$0xff]
        %v643 = vld [vmem:[%s537 + $0x1f8] sm:$0xff]
        %v644 = vld [vmem:[%s537 + $0x200] sm:$0xff]
        %v645 = vld [vmem:[%s537 + $0x208] sm:$0xff]
        %v646 = vld [vmem:[%s537 + $0x210] sm:$0xff]
        %v647 = vld [vmem:[%s537 + $0x218] sm:$0xff]
        %v648 = vld [vmem:[%s537 + $0x220] sm:$0xff]
        %v649 = vld [vmem:[%s537 + $0x228] sm:$0xff]
        %v650 = vld [vmem:[%s537 + $0x230] sm:$0xff]
        %v651 = vld [vmem:[%s537 + $0x238] sm:$0xff]
        %v652 = vunpack.c.l.s8.bf16 %v580
        %v653 = vunpack.c.h.s8.bf16 %v580
        %v654 = vunpack.c.l.s8.bf16 %v581
        %v655 = vunpack.c.h.s8.bf16 %v581
        %v656 = vunpack.c.l.s8.bf16 %v582
        %v657 = vunpack.c.h.s8.bf16 %v582
        %v658 = vunpack.c.l.s8.bf16 %v583
        %v659 = vunpack.c.h.s8.bf16 %v583
        %v660 = vunpack.c.l.s8.bf16 %v584
        %v661 = vunpack.c.h.s8.bf16 %v584
        %v662 = vunpack.c.l.s8.bf16 %v585
        %v663 = vunpack.c.h.s8.bf16 %v585
        %v664 = vunpack.c.l.s8.bf16 %v586
        %v665 = vunpack.c.h.s8.bf16 %v586
        %v666 = vunpack.c.l.s8.bf16 %v587
        %v667 = vunpack.c.h.s8.bf16 %v587
        %v668 = vunpack.c.l.s8.bf16 %v588
        %v669 = vunpack.c.h.s8.bf16 %v588
        %v670 = vunpack.c.l.s8.bf16 %v589
        %v671 = vunpack.c.h.s8.bf16 %v589
        %v672 = vunpack.c.l.s8.bf16 %v590
        %v673 = vunpack.c.h.s8.bf16 %v590
        %v674 = vunpack.c.l.s8.bf16 %v591
        %v675 = vunpack.c.h.s8.bf16 %v591
        %v676 = vunpack.c.l.s8.bf16 %v592
        %v677 = vunpack.c.h.s8.bf16 %v592
        %v678 = vunpack.c.l.s8.bf16 %v593
        %v679 = vunpack.c.h.s8.bf16 %v593
        %v680 = vunpack.c.l.s8.bf16 %v594
        %v681 = vunpack.c.h.s8.bf16 %v594
        %v682 = vunpack.c.l.s8.bf16 %v595
        %v683 = vunpack.c.h.s8.bf16 %v595
        %v684 = vunpack.c.l.s8.bf16 %v596
        %v685 = vunpack.c.h.s8.bf16 %v596
        %v686 = vunpack.c.l.s8.bf16 %v597
        %v687 = vunpack.c.h.s8.bf16 %v597
        %v688 = vunpack.c.l.s8.bf16 %v598
        %v689 = vunpack.c.h.s8.bf16 %v598
        %v690 = vunpack.c.l.s8.bf16 %v599
        %v691 = vunpack.c.h.s8.bf16 %v599
        %v692 = vunpack.c.l.s8.bf16 %v600
        %v693 = vunpack.c.h.s8.bf16 %v600
        %v694 = vunpack.c.l.s8.bf16 %v601
        %v695 = vunpack.c.h.s8.bf16 %v601
        %v696 = vunpack.c.l.s8.bf16 %v602
        %v697 = vunpack.c.h.s8.bf16 %v602
        %v698 = vunpack.c.l.s8.bf16 %v603
        %v699 = vunpack.c.h.s8.bf16 %v603
        %v700 = vunpack.c.l.s8.bf16 %v604
        %v701 = vunpack.c.h.s8.bf16 %v604
        %v702 = vunpack.c.l.s8.bf16 %v605
        %v703 = vunpack.c.h.s8.bf16 %v605
        %v704 = vunpack.c.l.s8.bf16 %v606
        %v705 = vunpack.c.h.s8.bf16 %v606
        %v706 = vunpack.c.l.s8.bf16 %v607
        %v707 = vunpack.c.h.s8.bf16 %v607
        %v708 = vunpack.c.l.s8.bf16 %v608
        %v709 = vunpack.c.h.s8.bf16 %v608
        %v710 = vunpack.c.l.s8.bf16 %v609
        %v711 = vunpack.c.h.s8.bf16 %v609
        %v712 = vunpack.c.l.s8.bf16 %v610
        %v713 = vunpack.c.h.s8.bf16 %v610
        %v714 = vunpack.c.l.s8.bf16 %v611
        %v715 = vunpack.c.h.s8.bf16 %v611
        %v716 = vunpack.c.l.s8.bf16 %v612
        %v717 = vunpack.c.h.s8.bf16 %v612
        %v718 = vunpack.c.l.s8.bf16 %v613
        %v719 = vunpack.c.h.s8.bf16 %v613
        %v720 = vunpack.c.l.s8.bf16 %v614
        %v721 = vunpack.c.h.s8.bf16 %v614
        %v722 = vunpack.c.l.s8.bf16 %v615
        %v723 = vunpack.c.h.s8.bf16 %v615
        %v724 = vunpack.c.l.s8.bf16 %v616
        %v725 = vunpack.c.h.s8.bf16 %v616
        %v726 = vunpack.c.l.s8.bf16 %v617
        %v727 = vunpack.c.h.s8.bf16 %v617
        %v728 = vunpack.c.l.s8.bf16 %v618
        %v729 = vunpack.c.h.s8.bf16 %v618
        %v730 = vunpack.c.l.s8.bf16 %v619
        %v731 = vunpack.c.h.s8.bf16 %v619
        %v732 = vunpack.c.l.s8.bf16 %v620
        %v733 = vunpack.c.h.s8.bf16 %v620
        %v734 = vunpack.c.l.s8.bf16 %v621
        %v735 = vunpack.c.h.s8.bf16 %v621
        %v736 = vunpack.c.l.s8.bf16 %v622
        %v737 = vunpack.c.h.s8.bf16 %v622
        %v738 = vunpack.c.l.s8.bf16 %v623
        %v739 = vunpack.c.h.s8.bf16 %v623
        %v740 = vunpack.c.l.s8.bf16 %v624
        %v741 = vunpack.c.h.s8.bf16 %v624
        %v742 = vunpack.c.l.s8.bf16 %v625
        %v743 = vunpack.c.h.s8.bf16 %v625
        %v744 = vunpack.c.l.s8.bf16 %v626
        %v745 = vunpack.c.h.s8.bf16 %v626
        %v746 = vunpack.c.l.s8.bf16 %v627
        %v747 = vunpack.c.h.s8.bf16 %v627
        %v748 = vunpack.c.l.s8.bf16 %v628
        %v749 = vunpack.c.h.s8.bf16 %v628
        %v750 = vunpack.c.l.s8.bf16 %v629
        %v751 = vunpack.c.h.s8.bf16 %v629
        %v752 = vunpack.c.l.s8.bf16 %v630
        %v753 = vunpack.c.h.s8.bf16 %v630
        %v754 = vunpack.c.l.s8.bf16 %v631
        %v755 = vunpack.c.h.s8.bf16 %v631
        %v756 = vunpack.c.l.s8.bf16 %v632
        %v757 = vunpack.c.h.s8.bf16 %v632
        %v758 = vunpack.c.l.s8.bf16 %v633
        %v759 = vunpack.c.h.s8.bf16 %v633
        %v760 = vunpack.c.l.s8.bf16 %v634
        %v761 = vunpack.c.h.s8.bf16 %v634
        %v762 = vunpack.c.l.s8.bf16 %v635
        %v763 = vunpack.c.h.s8.bf16 %v635
        %v764 = vunpack.c.l.s8.bf16 %v636
        %v765 = vunpack.c.h.s8.bf16 %v636
        %v766 = vunpack.c.l.s8.bf16 %v637
        %v767 = vunpack.c.h.s8.bf16 %v637
        %v768 = vunpack.c.l.s8.bf16 %v638
        %v769 = vunpack.c.h.s8.bf16 %v638
        %v770 = vunpack.c.l.s8.bf16 %v639
        %v771 = vunpack.c.h.s8.bf16 %v639
        %v772 = vunpack.c.l.s8.bf16 %v640
        %v773 = vunpack.c.h.s8.bf16 %v640
        %v774 = vunpack.c.l.s8.bf16 %v641
        %v775 = vunpack.c.h.s8.bf16 %v641
        %v776 = vunpack.c.l.s8.bf16 %v642
        %v777 = vunpack.c.h.s8.bf16 %v642
        %v778 = vunpack.c.l.s8.bf16 %v643
        %v779 = vunpack.c.h.s8.bf16 %v643
        %v780 = vunpack.c.l.s8.bf16 %v644
        %v781 = vunpack.c.h.s8.bf16 %v644
        %v782 = vunpack.c.l.s8.bf16 %v645
        %v783 = vunpack.c.h.s8.bf16 %v645
        %v784 = vunpack.c.l.s8.bf16 %v646
        %v785 = vunpack.c.h.s8.bf16 %v646
        %v786 = vunpack.c.l.s8.bf16 %v647
        %v787 = vunpack.c.h.s8.bf16 %v647
        %v788 = vunpack.c.l.s8.bf16 %v648
        %v789 = vunpack.c.h.s8.bf16 %v648
        %v790 = vunpack.c.l.s8.bf16 %v649
        %v791 = vunpack.c.h.s8.bf16 %v649
        %v792 = vunpack.c.l.s8.bf16 %v650
        %v793 = vunpack.c.h.s8.bf16 %v650
        %v794 = vunpack.c.l.s8.bf16 %v651
        %v795 = vunpack.c.h.s8.bf16 %v651
        %v796 = vld [vmem:[%s0] sm:$0xff]
        %v797 = vld [vmem:[%s0 + $0x8] sm:$0xff]
        %v798 = vld [vmem:[%s0 + $0x10] sm:$0xff]
        %v799 = vld [vmem:[%s0 + $0x18] sm:$0xff]
        %v800 = vld [vmem:[%s0 + $0x20] sm:$0xff]
        %v801 = vld [vmem:[%s0 + $0x28] sm:$0xff]
        %v802 = vld [vmem:[%s0 + $0x30] sm:$0xff]
        %v803 = vld [vmem:[%s0 + $0x38] sm:$0xff]
        %v804 = vld [vmem:[%s0 + $0x40] sm:$0xff]
        %v805 = vld [vmem:[%s0 + $0x48] sm:$0xff]
        %v806 = vld [vmem:[%s0 + $0x50] sm:$0xff]
        %v807 = vld [vmem:[%s0 + $0x58] sm:$0xff]
        %v808 = vld [vmem:[%s0 + $0x60] sm:$0xff]
        %v809 = vld [vmem:[%s0 + $0x68] sm:$0xff]
        %v810 = vld [vmem:[%s0 + $0x70] sm:$0xff]
        %v811 = vld [vmem:[%s0 + $0x78] sm:$0xff]
        %v812 = vld [vmem:[%s0 + $0x80] sm:$0xff]
        %v813 = vld [vmem:[%s0 + $0x88] sm:$0xff]
        %v814 = vld [vmem:[%s0 + $0x90] sm:$0xff]
        %v815 = vld [vmem:[%s0 + $0x98] sm:$0xff]
        %v816 = vld [vmem:[%s0 + $0xa0] sm:$0xff]
        %v817 = vld [vmem:[%s0 + $0xa8] sm:$0xff]
        %v818 = vld [vmem:[%s0 + $0xb0] sm:$0xff]
        %v819 = vld [vmem:[%s0 + $0xb8] sm:$0xff]
        %v820 = vld [vmem:[%s0 + $0xc0] sm:$0xff]
        %v821 = vld [vmem:[%s0 + $0xc8] sm:$0xff]
        %v822 = vld [vmem:[%s0 + $0xd0] sm:$0xff]
        %v823 = vld [vmem:[%s0 + $0xd8] sm:$0xff]
        %v824 = vld [vmem:[%s0 + $0xe0] sm:$0xff]
        %v825 = vld [vmem:[%s0 + $0xe8] sm:$0xff]
        %v826 = vld [vmem:[%s0 + $0xf0] sm:$0xff]
        %v827 = vld [vmem:[%s0 + $0xf8] sm:$0xff]
        %v828 = vld [vmem:[%s0 + $0x100] sm:$0xff]
        %v829 = vld [vmem:[%s0 + $0x108] sm:$0xff]
        %v830 = vld [vmem:[%s0 + $0x110] sm:$0xff]
        %v831 = vld [vmem:[%s0 + $0x118] sm:$0xff]
        %v832 = vld [vmem:[%s0 + $0x120] sm:$0xff]
        %v833 = vld [vmem:[%s0 + $0x128] sm:$0xff]
        %v834 = vld [vmem:[%s0 + $0x130] sm:$0xff]
        %v835 = vld [vmem:[%s0 + $0x138] sm:$0xff]
        %v836 = vld [vmem:[%s0 + $0x140] sm:$0xff]
        %v837 = vld [vmem:[%s0 + $0x148] sm:$0xff]
        %v838 = vld [vmem:[%s0 + $0x150] sm:$0xff]
        %v839 = vld [vmem:[%s0 + $0x158] sm:$0xff]
        %v840 = vld [vmem:[%s0 + $0x160] sm:$0xff]
        %v841 = vld [vmem:[%s0 + $0x168] sm:$0xff]
        %v842 = vld [vmem:[%s0 + $0x170] sm:$0xff]
        %v843 = vld [vmem:[%s0 + $0x178] sm:$0xff]
        %v844 = vld [vmem:[%s0 + $0x180] sm:$0xff]
        %v845 = vld [vmem:[%s0 + $0x188] sm:$0xff]
        %v846 = vld [vmem:[%s0 + $0x190] sm:$0xff]
        %v847 = vld [vmem:[%s0 + $0x198] sm:$0xff]
        %v848 = vld [vmem:[%s0 + $0x1a0] sm:$0xff]
        %v849 = vld [vmem:[%s0 + $0x1a8] sm:$0xff]
        %v850 = vld [vmem:[%s0 + $0x1b0] sm:$0x11]
        %v851 = vld [vmem:[%s0 + $0x1b8] sm:$0x11]
        %v852 = vld [vmem:[%s0 + $0x1c0] sm:$0x11]
        %v853 = vld [vmem:[%s0 + $0x1c8] sm:$0x11]
        %v854 = vld [vmem:[%s0 + $0x1d0] sm:$0x11]
        %v855 = vld [vmem:[%s0 + $0x1d8] sm:$0x11]
        %v856 = vld [vmem:[%s0 + $0x1e0] sm:$0x11]
        %v857 = vld [vmem:[%s0 + $0x1e8] sm:$0x11]
        %v858 = vld [vmem:[%s0 + $0x1f0] sm:$0x11]
        %v922 = vunpack.c.l.b16 %v796
        %v923 = vunpack.c.h.b16 %v796
        %v924 = vunpack.c.l.b16 %v797
        %v925 = vunpack.c.h.b16 %v797
        %v926 = vunpack.c.l.b16 %v798
        %v927 = vunpack.c.h.b16 %v798
        %v928 = vunpack.c.l.b16 %v799
        %v929 = vunpack.c.h.b16 %v799
        %v930 = vunpack.c.l.b16 %v800
        %v931 = vunpack.c.h.b16 %v800
        %v932 = vunpack.c.l.b16 %v801
        %v933 = vunpack.c.h.b16 %v801
        %v934 = vunpack.c.l.b16 %v802
        %v935 = vunpack.c.h.b16 %v802
        %v936 = vunpack.c.l.b16 %v803
        %v937 = vunpack.c.h.b16 %v803
        %v938 = vunpack.c.l.b16 %v804
        %v939 = vunpack.c.h.b16 %v804
        %v940 = vunpack.c.l.b16 %v805
        %v941 = vunpack.c.h.b16 %v805
        %v942 = vunpack.c.l.b16 %v806
        %v943 = vunpack.c.h.b16 %v806
        %v944 = vunpack.c.l.b16 %v807
        %v945 = vunpack.c.h.b16 %v807
        %v946 = vunpack.c.l.b16 %v808
        %v947 = vunpack.c.h.b16 %v808
        %v948 = vunpack.c.l.b16 %v809
        %v949 = vunpack.c.h.b16 %v809
        %v950 = vunpack.c.l.b16 %v810
        %v951 = vunpack.c.h.b16 %v810
        %v952 = vunpack.c.l.b16 %v811
        %v953 = vunpack.c.h.b16 %v811
        %v954 = vunpack.c.l.b16 %v812
        %v955 = vunpack.c.h.b16 %v812
        %v956 = vunpack.c.l.b16 %v813
        %v957 = vunpack.c.h.b16 %v813
        %v958 = vunpack.c.l.b16 %v814
        %v959 = vunpack.c.h.b16 %v814
        %v960 = vunpack.c.l.b16 %v815
        %v961 = vunpack.c.h.b16 %v815
        %v962 = vunpack.c.l.b16 %v816
        %v963 = vunpack.c.h.b16 %v816
        %v964 = vunpack.c.l.b16 %v817
        %v965 = vunpack.c.h.b16 %v817
        %v966 = vunpack.c.l.b16 %v818
        %v967 = vunpack.c.h.b16 %v818
        %v968 = vunpack.c.l.b16 %v819
        %v969 = vunpack.c.h.b16 %v819
        %v970 = vunpack.c.l.b16 %v820
        %v971 = vunpack.c.h.b16 %v820
        %v972 = vunpack.c.l.b16 %v821
        %v973 = vunpack.c.h.b16 %v821
        %v974 = vunpack.c.l.b16 %v822
        %v975 = vunpack.c.h.b16 %v822
        %v976 = vunpack.c.l.b16 %v823
        %v977 = vunpack.c.h.b16 %v823
        %v978 = vunpack.c.l.b16 %v824
        %v979 = vunpack.c.h.b16 %v824
        %v980 = vunpack.c.l.b16 %v825
        %v981 = vunpack.c.h.b16 %v825
        %v982 = vunpack.c.l.b16 %v826
        %v983 = vunpack.c.h.b16 %v826
        %v984 = vunpack.c.l.b16 %v827
        %v985 = vunpack.c.h.b16 %v827
        %v986 = vunpack.c.l.b16 %v828
        %v987 = vunpack.c.h.b16 %v828
        %v988 = vunpack.c.l.b16 %v829
        %v989 = vunpack.c.h.b16 %v829
        %v990 = vunpack.c.l.b16 %v830
        %v991 = vunpack.c.h.b16 %v830
        %v992 = vunpack.c.l.b16 %v831
        %v993 = vunpack.c.h.b16 %v831
        %v994 = vunpack.c.l.b16 %v832
        %v995 = vunpack.c.h.b16 %v832
        %v996 = vunpack.c.l.b16 %v833
        %v997 = vunpack.c.h.b16 %v833
        %v998 = vunpack.c.l.b16 %v834
        %v999 = vunpack.c.h.b16 %v834
        %v1000 = vunpack.c.l.b16 %v835
        %v1001 = vunpack.c.h.b16 %v835
        %v1002 = vunpack.c.l.b16 %v836
        %v1003 = vunpack.c.h.b16 %v836
        %v1004 = vunpack.c.l.b16 %v837
        %v1005 = vunpack.c.h.b16 %v837
        %v1006 = vunpack.c.l.b16 %v838
        %v1007 = vunpack.c.h.b16 %v838
        %v1008 = vunpack.c.l.b16 %v839
        %v1009 = vunpack.c.h.b16 %v839
        %v1010 = vunpack.c.l.b16 %v840
        %v1011 = vunpack.c.h.b16 %v840
        %v1012 = vunpack.c.l.b16 %v841
        %v1013 = vunpack.c.h.b16 %v841
        %v1014 = vunpack.c.l.b16 %v842
        %v1015 = vunpack.c.h.b16 %v842
        %v1016 = vunpack.c.l.b16 %v843
        %v1017 = vunpack.c.h.b16 %v843
        %v1018 = vunpack.c.l.b16 %v844
        %v1019 = vunpack.c.h.b16 %v844
        %v1020 = vunpack.c.l.b16 %v845
        %v1021 = vunpack.c.h.b16 %v845
        %v1022 = vunpack.c.l.b16 %v846
        %v1023 = vunpack.c.h.b16 %v846
        %v1024 = vunpack.c.l.b16 %v847
        %v1025 = vunpack.c.h.b16 %v847
        %v1026 = vunpack.c.l.b16 %v848
        %v1027 = vunpack.c.h.b16 %v848
        %v1028 = vunpack.c.l.b16 %v849
        %v1029 = vunpack.c.h.b16 %v849
        %v1030 = vunpack.c.l.b16 %v850
        %v1031 = vunpack.c.h.b16 %v850
        %v1032 = vunpack.c.l.b16 %v851
        %v1033 = vunpack.c.h.b16 %v851
        %v1034 = vunpack.c.l.b16 %v852
        %v1035 = vunpack.c.h.b16 %v852
        %v1036 = vunpack.c.l.b16 %v853
        %v1037 = vunpack.c.h.b16 %v853
        %v1038 = vunpack.c.l.b16 %v854
        %v1039 = vunpack.c.h.b16 %v854
        %v1040 = vunpack.c.l.b16 %v855
        %v1041 = vunpack.c.h.b16 %v855
        %v1042 = vunpack.c.l.b16 %v856
        %v1043 = vunpack.c.h.b16 %v856
        %v1044 = vunpack.c.l.b16 %v857
        %v1045 = vunpack.c.h.b16 %v857
        %v1046 = vunpack.c.l.b16 %v858
        %v1047 = vunpack.c.h.b16 %v858
        %v1048 = vpack.c.b16 %v940, %v922
        %v1049 = vpack.c.b16 %v941, %v923
        %v1050 = vpack.c.b16 %v942, %v924
        %v1051 = vpack.c.b16 %v943, %v925
        %v1052 = vpack.c.b16 %v944, %v926
        %v1053 = vpack.c.b16 %v945, %v927
        %v1054 = vpack.c.b16 %v946, %v928
        %v1055 = vpack.c.b16 %v947, %v929
        %v1056 = vpack.c.b16 %v948, %v930
        %v1057 = vpack.c.b16 %v949, %v931
        %v1058 = vpack.c.b16 %v950, %v932
        %v1059 = vpack.c.b16 %v951, %v933
        %v1060 = vpack.c.b16 %v952, %v934
        %v1061 = vpack.c.b16 %v953, %v935
        %v1062 = vpack.c.b16 %v954, %v936
        %v1063 = vpack.c.b16 %v955, %v937
        %v1064 = vpack.c.b16 %v956, %v938
        %v1065 = vpack.c.b16 %v957, %v939
        %v1066 = vpack.c.b16 %v976, %v958
        %v1067 = vpack.c.b16 %v977, %v959
        %v1068 = vpack.c.b16 %v978, %v960
        %v1069 = vpack.c.b16 %v979, %v961
        %v1070 = vpack.c.b16 %v980, %v962
        %v1071 = vpack.c.b16 %v981, %v963
        %v1072 = vpack.c.b16 %v982, %v964
        %v1073 = vpack.c.b16 %v983, %v965
        %v1074 = vpack.c.b16 %v984, %v966
        %v1075 = vpack.c.b16 %v985, %v967
        %v1076 = vpack.c.b16 %v986, %v968
        %v1077 = vpack.c.b16 %v987, %v969
        %v1078 = vpack.c.b16 %v988, %v970
        %v1079 = vpack.c.b16 %v989, %v971
        %v1080 = vpack.c.b16 %v990, %v972
        %v1081 = vpack.c.b16 %v991, %v973
        %v1082 = vpack.c.b16 %v992, %v974
        %v1083 = vpack.c.b16 %v993, %v975
        %v1084 = vpack.c.b16 %v1012, %v994
        %v1085 = vpack.c.b16 %v1013, %v995
        %v1086 = vpack.c.b16 %v1014, %v996
        %v1087 = vpack.c.b16 %v1015, %v997
        %v1088 = vpack.c.b16 %v1016, %v998
        %v1089 = vpack.c.b16 %v1017, %v999
        %v1090 = vpack.c.b16 %v1018, %v1000
        %v1091 = vpack.c.b16 %v1019, %v1001
        %v1092 = vpack.c.b16 %v1020, %v1002
        %v1093 = vpack.c.b16 %v1021, %v1003
        %v1094 = vpack.c.b16 %v1022, %v1004
        %v1095 = vpack.c.b16 %v1023, %v1005
        %v1096 = vpack.c.b16 %v1024, %v1006
        %v1097 = vpack.c.b16 %v1025, %v1007
        %v1098 = vpack.c.b16 %v1026, %v1008
        %v1099 = vpack.c.b16 %v1027, %v1009
        %v1100 = vpack.c.b16 %v1028, %v1010
        %v1101 = vpack.c.b16 %v1029, %v1011
        %v1102 = vpack.c.b16 %v1030, %v1030
        %v1103 = vpack.c.b16 %v1031, %v1031
        %v1104 = vpack.c.b16 %v1032, %v1032
        %v1105 = vpack.c.b16 %v1033, %v1033
        %v1106 = vpack.c.b16 %v1034, %v1034
        %v1107 = vpack.c.b16 %v1035, %v1035
        %v1108 = vpack.c.b16 %v1036, %v1036
        %v1109 = vpack.c.b16 %v1037, %v1037
        %v1110 = vpack.c.b16 %v1038, %v1038
        %v1111 = vpack.c.b16 %v1039, %v1039
        %v1112 = vpack.c.b16 %v1040, %v1040
        %v1113 = vpack.c.b16 %v1041, %v1041
        %v1114 = vpack.c.b16 %v1042, %v1042
        %v1115 = vpack.c.b16 %v1043, %v1043
        %v1116 = vpack.c.b16 %v1044, %v1044
        %v1117 = vpack.c.b16 %v1045, %v1045
        %v1118 = vpack.c.b16 %v1046, %v1046
        %v1119 = vpack.c.b16 %v1047, %v1047
        %1192 = vmatprep.subr.bf16.mxu0 0
        %1193 = vmatpush1.bf16.msra.mxu0 %v652
        %1194 = vmatprep.subr.bf16.mxu0 0
        %1195 = vmatpush1.bf16.msra.mxu0 %v653
        %1196 = vmatprep.subr.bf16.mxu0 0
        %1197 = vmatpush1.bf16.msra.mxu0 %v654
        %1198 = vmatprep.subr.bf16.mxu0 0
        %1199 = vmatpush1.bf16.msra.mxu0 %v655
        %1200 = vmatprep.subr.bf16.mxu0 0
        %1201 = vmatpush1.bf16.msra.mxu0 %v656
        %1202 = vmatprep.subr.bf16.mxu0 0
        %1203 = vmatpush1.bf16.msra.mxu0 %v657
        %1204 = vmatprep.subr.bf16.mxu0 0
        %1205 = vmatpush1.bf16.msra.mxu0 %v658
        %1206 = vmatprep.subr.bf16.mxu0 0
        %1207 = vmatpush1.bf16.msra.mxu0 %v659
        %1208 = vmatprep.subr.bf16.mxu0 0
        %1209 = vmatpush1.bf16.msra.mxu0 %v660
        %1210 = vmatprep.subr.bf16.mxu0 0
        %1211 = vmatpush1.bf16.msra.mxu0 %v661
        %1212 = vmatprep.subr.bf16.mxu0 0
        %1213 = vmatpush1.bf16.msra.mxu0 %v662
        %1214 = vmatprep.subr.bf16.mxu0 0
        %1215 = vmatpush1.bf16.msra.mxu0 %v663
        %1216 = vmatprep.subr.bf16.mxu0 0
        %1217 = vmatpush1.bf16.msra.mxu0 %v664
        %1218 = vmatprep.subr.bf16.mxu0 0
        %1219 = vmatpush1.bf16.msra.mxu0 %v665
        %1220 = vmatprep.subr.bf16.mxu0 0
        %1221 = vmatpush1.bf16.msra.mxu0 %v666
        %1222 = vmatprep.subr.bf16.mxu0 0
        %1223 = vmatpush1.bf16.msra.mxu0 %v667
        %1224 = vmatprep.mubr.bf16.mxu0 %v1049
        %1225 = vmatmul.mubr.bf16.gmra.mrb[0].mxu0 %v1048
        %v1226 = vpop.f32.mrb[0].mxu0
        %v1227 = vadd.f32 0.0, %v1226
        %v1228 = vpop.f32.mrb[0].mxu0
        %v1229 = vpop.f32.mrb[0].mxu0
        %v1230 = vadd.f32 0.0, %v1229
        %v1231 = vpop.f32.mrb[0].mxu0
        %1232 = vmatprep.mubr.bf16.mxu0 %v1067
        %1233 = vmatmul.mubr.bf16.gmra.mrb[0].mxu0 %v1066
        %v1234 = vpop.f32.mrb[0].mxu0
        %v1235 = vadd.f32 0.0, %v1234
        %v1236 = vpop.f32.mrb[0].mxu0
        %v1237 = vpop.f32.mrb[0].mxu0
        %v1238 = vadd.f32 0.0, %v1237
        %v1239 = vpop.f32.mrb[0].mxu0
        %1240 = vmatprep.mubr.bf16.mxu0 %v1085
        %1241 = vmatmul.mubr.bf16.gmra.mrb[0].mxu0 %v1084
        %v1242 = vpop.f32.mrb[0].mxu0
        %v1243 = vadd.f32 0.0, %v1242
        %v1244 = vpop.f32.mrb[0].mxu0
        %v1245 = vpop.f32.mrb[0].mxu0
        %v1246 = vadd.f32 0.0, %v1245
        %v1247 = vpop.f32.mrb[0].mxu0
        %1248 = vmatprep.mubr.bf16.mxu0 %v1103
        %1249 = vmatmul.mubr.bf16.gmra.mrb[0].mxu0 %v1102
        %v1250 = vpop.f32.mrb[0].mxu0
        %v1251 = vadd.f32 0.0, %v1250
        %v1252 = vpop.f32.mrb[0].mxu0
        %v1253 = vpop.f32.mrb[0].mxu0
        %v1254 = vpop.f32.mrb[0].mxu0
        %1255 = vdwg.mxu0
        %1256 = vmatprep.subr.bf16.mxu0 0
        %1257 = vmatpush1.bf16.msra.mxu0 %v668
        %1258 = vmatprep.subr.bf16.mxu0 0
        %1259 = vmatpush1.bf16.msra.mxu0 %v669
        %1260 = vmatprep.subr.bf16.mxu0 0
        %1261 = vmatpush1.bf16.msra.mxu0 %v670
        %1262 = vmatprep.subr.bf16.mxu0 0
        %1263 = vmatpush1.bf16.msra.mxu0 %v671
        %1264 = vmatprep.subr.bf16.mxu0 0
        %1265 = vmatpush1.bf16.msra.mxu0 %v672
        %1266 = vmatprep.subr.bf16.mxu0 0
        %1267 = vmatpush1.bf16.msra.mxu0 %v673
        %1268 = vmatprep.subr.bf16.mxu0 0
        %1269 = vmatpush1.bf16.msra.mxu0 %v674
        %1270 = vmatprep.subr.bf16.mxu0 0
        %1271 = vmatpush1.bf16.msra.mxu0 %v675
        %1272 = vmatprep.subr.bf16.mxu0 0
        %1273 = vmatpush1.bf16.msra.mxu0 %v676
        %1274 = vmatprep.subr.bf16.mxu0 0
        %1275 = vmatpush1.bf16.msra.mxu0 %v677
        %1276 = vmatprep.subr.bf16.mxu0 0
        %1277 = vmatpush1.bf16.msra.mxu0 %v678
        %1278 = vmatprep.subr.bf16.mxu0 0
        %1279 = vmatpush1.bf16.msra.mxu0 %v679
        %1280 = vmatprep.subr.bf16.mxu0 0
        %1281 = vmatpush1.bf16.msra.mxu0 %v680
        %1282 = vmatprep.subr.bf16.mxu0 0
        %1283 = vmatpush1.bf16.msra.mxu0 %v681
        %1284 = vmatprep.subr.bf16.mxu0 0
        %1285 = vmatpush1.bf16.msra.mxu0 %v682
        %1286 = vmatprep.subr.bf16.mxu0 0
        %1287 = vmatpush1.bf16.msra.mxu0 %v683
        %1288 = vmatprep.mubr.bf16.mxu0 %v1051
        %1289 = vmatmul.mubr.bf16.gmra.mrb[0].mxu0 %v1050
        %v1290 = vpop.f32.mrb[0].mxu0
        %v1291 = vadd.f32 %v1227, %v1290
        %v1292 = vpop.f32.mrb[0].mxu0
        %v1293 = vpop.f32.mrb[0].mxu0
        %v1294 = vadd.f32 %v1230, %v1293
        %v1295 = vpop.f32.mrb[0].mxu0
        %1296 = vmatprep.mubr.bf16.mxu0 %v1069
        %1297 = vmatmul.mubr.bf16.gmra.mrb[0].mxu0 %v1068
        %v1298 = vpop.f32.mrb[0].mxu0
        %v1299 = vadd.f32 %v1235, %v1298
        %v1300 = vpop.f32.mrb[0].mxu0
        %v1301 = vpop.f32.mrb[0].mxu0
        %v1302 = vadd.f32 %v1238, %v1301
        %v1303 = vpop.f32.mrb[0].mxu0
        %1304 = vmatprep.mubr.bf16.mxu0 %v1087
        %1305 = vmatmul.mubr.bf16.gmra.mrb[0].mxu0 %v1086
        %v1306 = vpop.f32.mrb[0].mxu0
        %v1307 = vadd.f32 %v1243, %v1306
        %v1308 = vpop.f32.mrb[0].mxu0
        %v1309 = vpop.f32.mrb[0].mxu0
        %v1310 = vadd.f32 %v1246, %v1309
        %v1311 = vpop.f32.mrb[0].mxu0
        %1312 = vmatprep.mubr.bf16.mxu0 %v1105
        %1313 = vmatmul.mubr.bf16.gmra.mrb[0].mxu0 %v1104
        %v1314 = vpop.f32.mrb[0].mxu0
        %v1315 = vadd.f32 %v1251, %v1314
        %v1316 = vpop.f32.mrb[0].mxu0
        %v1317 = vpop.f32.mrb[0].mxu0
        %v1318 = vpop.f32.mrb[0].mxu0
        %1319 = vdwg.mxu0
        %1320 = vmatprep.subr.bf16.mxu0 0
        %1321 = vmatpush1.bf16.msra.mxu0 %v684
        %1322 = vmatprep.subr.bf16.mxu0 0
        %1323 = vmatpush1.bf16.msra.mxu0 %v685
        %1324 = vmatprep.subr.bf16.mxu0 0
        %1325 = vmatpush1.bf16.msra.mxu0 %v686
        %1326 = vmatprep.subr.bf16.mxu0 0
        %1327 = vmatpush1.bf16.msra.mxu0 %v687
        %1328 = vmatprep.subr.bf16.mxu0 0
        %1329 = vmatpush1.bf16.msra.mxu0 %v688
        %1330 = vmatprep.subr.bf16.mxu0 0
        %1331 = vmatpush1.bf16.msra.mxu0 %v689
        %1332 = vmatprep.subr.bf16.mxu0 0
        %1333 = vmatpush1.bf16.msra.mxu0 %v690
        %1334 = vmatprep.subr.bf16.mxu0 0
        %1335 = vmatpush1.bf16.msra.mxu0 %v691
        %1336 = vmatprep.subr.bf16.mxu0 0
        %1337 = vmatpush1.bf16.msra.mxu0 %v692
        %1338 = vmatprep.subr.bf16.mxu0 0
        %1339 = vmatpush1.bf16.msra.mxu0 %v693
        %1340 = vmatprep.subr.bf16.mxu0 0
        %1341 = vmatpush1.bf16.msra.mxu0 %v694
        %1342 = vmatprep.subr.bf16.mxu0 0
        %1343 = vmatpush1.bf16.msra.mxu0 %v695
        %1344 = vmatprep.subr.bf16.mxu0 0
        %1345 = vmatpush1.bf16.msra.mxu0 %v696
        %1346 = vmatprep.subr.bf16.mxu0 0
        %1347 = vmatpush1.bf16.msra.mxu0 %v697
        %1348 = vmatprep.subr.bf16.mxu0 0
        %1349 = vmatpush1.bf16.msra.mxu0 %v698
        %1350 = vmatprep.subr.bf16.mxu0 0
        %1351 = vmatpush1.bf16.msra.mxu0 %v699
        %1352 = vmatprep.mubr.bf16.mxu0 %v1053
        %1353 = vmatmul.mubr.bf16.gmra.mrb[0].mxu0 %v1052
        %v1354 = vpop.f32.mrb[0].mxu0
        %v1355 = vadd.f32 %v1291, %v1354
        %v1356 = vpop.f32.mrb[0].mxu0
        %v1357 = vpop.f32.mrb[0].mxu0
        %v1358 = vadd.f32 %v1294, %v1357
        %v1359 = vpop.f32.mrb[0].mxu0
        %1360 = vmatprep.mubr.bf16.mxu0 %v1071
        %1361 = vmatmul.mubr.bf16.gmra.mrb[0].mxu0 %v1070
        %v1362 = vpop.f32.mrb[0].mxu0
        %v1363 = vadd.f32 %v1299, %v1362
        %v1364 = vpop.f32.mrb[0].mxu0
        %v1365 = vpop.f32.mrb[0].mxu0
        %v1366 = vadd.f32 %v1302, %v1365
        %v1367 = vpop.f32.mrb[0].mxu0
        %1368 = vmatprep.mubr.bf16.mxu0 %v1089
        %1369 = vmatmul.mubr.bf16.gmra.mrb[0].mxu0 %v1088
        %v1370 = vpop.f32.mrb[0].mxu0
        %v1371 = vadd.f32 %v1307, %v1370
        %v1372 = vpop.f32.mrb[0].mxu0
        %v1373 = vpop.f32.mrb[0].mxu0
        %v1374 = vadd.f32 %v1310, %v1373
        %v1375 = vpop.f32.mrb[0].mxu0
        %1376 = vmatprep.mubr.bf16.mxu0 %v1107
        %1377 = vmatmul.mubr.bf16.gmra.mrb[0].mxu0 %v1106
        %v1378 = vpop.f32.mrb[0].mxu0
        %v1379 = vadd.f32 %v1315, %v1378
        %v1380 = vpop.f32.mrb[0].mxu0
        %v1381 = vpop.f32.mrb[0].mxu0
        %v1382 = vpop.f32.mrb[0].mxu0
        %1383 = vdwg.mxu0
        %1384 = vmatprep.subr.bf16.mxu0 0
        %1385 = vmatpush1.bf16.msra.mxu0 %v700
        %1386 = vmatprep.subr.bf16.mxu0 0
        %1387 = vmatpush1.bf16.msra.mxu0 %v701
        %1388 = vmatprep.subr.bf16.mxu0 0
        %1389 = vmatpush1.bf16.msra.mxu0 %v702
        %1390 = vmatprep.subr.bf16.mxu0 0
        %1391 = vmatpush1.bf16.msra.mxu0 %v703
        %1392 = vmatprep.subr.bf16.mxu0 0
        %1393 = vmatpush1.bf16.msra.mxu0 %v704
        %1394 = vmatprep.subr.bf16.mxu0 0
        %1395 = vmatpush1.bf16.msra.mxu0 %v705
        %1396 = vmatprep.subr.bf16.mxu0 0
        %1397 = vmatpush1.bf16.msra.mxu0 %v706
        %1398 = vmatprep.subr.bf16.mxu0 0
        %1399 = vmatpush1.bf16.msra.mxu0 %v707
        %1400 = vmatprep.subr.bf16.mxu0 0
        %1401 = vmatpush1.bf16.msra.mxu0 %v708
        %1402 = vmatprep.subr.bf16.mxu0 0
        %1403 = vmatpush1.bf16.msra.mxu0 %v709
        %1404 = vmatprep.subr.bf16.mxu0 0
        %1405 = vmatpush1.bf16.msra.mxu0 %v710
        %1406 = vmatprep.subr.bf16.mxu0 0
        %1407 = vmatpush1.bf16.msra.mxu0 %v711
        %1408 = vmatprep.subr.bf16.mxu0 0
        %1409 = vmatpush1.bf16.msra.mxu0 %v712
        %1410 = vmatprep.subr.bf16.mxu0 0
        %1411 = vmatpush1.bf16.msra.mxu0 %v713
        %1412 = vmatprep.subr.bf16.mxu0 0
        %1413 = vmatpush1.bf16.msra.mxu0 %v714
        %1414 = vmatprep.subr.bf16.mxu0 0
        %1415 = vmatpush1.bf16.msra.mxu0 %v715
        %1416 = vmatprep.mubr.bf16.mxu0 %v1055
        %1417 = vmatmul.mubr.bf16.gmra.mrb[0].mxu0 %v1054
        %v1418 = vpop.f32.mrb[0].mxu0
        %v1419 = vadd.f32 %v1355, %v1418
        %v1420 = vpop.f32.mrb[0].mxu0
        %v1421 = vpop.f32.mrb[0].mxu0
        %v1422 = vadd.f32 %v1358, %v1421
        %v1423 = vpop.f32.mrb[0].mxu0
        %1424 = vmatprep.mubr.bf16.mxu0 %v1073
        %1425 = vmatmul.mubr.bf16.gmra.mrb[0].mxu0 %v1072
        %v1426 = vpop.f32.mrb[0].mxu0
        %v1427 = vadd.f32 %v1363, %v1426
        %v1428 = vpop.f32.mrb[0].mxu0
        %v1429 = vpop.f32.mrb[0].mxu0
        %v1430 = vadd.f32 %v1366, %v1429
        %v1431 = vpop.f32.mrb[0].mxu0
        %1432 = vmatprep.mubr.bf16.mxu0 %v1091
        %1433 = vmatmul.mubr.bf16.gmra.mrb[0].mxu0 %v1090
        %v1434 = vpop.f32.mrb[0].mxu0
        %v1435 = vadd.f32 %v1371, %v1434
        %v1436 = vpop.f32.mrb[0].mxu0
        %v1437 = vpop.f32.mrb[0].mxu0
        %v1438 = vadd.f32 %v1374, %v1437
        %v1439 = vpop.f32.mrb[0].mxu0
        %1440 = vmatprep.mubr.bf16.mxu0 %v1109
        %1441 = vmatmul.mubr.bf16.gmra.mrb[0].mxu0 %v1108
        %v1442 = vpop.f32.mrb[0].mxu0
        %v1443 = vadd.f32 %v1379, %v1442
        %v1444 = vpop.f32.mrb[0].mxu0
        %v1445 = vpop.f32.mrb[0].mxu0
        %v1446 = vpop.f32.mrb[0].mxu0
        %1447 = vdwg.mxu0
        %1448 = vmatprep.subr.bf16.mxu0 0
        %1449 = vmatpush1.bf16.msra.mxu0 %v716
        %1450 = vmatprep.subr.bf16.mxu0 0
        %1451 = vmatpush1.bf16.msra.mxu0 %v717
        %1452 = vmatprep.subr.bf16.mxu0 0
        %1453 = vmatpush1.bf16.msra.mxu0 %v718
        %1454 = vmatprep.subr.bf16.mxu0 0
        %1455 = vmatpush1.bf16.msra.mxu0 %v719
        %1456 = vmatprep.subr.bf16.mxu0 0
        %1457 = vmatpush1.bf16.msra.mxu0 %v720
        %1458 = vmatprep.subr.bf16.mxu0 0
        %1459 = vmatpush1.bf16.msra.mxu0 %v721
        %1460 = vmatprep.subr.bf16.mxu0 0
        %1461 = vmatpush1.bf16.msra.mxu0 %v722
        %1462 = vmatprep.subr.bf16.mxu0 0
        %1463 = vmatpush1.bf16.msra.mxu0 %v723
        %1464 = vmatprep.subr.bf16.mxu0 0
        %1465 = vmatpush1.bf16.msra.mxu0 %v724
        %1466 = vmatprep.subr.bf16.mxu0 0
        %1467 = vmatpush1.bf16.msra.mxu0 %v725
        %1468 = vmatprep.subr.bf16.mxu0 0
        %1469 = vmatpush1.bf16.msra.mxu0 %v726
        %1470 = vmatprep.subr.bf16.mxu0 0
        %1471 = vmatpush1.bf16.msra.mxu0 %v727
        %1472 = vmatprep.subr.bf16.mxu0 0
        %1473 = vmatpush1.bf16.msra.mxu0 %v728
        %1474 = vmatprep.subr.bf16.mxu0 0
        %1475 = vmatpush1.bf16.msra.mxu0 %v729
        %1476 = vmatprep.subr.bf16.mxu0 0
        %1477 = vmatpush1.bf16.msra.mxu0 %v730
        %1478 = vmatprep.subr.bf16.mxu0 0
        %1479 = vmatpush1.bf16.msra.mxu0 %v731
        %1480 = vmatprep.mubr.bf16.mxu0 %v1057
        %1481 = vmatmul.mubr.bf16.gmra.mrb[0].mxu0 %v1056
        %v1482 = vpop.f32.mrb[0].mxu0
        %v1483 = vadd.f32 %v1419, %v1482
        %v1484 = vpop.f32.mrb[0].mxu0
        %v1485 = vpop.f32.mrb[0].mxu0
        %v1486 = vadd.f32 %v1422, %v1485
        %v1487 = vpop.f32.mrb[0].mxu0
        %1488 = vmatprep.mubr.bf16.mxu0 %v1075
        %1489 = vmatmul.mubr.bf16.gmra.mrb[0].mxu0 %v1074
        %v1490 = vpop.f32.mrb[0].mxu0
        %v1491 = vadd.f32 %v1427, %v1490
        %v1492 = vpop.f32.mrb[0].mxu0
        %v1493 = vpop.f32.mrb[0].mxu0
        %v1494 = vadd.f32 %v1430, %v1493
        %v1495 = vpop.f32.mrb[0].mxu0
        %1496 = vmatprep.mubr.bf16.mxu0 %v1093
        %1497 = vmatmul.mubr.bf16.gmra.mrb[0].mxu0 %v1092
        %v1498 = vpop.f32.mrb[0].mxu0
        %v1499 = vadd.f32 %v1435, %v1498
        %v1500 = vpop.f32.mrb[0].mxu0
        %v1501 = vpop.f32.mrb[0].mxu0
        %v1502 = vadd.f32 %v1438, %v1501
        %v1503 = vpop.f32.mrb[0].mxu0
        %1504 = vmatprep.mubr.bf16.mxu0 %v1111
        %1505 = vmatmul.mubr.bf16.gmra.mrb[0].mxu0 %v1110
        %v1506 = vpop.f32.mrb[0].mxu0
        %v1507 = vadd.f32 %v1443, %v1506
        %v1508 = vpop.f32.mrb[0].mxu0
        %v1509 = vpop.f32.mrb[0].mxu0
        %v1510 = vpop.f32.mrb[0].mxu0
        %1511 = vdwg.mxu0
        %1512 = vmatprep.subr.bf16.mxu0 0
        %1513 = vmatpush1.bf16.msra.mxu0 %v732
        %1514 = vmatprep.subr.bf16.mxu0 0
        %1515 = vmatpush1.bf16.msra.mxu0 %v733
        %1516 = vmatprep.subr.bf16.mxu0 0
        %1517 = vmatpush1.bf16.msra.mxu0 %v734
        %1518 = vmatprep.subr.bf16.mxu0 0
        %1519 = vmatpush1.bf16.msra.mxu0 %v735
        %1520 = vmatprep.subr.bf16.mxu0 0
        %1521 = vmatpush1.bf16.msra.mxu0 %v736
        %1522 = vmatprep.subr.bf16.mxu0 0
        %1523 = vmatpush1.bf16.msra.mxu0 %v737
        %1524 = vmatprep.subr.bf16.mxu0 0
        %1525 = vmatpush1.bf16.msra.mxu0 %v738
        %1526 = vmatprep.subr.bf16.mxu0 0
        %1527 = vmatpush1.bf16.msra.mxu0 %v739
        %1528 = vmatprep.subr.bf16.mxu0 0
        %1529 = vmatpush1.bf16.msra.mxu0 %v740
        %1530 = vmatprep.subr.bf16.mxu0 0
        %1531 = vmatpush1.bf16.msra.mxu0 %v741
        %1532 = vmatprep.subr.bf16.mxu0 0
        %1533 = vmatpush1.bf16.msra.mxu0 %v742
        %1534 = vmatprep.subr.bf16.mxu0 0
        %1535 = vmatpush1.bf16.msra.mxu0 %v743
        %1536 = vmatprep.subr.bf16.mxu0 0
        %1537 = vmatpush1.bf16.msra.mxu0 %v744
        %1538 = vmatprep.subr.bf16.mxu0 0
        %1539 = vmatpush1.bf16.msra.mxu0 %v745
        %1540 = vmatprep.subr.bf16.mxu0 0
        %1541 = vmatpush1.bf16.msra.mxu0 %v746
        %1542 = vmatprep.subr.bf16.mxu0 0
        %1543 = vmatpush1.bf16.msra.mxu0 %v747
        %1544 = vmatprep.mubr.bf16.mxu0 %v1059
        %1545 = vmatmul.mubr.bf16.gmra.mrb[0].mxu0 %v1058
        %v1546 = vpop.f32.mrb[0].mxu0
        %v1547 = vadd.f32 %v1483, %v1546
        %v1548 = vpop.f32.mrb[0].mxu0
        %v1549 = vpop.f32.mrb[0].mxu0
        %v1550 = vadd.f32 %v1486, %v1549
        %v1551 = vpop.f32.mrb[0].mxu0
        %1552 = vmatprep.mubr.bf16.mxu0 %v1077
        %1553 = vmatmul.mubr.bf16.gmra.mrb[0].mxu0 %v1076
        %v1554 = vpop.f32.mrb[0].mxu0
        %v1555 = vadd.f32 %v1491, %v1554
        %v1556 = vpop.f32.mrb[0].mxu0
        %v1557 = vpop.f32.mrb[0].mxu0
        %v1558 = vadd.f32 %v1494, %v1557
        %v1559 = vpop.f32.mrb[0].mxu0
        %1560 = vmatprep.mubr.bf16.mxu0 %v1095
        %1561 = vmatmul.mubr.bf16.gmra.mrb[0].mxu0 %v1094
        %v1562 = vpop.f32.mrb[0].mxu0
        %v1563 = vadd.f32 %v1499, %v1562
        %v1564 = vpop.f32.mrb[0].mxu0
        %v1565 = vpop.f32.mrb[0].mxu0
        %v1566 = vadd.f32 %v1502, %v1565
        %v1567 = vpop.f32.mrb[0].mxu0
        %1568 = vmatprep.mubr.bf16.mxu0 %v1113
        %1569 = vmatmul.mubr.bf16.gmra.mrb[0].mxu0 %v1112
        %v1570 = vpop.f32.mrb[0].mxu0
        %v1571 = vadd.f32 %v1507, %v1570
        %v1572 = vpop.f32.mrb[0].mxu0
        %v1573 = vpop.f32.mrb[0].mxu0
        %v1574 = vpop.f32.mrb[0].mxu0
        %1575 = vdwg.mxu0
        %1576 = vmatprep.subr.bf16.mxu0 0
        %1577 = vmatpush1.bf16.msra.mxu0 %v748
        %1578 = vmatprep.subr.bf16.mxu0 0
        %1579 = vmatpush1.bf16.msra.mxu0 %v749
        %1580 = vmatprep.subr.bf16.mxu0 0
        %1581 = vmatpush1.bf16.msra.mxu0 %v750
        %1582 = vmatprep.subr.bf16.mxu0 0
        %1583 = vmatpush1.bf16.msra.mxu0 %v751
        %1584 = vmatprep.subr.bf16.mxu0 0
        %1585 = vmatpush1.bf16.msra.mxu0 %v752
        %1586 = vmatprep.subr.bf16.mxu0 0
        %1587 = vmatpush1.bf16.msra.mxu0 %v753
        %1588 = vmatprep.subr.bf16.mxu0 0
        %1589 = vmatpush1.bf16.msra.mxu0 %v754
        %1590 = vmatprep.subr.bf16.mxu0 0
        %1591 = vmatpush1.bf16.msra.mxu0 %v755
        %1592 = vmatprep.subr.bf16.mxu0 0
        %1593 = vmatpush1.bf16.msra.mxu0 %v756
        %1594 = vmatprep.subr.bf16.mxu0 0
        %1595 = vmatpush1.bf16.msra.mxu0 %v757
        %1596 = vmatprep.subr.bf16.mxu0 0
        %1597 = vmatpush1.bf16.msra.mxu0 %v758
        %1598 = vmatprep.subr.bf16.mxu0 0
        %1599 = vmatpush1.bf16.msra.mxu0 %v759
        %1600 = vmatprep.subr.bf16.mxu0 0
        %1601 = vmatpush1.bf16.msra.mxu0 %v760
        %1602 = vmatprep.subr.bf16.mxu0 0
        %1603 = vmatpush1.bf16.msra.mxu0 %v761
        %1604 = vmatprep.subr.bf16.mxu0 0
        %1605 = vmatpush1.bf16.msra.mxu0 %v762
        %1606 = vmatprep.subr.bf16.mxu0 0
        %1607 = vmatpush1.bf16.msra.mxu0 %v763
        %1608 = vmatprep.mubr.bf16.mxu0 %v1061
        %1609 = vmatmul.mubr.bf16.gmra.mrb[0].mxu0 %v1060
        %v1610 = vpop.f32.mrb[0].mxu0
        %v1611 = vadd.f32 %v1547, %v1610
        %v1612 = vpop.f32.mrb[0].mxu0
        %v1613 = vpop.f32.mrb[0].mxu0
        %v1614 = vadd.f32 %v1550, %v1613
        %v1615 = vpop.f32.mrb[0].mxu0
        %1616 = vmatprep.mubr.bf16.mxu0 %v1079
        %1617 = vmatmul.mubr.bf16.gmra.mrb[0].mxu0 %v1078
        %v1618 = vpop.f32.mrb[0].mxu0
        %v1619 = vadd.f32 %v1555, %v1618
        %v1620 = vpop.f32.mrb[0].mxu0
        %v1621 = vpop.f32.mrb[0].mxu0
        %v1622 = vadd.f32 %v1558, %v1621
        %v1623 = vpop.f32.mrb[0].mxu0
        %1624 = vmatprep.mubr.bf16.mxu0 %v1097
        %1625 = vmatmul.mubr.bf16.gmra.mrb[0].mxu0 %v1096
        %v1626 = vpop.f32.mrb[0].mxu0
        %v1627 = vadd.f32 %v1563, %v1626
        %v1628 = vpop.f32.mrb[0].mxu0
        %v1629 = vpop.f32.mrb[0].mxu0
        %v1630 = vadd.f32 %v1566, %v1629
        %v1631 = vpop.f32.mrb[0].mxu0
        %1632 = vmatprep.mubr.bf16.mxu0 %v1115
        %1633 = vmatmul.mubr.bf16.gmra.mrb[0].mxu0 %v1114
        %v1634 = vpop.f32.mrb[0].mxu0
        %v1635 = vadd.f32 %v1571, %v1634
        %v1636 = vpop.f32.mrb[0].mxu0
        %v1637 = vpop.f32.mrb[0].mxu0
        %v1638 = vpop.f32.mrb[0].mxu0
        %1639 = vdwg.mxu0
        %1640 = vmatprep.subr.bf16.mxu0 0
        %1641 = vmatpush1.bf16.msra.mxu0 %v764
        %1642 = vmatprep.subr.bf16.mxu0 0
        %1643 = vmatpush1.bf16.msra.mxu0 %v765
        %1644 = vmatprep.subr.bf16.mxu0 0
        %1645 = vmatpush1.bf16.msra.mxu0 %v766
        %1646 = vmatprep.subr.bf16.mxu0 0
        %1647 = vmatpush1.bf16.msra.mxu0 %v767
        %1648 = vmatprep.subr.bf16.mxu0 0
        %1649 = vmatpush1.bf16.msra.mxu0 %v768
        %1650 = vmatprep.subr.bf16.mxu0 0
        %1651 = vmatpush1.bf16.msra.mxu0 %v769
        %1652 = vmatprep.subr.bf16.mxu0 0
        %1653 = vmatpush1.bf16.msra.mxu0 %v770
        %1654 = vmatprep.subr.bf16.mxu0 0
        %1655 = vmatpush1.bf16.msra.mxu0 %v771
        %1656 = vmatprep.subr.bf16.mxu0 0
        %1657 = vmatpush1.bf16.msra.mxu0 %v772
        %1658 = vmatprep.subr.bf16.mxu0 0
        %1659 = vmatpush1.bf16.msra.mxu0 %v773
        %1660 = vmatprep.subr.bf16.mxu0 0
        %1661 = vmatpush1.bf16.msra.mxu0 %v774
        %1662 = vmatprep.subr.bf16.mxu0 0
        %1663 = vmatpush1.bf16.msra.mxu0 %v775
        %1664 = vmatprep.subr.bf16.mxu0 0
        %1665 = vmatpush1.bf16.msra.mxu0 %v776
        %1666 = vmatprep.subr.bf16.mxu0 0
        %1667 = vmatpush1.bf16.msra.mxu0 %v777
        %1668 = vmatprep.subr.bf16.mxu0 0
        %1669 = vmatpush1.bf16.msra.mxu0 %v778
        %1670 = vmatprep.subr.bf16.mxu0 0
        %1671 = vmatpush1.bf16.msra.mxu0 %v779
        %1672 = vmatprep.mubr.bf16.mxu0 %v1063
        %1673 = vmatmul.mubr.bf16.gmra.mrb[0].mxu0 %v1062
        %v1674 = vpop.f32.mrb[0].mxu0
        %v1675 = vadd.f32 %v1611, %v1674
        %v1676 = vpop.f32.mrb[0].mxu0
        %v1677 = vpop.f32.mrb[0].mxu0
        %v1678 = vadd.f32 %v1614, %v1677
        %v1679 = vpop.f32.mrb[0].mxu0
        %1680 = vmatprep.mubr.bf16.mxu0 %v1081
        %1681 = vmatmul.mubr.bf16.gmra.mrb[0].mxu0 %v1080
        %v1682 = vpop.f32.mrb[0].mxu0
        %v1683 = vadd.f32 %v1619, %v1682
        %v1684 = vpop.f32.mrb[0].mxu0
        %v1685 = vpop.f32.mrb[0].mxu0
        %v1686 = vadd.f32 %v1622, %v1685
        %v1687 = vpop.f32.mrb[0].mxu0
        %1688 = vmatprep.mubr.bf16.mxu0 %v1099
        %1689 = vmatmul.mubr.bf16.gmra.mrb[0].mxu0 %v1098
        %v1690 = vpop.f32.mrb[0].mxu0
        %v1691 = vadd.f32 %v1627, %v1690
        %v1692 = vpop.f32.mrb[0].mxu0
        %v1693 = vpop.f32.mrb[0].mxu0
        %v1694 = vadd.f32 %v1630, %v1693
        %v1695 = vpop.f32.mrb[0].mxu0
        %1696 = vmatprep.mubr.bf16.mxu0 %v1117
        %1697 = vmatmul.mubr.bf16.gmra.mrb[0].mxu0 %v1116
        %v1698 = vpop.f32.mrb[0].mxu0
        %v1699 = vadd.f32 %v1635, %v1698
        %v1700 = vpop.f32.mrb[0].mxu0
        %v1701 = vpop.f32.mrb[0].mxu0
        %v1702 = vpop.f32.mrb[0].mxu0
        %1703 = vdwg.mxu0
        %1704 = vmatprep.subr.bf16.mxu0 0
        %1705 = vmatpush1.bf16.msra.mxu0 %v780
        %1706 = vmatprep.subr.bf16.mxu0 0
        %1707 = vmatpush1.bf16.msra.mxu0 %v781
        %1708 = vmatprep.subr.bf16.mxu0 0
        %1709 = vmatpush1.bf16.msra.mxu0 %v782
        %1710 = vmatprep.subr.bf16.mxu0 0
        %1711 = vmatpush1.bf16.msra.mxu0 %v783
        %1712 = vmatprep.subr.bf16.mxu0 0
        %1713 = vmatpush1.bf16.msra.mxu0 %v784
        %1714 = vmatprep.subr.bf16.mxu0 0
        %1715 = vmatpush1.bf16.msra.mxu0 %v785
        %1716 = vmatprep.subr.bf16.mxu0 0
        %1717 = vmatpush1.bf16.msra.mxu0 %v786
        %1718 = vmatprep.subr.bf16.mxu0 0
        %1719 = vmatpush1.bf16.msra.mxu0 %v787
        %1720 = vmatprep.subr.bf16.mxu0 0
        %1721 = vmatpush1.bf16.msra.mxu0 %v788
        %1722 = vmatprep.subr.bf16.mxu0 0
        %1723 = vmatpush1.bf16.msra.mxu0 %v789
        %1724 = vmatprep.subr.bf16.mxu0 0
        %1725 = vmatpush1.bf16.msra.mxu0 %v790
        %1726 = vmatprep.subr.bf16.mxu0 0
        %1727 = vmatpush1.bf16.msra.mxu0 %v791
        %1728 = vmatprep.subr.bf16.mxu0 0
        %1729 = vmatpush1.bf16.msra.mxu0 %v792
        %1730 = vmatprep.subr.bf16.mxu0 0
        %1731 = vmatpush1.bf16.msra.mxu0 %v793
        %1732 = vmatprep.subr.bf16.mxu0 0
        %1733 = vmatpush1.bf16.msra.mxu0 %v794
        %1734 = vmatprep.subr.bf16.mxu0 0
        %1735 = vmatpush1.bf16.msra.mxu0 %v795
        %1736 = vmatprep.mubr.bf16.mxu0 %v1065
        %1737 = vmatmul.mubr.bf16.gmra.mrb[0].mxu0 %v1064
        %v1738 = vpop.f32.mrb[0].mxu0
        %v1739 = vadd.f32 %v1675, %v1738
        %v1740 = vpop.f32.mrb[0].mxu0
        %v1741 = vpop.f32.mrb[0].mxu0
        %v1742 = vadd.f32 %v1678, %v1741
        %v1743 = vpop.f32.mrb[0].mxu0
        %1744 = vmatprep.mubr.bf16.mxu0 %v1083
        %1745 = vmatmul.mubr.bf16.gmra.mrb[0].mxu0 %v1082
        %v1746 = vpop.f32.mrb[0].mxu0
        %v1747 = vadd.f32 %v1683, %v1746
        %v1748 = vpop.f32.mrb[0].mxu0
        %v1749 = vpop.f32.mrb[0].mxu0
        %v1750 = vadd.f32 %v1686, %v1749
        %v1751 = vpop.f32.mrb[0].mxu0
        %1752 = vmatprep.mubr.bf16.mxu0 %v1101
        %1753 = vmatmul.mubr.bf16.gmra.mrb[0].mxu0 %v1100
        %v1754 = vpop.f32.mrb[0].mxu0
        %v1755 = vadd.f32 %v1691, %v1754
        %v1756 = vpop.f32.mrb[0].mxu0
        %v1757 = vpop.f32.mrb[0].mxu0
        %v1758 = vadd.f32 %v1694, %v1757
        %v1759 = vpop.f32.mrb[0].mxu0
        %1760 = vmatprep.mubr.bf16.mxu0 %v1119
        %1761 = vmatmul.mubr.bf16.gmra.mrb[0].mxu0 %v1118
        %v1762 = vpop.f32.mrb[0].mxu0
        %v1763 = vadd.f32 %v1699, %v1762
        %v1764 = vpop.f32.mrb[0].mxu0
        %v1765 = vpop.f32.mrb[0].mxu0
        %v1766 = vpop.f32.mrb[0].mxu0
        %1767 = vdwg.mxu0
        %v1768 = vld [vmem:[%s572] sm:$0x1]
        %v1770 = vlaneseq
        %v1771 = vshrl.u32 %v1770, 7
        %v1772 = vsub.s32 0, %v1771
        %v1773 = vrot.slane %v1768, %v1772
        %v1775 = vmul.f32 %v1739, %v1773
        %v1776 = vmul.f32 %v1742, %v1773
        %v1777 = vmul.f32 %v1747, %v1773
        %v1778 = vmul.f32 %v1750, %v1773
        %v1779 = vmul.f32 %v1755, %v1773
        %v1780 = vmul.f32 %v1758, %v1773
        %v1781 = vmul.f32 %v1763, %v1773
        %v1782 = vadd.f32 %v1775, %v1776
        %v1783 = vadd.f32 %v1782, %v1777
        %v1784 = vadd.f32 %v1783, %v1778
        %v1785 = vadd.f32 %v1784, %v1779
        %v1786 = vadd.f32 %v1785, %v1780
        %vm1787 = vcmask 1040384
        %v1788 = vsel %vm1787, %v1781, 0.0
        %v1789 = vadd.f32 %v1786, %v1788
        %v1790 = vrot.slane %v1789, 4
        %v1791 = vadd.f32 %v1789, %v1790
        %v1792 = vrot.slane %v1791, 2
        %v1793 = vadd.f32 %v1791, %v1792
        %v1794 = vrot.slane %v1793, 1
        %v1795 = vadd.f32 %v1793, %v1794
        %v1796 = vmul.f32 %v1775, %v1775
        %v1797 = vmul.f32 %v1776, %v1776
        %v1798 = vmul.f32 %v1777, %v1777
        %v1799 = vmul.f32 %v1778, %v1778
        %v1800 = vmul.f32 %v1779, %v1779
        %v1801 = vmul.f32 %v1780, %v1780
        %v1802 = vmul.f32 %v1781, %v1781
        %v1803 = vadd.f32 %v1796, %v1797
        %v1804 = vadd.f32 %v1803, %v1798
        %v1805 = vadd.f32 %v1804, %v1799
        %v1806 = vadd.f32 %v1805, %v1800
        %v1807 = vadd.f32 %v1806, %v1801
        %v1808 = vsel %vm1787, %v1802, 0.0
        %v1809 = vadd.f32 %v1807, %v1808
        %v1810 = vrot.slane %v1809, 4
        %v1811 = vadd.f32 %v1809, %v1810
        %v1812 = vrot.slane %v1811, 2
        %v1813 = vadd.f32 %v1811, %v1812
        %v1814 = vrot.slane %v1813, 1
        %v1815 = vadd.f32 %v1813, %v1814
        %v1816 = vmul.f32 %v1795, 0.020408163
        %v1817 = vmul.f32 %v1815, 0.020408163
        %v1818 = vmul.f32 %v1816, %v1816
        %v1819 = vsub.f32 %v1817, %v1818
        %v1820 = vadd.f32 %v1819, 1e-05
        %v1821 = vrsqrt.pop %v1820
        %v1822 = vld [vmem:[%s575] sm:$0x1]
        %v1823 = vmul.f32 %v1821, %v1822
        %v1824 = vsub.f32 %v1775, %v1816
        %v1825 = vsub.f32 %v1776, %v1816
        %v1826 = vsub.f32 %v1777, %v1816
        %v1827 = vsub.f32 %v1778, %v1816
        %v1828 = vsub.f32 %v1779, %v1816
        %v1829 = vsub.f32 %v1780, %v1816
        %v1830 = vsub.f32 %v1781, %v1816
        %v1831 = vlaneseq
        %v1832 = vshrl.u32 %v1831, 7
        %v1833 = vsub.s32 0, %v1832
        %v1834 = vrot.slane %v1823, %v1833
        %v1835 = vmul.f32 %v1824, %v1834
        %v1836 = vmul.f32 %v1825, %v1834
        %v1837 = vmul.f32 %v1826, %v1834
        %v1838 = vmul.f32 %v1827, %v1834
        %v1839 = vmul.f32 %v1828, %v1834
        %v1840 = vmul.f32 %v1829, %v1834
        %v1841 = vmul.f32 %v1830, %v1834
        %v1842 = vld [vmem:[%s578] sm:$0x1]
        %v1844 = vlaneseq
        %v1845 = vshrl.u32 %v1844, 7
        %v1846 = vsub.s32 0, %v1845
        %v1847 = vrot.slane %v1842, %v1846
        %v1849 = vadd.f32 %v1835, %v1847
        %v1850 = vadd.f32 %v1836, %v1847
        %v1851 = vadd.f32 %v1837, %v1847
        %v1852 = vadd.f32 %v1838, %v1847
        %v1853 = vadd.f32 %v1839, %v1847
        %v1854 = vadd.f32 %v1840, %v1847
        %v1855 = vadd.f32 %v1841, %v1847
        %1856 = vst [vmem:[%s569] sm:$0xff] %v1849
        %1857 = vst [vmem:[%s569 + $0x8] sm:$0xff] %v1850
        %1858 = vst [vmem:[%s569 + $0x10] sm:$0xff] %v1851
        %1859 = vst [vmem:[%s569 + $0x18] sm:$0xff] %v1852
        %1860 = vst [vmem:[%s569 + $0x20] sm:$0xff] %v1853
        %1861 = vst [vmem:[%s569 + $0x28] sm:$0xff] %v1854
        %1862 = vst [vmem:[%s569 + $0x30] sm:$0x1] %v1855
        %s1863 = sand.u32 %s149, 1
        %s1864 = sand.u32 %s149, 1
        %s1865 = smul.addr %s1864, 56
        %s1866 = scalar_lea.vmem [#allocation3], %s1865
        // Predicated region
        $region79: #{relu_conv_bn.1} parent=73 // pred_check
          %p1867 = pneg %p159
        $region80: #{relu_conv_bn.1} parent=73 // pred_check_branch
          %1869 = sbr.rel (%p1867) target = $region82
        $region81: #{relu_conv_bn.1} parent=73 // pred_region
          %s1870 = smul.addr %s16, 8
          %s1871 = scalar_lea.vmem %s5, %s1870
          // Predicated region
          $region83: #{relu_conv_bn.1} parent=81 // pred_check
            _
          $region84: #{relu_conv_bn.1} parent=81 // pred_check_branch
            %1873 = sbr.rel (0) target = $region86
          $region85: #{relu_conv_bn.1} parent=81 // pred_region
            // Predicated region
            $region87: #{relu_conv_bn.1} parent=85 // pred_check
              _
            $region88: #{relu_conv_bn.1} parent=85 // pred_check_branch
              %1875 = sbr.rel (0) target = $region90
            $region89: #{relu_conv_bn.1} parent=85 // pred_region
              // Predicated region
              $region102: #{relu_conv_bn.1} parent=89 // pred_check
                _
              $region103: #{relu_conv_bn.1} parent=89 // pred_check_branch
                %1902 = sbr.rel (0) target = $region105
              $region104: #{relu_conv_bn.1} parent=89 // pred_region
                loop: start=0, step=1, limit=1
                $region106: #{relu_conv_bn.1} parent=104 // loop_pre_header
                  _
                $region107: #{relu_conv_bn.1} parent=104 // loop_header
                  %s1904 = sphi 0, %s1908
                  %p1905 = scmp.ge.s32.totalorder %s1904, 1
                  %s1909 = sphi %s1866, %s1866
                  %s1910 = sphi %s1871, %s1871
                $region108: #{relu_conv_bn.1} parent=104 // loop_header_branch
                  %1907 = sbr.rel (%p1905) target = $region112
                $region109: #{relu_conv_bn.1} parent=104 // loop_body
                  %v1911 = vld [vmem:[%s1909] sm:$0xff]
                  %1912 = vst [vmem:[%s1910] sm:$0xff] %v1911
                  %v1913 = vld [vmem:[%s1909 + $0x8] sm:$0xff]
                  %1914 = vst [vmem:[%s1910 + $0x10] sm:$0xff] %v1913
                  %v1915 = vld [vmem:[%s1909 + $0x10] sm:$0xff]
                  %1916 = vst [vmem:[%s1910 + $0x20] sm:$0xff] %v1915
                  %v1917 = vld [vmem:[%s1909 + $0x18] sm:$0xff]
                  %1918 = vst [vmem:[%s1910 + $0x30] sm:$0xff] %v1917
                  %v1919 = vld [vmem:[%s1909 + $0x20] sm:$0xff]
                  %1920 = vst [vmem:[%s1910 + $0x40] sm:$0xff] %v1919
                  %v1921 = vld [vmem:[%s1909 + $0x28] sm:$0xff]
                  %1922 = vst [vmem:[%s1910 + $0x50] sm:$0xff] %v1921
                  %v1923 = vld [vmem:[%s1909 + $0x30] sm:$0xff]
                  %1924 = vst [vmem:[%s1910 + $0x60] sm:$0xff] %v1923
                $region110: #{relu_conv_bn.1} parent=104 // loop_footer
                  %s1908 = sadd.s32 1, %s1904
                $region111: #{relu_conv_bn.1} parent=104 // loop_footer_branch
                  %1903 = sbr.rel target = $region107
                $region112: #{relu_conv_bn.1} parent=104 // loop_exit
                  _
              $region105: #{relu_conv_bn.1} parent=89 // pred_fallthru
                _
              // Predicated region
              $region113: #{relu_conv_bn.1} parent=89 // pred_check
                _
              $region114: #{relu_conv_bn.1} parent=89 // pred_check_branch
                %1926 = sbr.rel target = $region116
              $region115: #{relu_conv_bn.1} parent=89 // pred_region
                _
              $region116: #{relu_conv_bn.1} parent=89 // pred_fallthru
                _
            $region90: #{relu_conv_bn.1} parent=85 // pred_fallthru
              _
            // Predicated region
            $region91: #{relu_conv_bn.1} parent=85 // pred_check
              _
            $region92: #{relu_conv_bn.1} parent=85 // pred_check_branch
              %1877 = sbr.rel target = $region94
            $region93: #{relu_conv_bn.1} parent=85 // pred_region
              loop: start=0, step=1, limit=1
              $region95: #{relu_conv_bn.1} parent=93 // loop_pre_header
                _
              $region96: #{relu_conv_bn.1} parent=93 // loop_header
                %s1880 = sphi 0, %s1884
                %p1881 = scmp.ge.s32.totalorder %s1880, 1
                %s1885 = sphi %s1866, %s1866
                %s1886 = sphi %s1871, %s1871
              $region97: #{relu_conv_bn.1} parent=93 // loop_header_branch
                %1883 = sbr.rel (%p1881) target = $region101
              $region98: #{relu_conv_bn.1} parent=93 // loop_body
                %v1887 = vld [vmem:[%s1885] sm:$0xff]
                %1888 = vst [vmem:[%s1886] sm:$0xff] %v1887
                %v1889 = vld [vmem:[%s1885 + $0x8] sm:$0xff]
                %1890 = vst [vmem:[%s1886 + $0x10] sm:$0xff] %v1889
                %v1891 = vld [vmem:[%s1885 + $0x10] sm:$0xff]
                %1892 = vst [vmem:[%s1886 + $0x20] sm:$0xff] %v1891
                %v1893 = vld [vmem:[%s1885 + $0x18] sm:$0xff]
                %1894 = vst [vmem:[%s1886 + $0x30] sm:$0xff] %v1893
                %v1895 = vld [vmem:[%s1885 + $0x20] sm:$0xff]
                %1896 = vst [vmem:[%s1886 + $0x40] sm:$0xff] %v1895
                %v1897 = vld [vmem:[%s1885 + $0x28] sm:$0xff]
                %1898 = vst [vmem:[%s1886 + $0x50] sm:$0xff] %v1897
                %v1899 = vld [vmem:[%s1885 + $0x30] sm:$0xff]
                %1900 = vst [vmem:[%s1886 + $0x60] sm:$0xff] %v1899
              $region99: #{relu_conv_bn.1} parent=93 // loop_footer
                %s1884 = sadd.s32 1, %s1880
              $region100: #{relu_conv_bn.1} parent=93 // loop_footer_branch
                %1879 = sbr.rel target = $region96
              $region101: #{relu_conv_bn.1} parent=93 // loop_exit
                _
            $region94: #{relu_conv_bn.1} parent=85 // pred_fallthru
              _
          $region86: #{relu_conv_bn.1} parent=81 // pred_fallthru
            _
          %1927 = vnop
        $region82: #{relu_conv_bn.1} parent=73 // pred_fallthru
          _
      $region74: #{relu_conv_bn.1} parent=5 // pred_fallthru
        _
      %p1928 = scmp.le.s32.totalorder 2, %s11
      // Predicated region
      $region117: #{relu_conv_bn.1} parent=5 // pred_check
        %p1929 = pneg %p1928
      $region118: #{relu_conv_bn.1} parent=5 // pred_check_branch
        %1931 = sbr.rel (%p1929) target = $region120
      $region119: #{relu_conv_bn.1} parent=5 // pred_region
        %s1932 = ssub.s32 %s11, 2
        // Predicated region
        $region121: #{relu_conv_bn.1} parent=119 // pred_check
          %p1933 = pneg %p165
        $region122: #{relu_conv_bn.1} parent=119 // pred_check_branch
          %1935 = sbr.rel (%p1933) target = $region124
        $region123: #{relu_conv_bn.1} parent=119 // pred_region
          %s1936 = sand.u32 %s150, 1
          %s1937 = sand.u32 %s150, 1
          %s1938 = smul.addr %s1937, 56
          %s1939 = scalar_lea.vmem [#allocation3], %s1938
        $region124: #{relu_conv_bn.1} parent=119 // pred_fallthru
          _
      $region120: #{relu_conv_bn.1} parent=5 // pred_fallthru
        _
    $region6: #{relu_conv_bn.1} parent=1 // loop_footer
      %s15 = sadd.s32 1, %s11
    $region7: #{relu_conv_bn.1} parent=1 // loop_footer_branch
      %10 = sbr.rel target = $region3
    $region8: #{relu_conv_bn.1} parent=1 // loop_exit
      _

// kernel: relu_conv_bn.1
$region0: #{relu_conv_bn.1}
  #allocation0 [shape = 'u32[]', space=smem, size = 0x4, offset = 0x4, fixed_abs, tag = 'smem constant byte address 0x4 - core index']
  #allocation1 [shape = 'u32[144,128]{1,0:T(1,128)}', space=vmem, size = 0x12000, scoped, tag = 'internal scratch']
  %s0 = inlined_call_operand.vmem [shape: bf16[49,2304], index: 0, kind: input, shape index: {}]
  %s1 = inlined_call_operand.vmem [shape: s8[2304,256], index: 1, kind: input, shape index: {}]
  %s2 = inlined_call_operand.vmem [shape: f32[1,256], index: 2, kind: input, shape index: {}]
  %s3 = inlined_call_operand.vmem [shape: f32[1,256], index: 3, kind: input, shape index: {}]
  %s4 = inlined_call_operand.vmem [shape: f32[1,256], index: 4, kind: input, shape index: {}]
  %s5 = inlined_call_operand.vmem [shape: f32[49,256], index: 5, kind: output, shape index: {}]
  %s6 = sld [smem:[#allocation0]]
  $region125: #{relu_conv_bn.1} parent=0
    _
  %s8 = ssub.s32 1, %s6
  %s9 = scalar_select 0, %s8, %s6
  $region1: #{relu_conv_bn.1} parent=0
    #allocation2 [shape = 'u8[589824]{0}', space=vmem, size = 0x90000, scoped, tag = 'input window, operand 1']
    #allocation3 [shape = 'u8[57344]{0}', space=vmem, size = 0xe000, scoped, tag = 'output window, operand 0']
    loop: start=0, step=1, limit=4
    $region2: #{relu_conv_bn.1} parent=1 // loop_pre_header
      _
    $region3: #{relu_conv_bn.1} parent=1 // loop_header
      %s11 = sphi 0, %s15
      %p12 = scmp.ge.s32.totalorder %s11, 4
      %s19 = sphi 0, %s19
      %s21 = sphi 0, %s19
      %s22 = sphi 0, %s21
      %s36 = sphi 0, %s22
      %s42 = sphi 0, %s44
      %s45 = sphi 0, %s42
      %s46 = sphi 0, %s45
      %s62 = sphi 0, %s46
      %s68 = sphi 0, %s70
      %s71 = sphi 0, %s68
      %s72 = sphi 0, %s71
      %s88 = sphi 0, %s72
      %s94 = sphi 0, %s96
      %s97 = sphi 0, %s94
      %s98 = sphi 0, %s97
      %s114 = sphi 0, %s98
      %s120 = sphi 0, %s122
      %s123 = sphi 0, %s120
      %s124 = sphi 0, %s123
      %s140 = sphi 0, %s124
      %s146 = sphi 0, %s148
      %s149 = sphi 0, %s146
      %s150 = sphi 0, %s149
      %s166 = sphi 0, %s150
    $region4: #{relu_conv_bn.1} parent=1 // loop_header_branch
      %14 = sbr.rel (%p12) target = $region8
    $region5: #{relu_conv_bn.1} parent=1 // loop_body
      %s16 = ssub.s32 %s11, 1
      %s17 = ssub.s32 %s11, 2
      %s18 = sadd.s32 %s11, 1
      %s20 = sadd.s32 %s19, 1
      %p23 = scmp.eq.s32.totalorder %s11, 1
      %p24 = scmp.ne.s32.totalorder %s19, %s21
      %p25 = scmp.eq.s32.totalorder %s11, 0
      %p26 = por %p24, %p25
      %p27 = scmp.ne.s32.totalorder %s19, %s21
      %p28 = scmp.eq.s32.totalorder %s16, 1
      %p29 = por %p27, %p28
      %p30 = scmp.ne.s32.totalorder %s21, %s22
      %p31 = scmp.eq.s32.totalorder %s16, 0
      %p32 = por %p30, %p31
      %p33 = scmp.ne.s32.totalorder %s21, %s22
      %p34 = scmp.eq.s32.totalorder %s17, 1
      %p35 = por %p33, %p34
      %p37 = scmp.ne.s32.totalorder %s22, %s36
      %p38 = scmp.eq.s32.totalorder %s17, 0
      %p39 = por %p37, %p38
      %s40 = ssub.s32 %s11, %s18
      %p41 = scmp.eq.s32.totalorder %s40, 0
      %s43 = sadd.s32 %s42, 1
      %s44 = scalar_select %p41, %s42, %s43
      %p47 = pneg %p41
      %p48 = scmp.eq.s32.totalorder %s11, 1
      %p49 = por %p47, %p48
      %p50 = scmp.ne.s32.totalorder %s42, %s45
      %p51 = scmp.eq.s32.totalorder %s11, 0
      %p52 = por %p50, %p51
      %p53 = scmp.ne.s32.totalorder %s42, %s45
      %p54 = scmp.eq.s32.totalorder %s16, 1
      %p55 = por %p53, %p54
      %p56 = scmp.ne.s32.totalorder %s45, %s46
      %p57 = scmp.eq.s32.totalorder %s16, 0
      %p58 = por %p56, %p57
      %p59 = scmp.ne.s32.totalorder %s45, %s46
      %p60 = scmp.eq.s32.totalorder %s17, 1
      %p61 = por %p59, %p60
      %p63 = scmp.ne.s32.totalorder %s46, %s62
      %p64 = scmp.eq.s32.totalorder %s17, 0
      %p65 = por %p63, %p64
      %s66 = ssub.s32 %s11, %s18
      %p67 = scmp.eq.s32.totalorder %s66, 0
      %s69 = sadd.s32 %s68, 1
      %s70 = scalar_select %p67, %s68, %s69
      %p73 = pneg %p67
      %p74 = scmp.eq.s32.totalorder %s11, 1
      %p75 = por %p73, %p74
      %p76 = scmp.ne.s32.totalorder %s68, %s71
      %p77 = scmp.eq.s32.totalorder %s11, 0
      %p78 = por %p76, %p77
      %p79 = scmp.ne.s32.totalorder %s68, %s71
      %p80 = scmp.eq.s32.totalorder %s16, 1
      %p81 = por %p79, %p80
      %p82 = scmp.ne.s32.totalorder %s71, %s72
      %p83 = scmp.eq.s32.totalorder %s16, 0
      %p84 = por %p82, %p83
      %p85 = scmp.ne.s32.totalorder %s71, %s72
      %p86 = scmp.eq.s32.totalorder %s17, 1
      %p87 = por %p85, %p86
      %p89 = scmp.ne.s32.totalorder %s72, %s88
      %p90 = scmp.eq.s32.totalorder %s17, 0
      %p91 = por %p89, %p90
      %s92 = ssub.s32 %s11, %s18
      %p93 = scmp.eq.s32.totalorder %s92, 0
      %s95 = sadd.s32 %s94, 1
      %s96 = scalar_select %p93, %s94, %s95
      %p99 = pneg %p93
      %p100 = scmp.eq.s32.totalorder %s11, 1
      %p101 = por %p99, %p100
      %p102 = scmp.ne.s32.totalorder %s94, %s97
      %p103 = scmp.eq.s32.totalorder %s11, 0
      %p104 = por %p102, %p103
      %p105 = scmp.ne.s32.totalorder %s94, %s97
      %p106 = scmp.eq.s32.totalorder %s16, 1
      %p107 = por %p105, %p106
      %p108 = scmp.ne.s32.totalorder %s97, %s98
      %p109 = scmp.eq.s32.totalorder %s16, 0
      %p110 = por %p108, %p109
      %p111 = scmp.ne.s32.totalorder %s97, %s98
      %p112 = scmp.eq.s32.totalorder %s17, 1
      %p113 = por %p111, %p112
      %p115 = scmp.ne.s32.totalorder %s98, %s114
      %p116 = scmp.eq.s32.totalorder %s17, 0
      %p117 = por %p115, %p116
      %s118 = ssub.s32 %s11, %s18
      %p119 = scmp.eq.s32.totalorder %s118, 0
      %s121 = sadd.s32 %s120, 1
      %s122 = scalar_select %p119, %s120, %s121
      %p125 = pneg %p119
      %p126 = scmp.eq.s32.totalorder %s11, 1
      %p127 = por %p125, %p126
      %p128 = scmp.ne.s32.totalorder %s120, %s123
      %p129 = scmp.eq.s32.totalorder %s11, 0
      %p130 = por %p128, %p129
      %p131 = scmp.ne.s32.totalorder %s120, %s123
      %p132 = scmp.eq.s32.totalorder %s16, 1
      %p133 = por %p131, %p132
      %p134 = scmp.ne.s32.totalorder %s123, %s124
      %p135 = scmp.eq.s32.totalorder %s16, 0
      %p136 = por %p134, %p135
      %p137 = scmp.ne.s32.totalorder %s123, %s124
      %p138 = scmp.eq.s32.totalorder %s17, 1
      %p139 = por %p137, %p138
      %p141 = scmp.ne.s32.totalorder %s124, %s140
      %p142 = scmp.eq.s32.totalorder %s17, 0
      %p143 = por %p141, %p142
      %s144 = ssub.s32 %s11, %s18
      %p145 = scmp.eq.s32.totalorder %s144, 0
      %s147 = sadd.s32 %s146, 1
      %s148 = scalar_select %p145, %s146, %s147
      %p151 = pneg %p145
      %p152 = scmp.eq.s32.totalorder %s11, 1
      %p153 = por %p151, %p152
      %p154 = scmp.ne.s32.totalorder %s146, %s149
      %p155 = scmp.eq.s32.totalorder %s11, 0
      %p156 = por %p154, %p155
      %p157 = scmp.ne.s32.totalorder %s146, %s149
      %p158 = scmp.eq.s32.totalorder %s16, 1
      %p159 = por %p157, %p158
      %p160 = scmp.ne.s32.totalorder %s149, %s150
      %p161 = scmp.eq.s32.totalorder %s16, 0
      %p162 = por %p160, %p161
      %p163 = scmp.ne.s32.totalorder %s149, %s150
      %p164 = scmp.eq.s32.totalorder %s17, 1
      %p165 = por %p163, %p164
      %p167 = scmp.ne.s32.totalorder %s150, %s166
      %p168 = scmp.eq.s32.totalorder %s17, 0
      %p169 = por %p167, %p168
      %p170 = scmp.le.s32.totalorder 1, %s11
      %p171 = scmp.lt.s32.totalorder %s11, 3
      %p172 = pnand %p170, %p171
      %p173 = pneg %p172
      // Predicated region
      $region9: #{relu_conv_bn.1} parent=5 // pred_check
        _
      $region10: #{relu_conv_bn.1} parent=5 // pred_check_branch
        %175 = sbr.rel (%p172) target = $region12
      $region11: #{relu_conv_bn.1} parent=5 // pred_region
        %s176 = ssub.s32 %s11, 1
        // Predicated region
        $region13: #{relu_conv_bn.1} parent=11 // pred_check
          %p177 = pneg %p32
        $region14: #{relu_conv_bn.1} parent=11 // pred_check_branch
          %179 = sbr.rel (%p177) target = $region16
        $region15: #{relu_conv_bn.1} parent=11 // pred_region
          _
        $region16: #{relu_conv_bn.1} parent=11 // pred_fallthru
          _
      $region12: #{relu_conv_bn.1} parent=5 // pred_fallthru
        _
      %p180 = scmp.lt.s32.totalorder %s11, 2
      // Predicated region
      $region17: #{relu_conv_bn.1} parent=5 // pred_check
        %p181 = pneg %p180
      $region18: #{relu_conv_bn.1} parent=5 // pred_check_branch
        %183 = sbr.rel (%p181) target = $region20
      $region19: #{relu_conv_bn.1} parent=5 // pred_region
        // Predicated region
        $region21: #{relu_conv_bn.1} parent=19 // pred_check
          %p184 = pneg %p52
        $region22: #{relu_conv_bn.1} parent=19 // pred_check_branch
          %186 = sbr.rel (%p184) target = $region24
        $region23: #{relu_conv_bn.1} parent=19 // pred_region
          %s187 = sand.u32 %s42, 1
          %s188 = sand.u32 %s42, 1
          %s189 = smul.addr %s188, 576
          %s190 = scalar_lea.vmem [#allocation2], %s189
          %s191 = smul.addr %s11, 8
          %s192 = scalar_lea.vmem %s1, %s191
          // Predicated region
          $region25: #{relu_conv_bn.1} parent=23 // pred_check
            _
          $region26: #{relu_conv_bn.1} parent=23 // pred_check_branch
            %194 = sbr.rel (0) target = $region28
          $region27: #{relu_conv_bn.1} parent=23 // pred_region
            // Predicated region
            $region29: #{relu_conv_bn.1} parent=27 // pred_check
              _
            $region30: #{relu_conv_bn.1} parent=27 // pred_check_branch
              %196 = sbr.rel (0) target = $region32
            $region31: #{relu_conv_bn.1} parent=27 // pred_region
              // Predicated region
              $region44: #{relu_conv_bn.1} parent=31 // pred_check
                _
              $region45: #{relu_conv_bn.1} parent=31 // pred_check_branch
                %353 = sbr.rel (0) target = $region47
              $region46: #{relu_conv_bn.1} parent=31 // pred_region
                loop: start=0, step=1, limit=1
                $region48: #{relu_conv_bn.1} parent=46 // loop_pre_header
                  _
                $region49: #{relu_conv_bn.1} parent=46 // loop_header
                  %s355 = sphi 0, %s359
                  %p356 = scmp.ge.s32.totalorder %s355, 1
                  %s360 = sphi %s192, %s192
                  %s361 = sphi %s190, %s190
                $region50: #{relu_conv_bn.1} parent=46 // loop_header_branch
                  %358 = sbr.rel (%p356) target = $region54
                $region51: #{relu_conv_bn.1} parent=46 // loop_body
                  %v362 = vld [vmem:[%s360] sm:$0xff]
                  %363 = vst [vmem:[%s361] sm:$0xff] %v362
                  %v364 = vld [vmem:[%s360 + $0x10] sm:$0xff]
                  %365 = vst [vmem:[%s361 + $0x8] sm:$0xff] %v364
                  %v366 = vld [vmem:[%s360 + $0x20] sm:$0xff]
                  %367 = vst [vmem:[%s361 + $0x10] sm:$0xff] %v366
                  %v368 = vld [vmem:[%s360 + $0x30] sm:$0xff]
                  %369 = vst [vmem:[%s361 + $0x18] sm:$0xff] %v368
                  %v370 = vld [vmem:[%s360 + $0x40] sm:$0xff]
                  %371 = vst [vmem:[%s361 + $0x20] sm:$0xff] %v370
                  %v372 = vld [vmem:[%s360 + $0x50] sm:$0xff]
                  %373 = vst [vmem:[%s361 + $0x28] sm:$0xff] %v372
                  %v374 = vld [vmem:[%s360 + $0x60] sm:$0xff]
                  %375 = vst [vmem:[%s361 + $0x30] sm:$0xff] %v374
                  %v376 = vld [vmem:[%s360 + $0x70] sm:$0xff]
                  %377 = vst [vmem:[%s361 + $0x38] sm:$0xff] %v376
                  %v378 = vld [vmem:[%s360 + $0x80] sm:$0xff]
                  %379 = vst [vmem:[%s361 + $0x40] sm:$0xff] %v378
                  %v380 = vld [vmem:[%s360 + $0x90] sm:$0xff]
                  %381 = vst [vmem:[%s361 + $0x48] sm:$0xff] %v380
                  %v382 = vld [vmem:[%s360 + $0xa0] sm:$0xff]
                  %383 = vst [vmem:[%s361 + $0x50] sm:$0xff] %v382
                  %v384 = vld [vmem:[%s360 + $0xb0] sm:$0xff]
                  %385 = vst [vmem:[%s361 + $0x58] sm:$0xff] %v384
                  %v386 = vld [vmem:[%s360 + $0xc0] sm:$0xff]
                  %387 = vst [vmem:[%s361 + $0x60] sm:$0xff] %v386
                  %v388 = vld [vmem:[%s360 + $0xd0] sm:$0xff]
                  %389 = vst [vmem:[%s361 + $0x68] sm:$0xff] %v388
                  %v390 = vld [vmem:[%s360 + $0xe0] sm:$0xff]
                  %391 = vst [vmem:[%s361 + $0x70] sm:$0xff] %v390
                  %v392 = vld [vmem:[%s360 + $0xf0] sm:$0xff]
                  %393 = vst [vmem:[%s361 + $0x78] sm:$0xff] %v392
                  %v394 = vld [vmem:[%s360 + $0x100] sm:$0xff]
                  %395 = vst [vmem:[%s361 + $0x80] sm:$0xff] %v394
                  %v396 = vld [vmem:[%s360 + $0x110] sm:$0xff]
                  %397 = vst [vmem:[%s361 + $0x88] sm:$0xff] %v396
                  %v398 = vld [vmem:[%s360 + $0x120] sm:$0xff]
                  %399 = vst [vmem:[%s361 + $0x90] sm:$0xff] %v398
                  %v400 = vld [vmem:[%s360 + $0x130] sm:$0xff]
                  %401 = vst [vmem:[%s361 + $0x98] sm:$0xff] %v400
                  %v402 = vld [vmem:[%s360 + $0x140] sm:$0xff]
                  %403 = vst [vmem:[%s361 + $0xa0] sm:$0xff] %v402
                  %v404 = vld [vmem:[%s360 + $0x150] sm:$0xff]
                  %405 = vst [vmem:[%s361 + $0xa8] sm:$0xff] %v404
                  %v406 = vld [vmem:[%s360 + $0x160] sm:$0xff]
                  %407 = vst [vmem:[%s361 + $0xb0] sm:$0xff] %v406
                  %v408 = vld [vmem:[%s360 + $0x170] sm:$0xff]
                  %409 = vst [vmem:[%s361 + $0xb8] sm:$0xff] %v408
                  %v410 = vld [vmem:[%s360 + $0x180] sm:$0xff]
                  %411 = vst [vmem:[%s361 + $0xc0] sm:$0xff] %v410
                  %v412 = vld [vmem:[%s360 + $0x190] sm:$0xff]
                  %413 = vst [vmem:[%s361 + $0xc8] sm:$0xff] %v412
                  %v414 = vld [vmem:[%s360 + $0x1a0] sm:$0xff]
                  %415 = vst [vmem:[%s361 + $0xd0] sm:$0xff] %v414
                  %v416 = vld [vmem:[%s360 + $0x1b0] sm:$0xff]
                  %417 = vst [vmem:[%s361 + $0xd8] sm:$0xff] %v416
                  %v418 = vld [vmem:[%s360 + $0x1c0] sm:$0xff]
                  %419 = vst [vmem:[%s361 + $0xe0] sm:$0xff] %v418
                  %v420 = vld [vmem:[%s360 + $0x1d0] sm:$0xff]
                  %421 = vst [vmem:[%s361 + $0xe8] sm:$0xff] %v420
                  %v422 = vld [vmem:[%s360 + $0x1e0] sm:$0xff]
                  %423 = vst [vmem:[%s361 + $0xf0] sm:$0xff] %v422
                  %v424 = vld [vmem:[%s360 + $0x1f0] sm:$0xff]
                  %425 = vst [vmem:[%s361 + $0xf8] sm:$0xff] %v424
                  %v426 = vld [vmem:[%s360 + $0x200] sm:$0xff]
                  %427 = vst [vmem:[%s361 + $0x100] sm:$0xff] %v426
                  %v428 = vld [vmem:[%s360 + $0x210] sm:$0xff]
                  %429 = vst [vmem:[%s361 + $0x108] sm:$0xff] %v428
                  %v430 = vld [vmem:[%s360 + $0x220] sm:$0xff]
                  %431 = vst [vmem:[%s361 + $0x110] sm:$0xff] %v430
                  %v432 = vld [vmem:[%s360 + $0x230] sm:$0xff]
                  %433 = vst [vmem:[%s361 + $0x118] sm:$0xff] %v432
                  %v434 = vld [vmem:[%s360 + $0x240] sm:$0xff]
                  %435 = vst [vmem:[%s361 + $0x120] sm:$0xff] %v434
                  %v436 = vld [vmem:[%s360 + $0x250] sm:$0xff]
                  %437 = vst [vmem:[%s361 + $0x128] sm:$0xff] %v436
                  %v438 = vld [vmem:[%s360 + $0x260] sm:$0xff]
                  %439 = vst [vmem:[%s361 + $0x130] sm:$0xff] %v438
                  %v440 = vld [vmem:[%s360 + $0x270] sm:$0xff]
                  %441 = vst [vmem:[%s361 + $0x138] sm:$0xff] %v440
                  %v442 = vld [vmem:[%s360 + $0x280] sm:$0xff]
                  %443 = vst [vmem:[%s361 + $0x140] sm:$0xff] %v442
                  %v444 = vld [vmem:[%s360 + $0x290] sm:$0xff]
                  %445 = vst [vmem:[%s361 + $0x148] sm:$0xff] %v444
                  %v446 = vld [vmem:[%s360 + $0x2a0] sm:$0xff]
                  %447 = vst [vmem:[%s361 + $0x150] sm:$0xff] %v446
                  %v448 = vld [vmem:[%s360 + $0x2b0] sm:$0xff]
                  %449 = vst [vmem:[%s361 + $0x158] sm:$0xff] %v448
                  %v450 = vld [vmem:[%s360 + $0x2c0] sm:$0xff]
                  %451 = vst [vmem:[%s361 + $0x160] sm:$0xff] %v450
                  %v452 = vld [vmem:[%s360 + $0x2d0] sm:$0xff]
                  %453 = vst [vmem:[%s361 + $0x168] sm:$0xff] %v452
                  %v454 = vld [vmem:[%s360 + $0x2e0] sm:$0xff]
                  %455 = vst [vmem:[%s361 + $0x170] sm:$0xff] %v454
                  %v456 = vld [vmem:[%s360 + $0x2f0] sm:$0xff]
                  %457 = vst [vmem:[%s361 + $0x178] sm:$0xff] %v456
                  %v458 = vld [vmem:[%s360 + $0x300] sm:$0xff]
                  %459 = vst [vmem:[%s361 + $0x180] sm:$0xff] %v458
                  %v460 = vld [vmem:[%s360 + $0x310] sm:$0xff]
                  %461 = vst [vmem:[%s361 + $0x188] sm:$0xff] %v460
                  %v462 = vld [vmem:[%s360 + $0x320] sm:$0xff]
                  %463 = vst [vmem:[%s361 + $0x190] sm:$0xff] %v462
                  %v464 = vld [vmem:[%s360 + $0x330] sm:$0xff]
                  %465 = vst [vmem:[%s361 + $0x198] sm:$0xff] %v464
                  %v466 = vld [vmem:[%s360 + $0x340] sm:$0xff]
                  %467 = vst [vmem:[%s361 + $0x1a0] sm:$0xff] %v466
                  %v468 = vld [vmem:[%s360 + $0x350] sm:$0xff]
                  %469 = vst [vmem:[%s361 + $0x1a8] sm:$0xff] %v468
                  %v470 = vld [vmem:[%s360 + $0x360] sm:$0xff]
                  %471 = vst [vmem:[%s361 + $0x1b0] sm:$0xff] %v470
                  %v472 = vld [vmem:[%s360 + $0x370] sm:$0xff]
                  %473 = vst [vmem:[%s361 + $0x1b8] sm:$0xff] %v472
                  %v474 = vld [vmem:[%s360 + $0x380] sm:$0xff]
                  %475 = vst [vmem:[%s361 + $0x1c0] sm:$0xff] %v474
                  %v476 = vld [vmem:[%s360 + $0x390] sm:$0xff]
                  %477 = vst [vmem:[%s361 + $0x1c8] sm:$0xff] %v476
                  %v478 = vld [vmem:[%s360 + $0x3a0] sm:$0xff]
                  %479 = vst [vmem:[%s361 + $0x1d0] sm:$0xff] %v478
                  %v480 = vld [vmem:[%s360 + $0x3b0] sm:$0xff]
                  %481 = vst [vmem:[%s361 + $0x1d8] sm:$0xff] %v480
                  %v482 = vld [vmem:[%s360 + $0x3c0] sm:$0xff]
                  %483 = vst [vmem:[%s361 + $0x1e0] sm:$0xff] %v482
                  %v484 = vld [vmem:[%s360 + $0x3d0] sm:$0xff]
                  %485 = vst [vmem:[%s361 + $0x1e8] sm:$0xff] %v484
                  %v486 = vld [vmem:[%s360 + $0x3e0] sm:$0xff]
                  %487 = vst [vmem:[%s361 + $0x1f0] sm:$0xff] %v486
                  %v488 = vld [vmem:[%s360 + $0x3f0] sm:$0xff]
                  %489 = vst [vmem:[%s361 + $0x1f8] sm:$0xff] %v488
                  %v490 = vld [vmem:[%s360 + $0x400] sm:$0xff]
                  %491 = vst [vmem:[%s361 + $0x200] sm:$0xff] %v490
                  %v492 = vld [vmem:[%s360 + $0x410] sm:$0xff]
                  %493 = vst [vmem:[%s361 + $0x208] sm:$0xff] %v492
                  %v494 = vld [vmem:[%s360 + $0x420] sm:$0xff]
                  %495 = vst [vmem:[%s361 + $0x210] sm:$0xff] %v494
                  %v496 = vld [vmem:[%s360 + $0x430] sm:$0xff]
                  %497 = vst [vmem:[%s361 + $0x218] sm:$0xff] %v496
                  %v498 = vld [vmem:[%s360 + $0x440] sm:$0xff]
                  %499 = vst [vmem:[%s361 + $0x220] sm:$0xff] %v498
                  %v500 = vld [vmem:[%s360 + $0x450] sm:$0xff]
                  %501 = vst [vmem:[%s361 + $0x228] sm:$0xff] %v500
                  %v502 = vld [vmem:[%s360 + $0x460] sm:$0xff]
                  %503 = vst [vmem:[%s361 + $0x230] sm:$0xff] %v502
                  %v504 = vld [vmem:[%s360 + $0x470] sm:$0xff]
                  %505 = vst [vmem:[%s361 + $0x238] sm:$0xff] %v504
                $region52: #{relu_conv_bn.1} parent=46 // loop_footer
                  %s359 = sadd.s32 1, %s355
                $region53: #{relu_conv_bn.1} parent=46 // loop_footer_branch
                  %354 = sbr.rel target = $region49
                $region54: #{relu_conv_bn.1} parent=46 // loop_exit
                  _
              $region47: #{relu_conv_bn.1} parent=31 // pred_fallthru
                _
              // Predicated region
              $region55: #{relu_conv_bn.1} parent=31 // pred_check
                _
              $region56: #{relu_conv_bn.1} parent=31 // pred_check_branch
                %507 = sbr.rel target = $region58
              $region57: #{relu_conv_bn.1} parent=31 // pred_region
                _
              $region58: #{relu_conv_bn.1} parent=31 // pred_fallthru
                _
            $region32: #{relu_conv_bn.1} parent=27 // pred_fallthru
              _
            // Predicated region
            $region33: #{relu_conv_bn.1} parent=27 // pred_check
              _
            $region34: #{relu_conv_bn.1} parent=27 // pred_check_branch
              %198 = sbr.rel target = $region36
            $region35: #{relu_conv_bn.1} parent=27 // pred_region
              loop: start=0, step=1, limit=1
              $region37: #{relu_conv_bn.1} parent=35 // loop_pre_header
                _
              $region38: #{relu_conv_bn.1} parent=35 // loop_header
                %s201 = sphi 0, %s205
                %p202 = scmp.ge.s32.totalorder %s201, 1
                %s206 = sphi %s192, %s192
                %s207 = sphi %s190, %s190
              $region39: #{relu_conv_bn.1} parent=35 // loop_header_branch
                %204 = sbr.rel (%p202) target = $region43
              $region40: #{relu_conv_bn.1} parent=35 // loop_body
                %v208 = vld [vmem:[%s206] sm:$0xff]
                %209 = vst [vmem:[%s207] sm:$0xff] %v208
                %v210 = vld [vmem:[%s206 + $0x10] sm:$0xff]
                %211 = vst [vmem:[%s207 + $0x8] sm:$0xff] %v210
                %v212 = vld [vmem:[%s206 + $0x20] sm:$0xff]
                %213 = vst [vmem:[%s207 + $0x10] sm:$0xff] %v212
                %v214 = vld [vmem:[%s206 + $0x30] sm:$0xff]
                %215 = vst [vmem:[%s207 + $0x18] sm:$0xff] %v214
                %v216 = vld [vmem:[%s206 + $0x40] sm:$0xff]
                %217 = vst [vmem:[%s207 + $0x20] sm:$0xff] %v216
                %v218 = vld [vmem:[%s206 + $0x50] sm:$0xff]
                %219 = vst [vmem:[%s207 + $0x28] sm:$0xff] %v218
                %v220 = vld [vmem:[%s206 + $0x60] sm:$0xff]
                %221 = vst [vmem:[%s207 + $0x30] sm:$0xff] %v220
                %v222 = vld [vmem:[%s206 + $0x70] sm:$0xff]
                %223 = vst [vmem:[%s207 + $0x38] sm:$0xff] %v222
                %v224 = vld [vmem:[%s206 + $0x80] sm:$0xff]
                %225 = vst [vmem:[%s207 + $0x40] sm:$0xff] %v224
                %v226 = vld [vmem:[%s206 + $0x90] sm:$0xff]
                %227 = vst [vmem:[%s207 + $0x48] sm:$0xff] %v226
                %v228 = vld [vmem:[%s206 + $0xa0] sm:$0xff]
                %229 = vst [vmem:[%s207 + $0x50] sm:$0xff] %v228
                %v230 = vld [vmem:[%s206 + $0xb0] sm:$0xff]
                %231 = vst [vmem:[%s207 + $0x58] sm:$0xff] %v230
                %v232 = vld [vmem:[%s206 + $0xc0] sm:$0xff]
                %233 = vst [vmem:[%s207 + $0x60] sm:$0xff] %v232
                %v234 = vld [vmem:[%s206 + $0xd0] sm:$0xff]
                %235 = vst [vmem:[%s207 + $0x68] sm:$0xff] %v234
                %v236 = vld [vmem:[%s206 + $0xe0] sm:$0xff]
                %237 = vst [vmem:[%s207 + $0x70] sm:$0xff] %v236
                %v238 = vld [vmem:[%s206 + $0xf0] sm:$0xff]
                %239 = vst [vmem:[%s207 + $0x78] sm:$0xff] %v238
                %v240 = vld [vmem:[%s206 + $0x100] sm:$0xff]
                %241 = vst [vmem:[%s207 + $0x80] sm:$0xff] %v240
                %v242 = vld [vmem:[%s206 + $0x110] sm:$0xff]
                %243 = vst [vmem:[%s207 + $0x88] sm:$0xff] %v242
                %v244 = vld [vmem:[%s206 + $0x120] sm:$0xff]
                %245 = vst [vmem:[%s207 + $0x90] sm:$0xff] %v244
                %v246 = vld [vmem:[%s206 + $0x130] sm:$0xff]
                %247 = vst [vmem:[%s207 + $0x98] sm:$0xff] %v246
                %v248 = vld [vmem:[%s206 + $0x140] sm:$0xff]
                %249 = vst [vmem:[%s207 + $0xa0] sm:$0xff] %v248
                %v250 = vld [vmem:[%s206 + $0x150] sm:$0xff]
                %251 = vst [vmem:[%s207 + $0xa8] sm:$0xff] %v250
                %v252 = vld [vmem:[%s206 + $0x160] sm:$0xff]
                %253 = vst [vmem:[%s207 + $0xb0] sm:$0xff] %v252
                %v254 = vld [vmem:[%s206 + $0x170] sm:$0xff]
                %255 = vst [vmem:[%s207 + $0xb8] sm:$0xff] %v254
                %v256 = vld [vmem:[%s206 + $0x180] sm:$0xff]
                %257 = vst [vmem:[%s207 + $0xc0] sm:$0xff] %v256
                %v258 = vld [vmem:[%s206 + $0x190] sm:$0xff]
                %259 = vst [vmem:[%s207 + $0xc8] sm:$0xff] %v258
                %v260 = vld [vmem:[%s206 + $0x1a0] sm:$0xff]
                %261 = vst [vmem:[%s207 + $0xd0] sm:$0xff] %v260
                %v262 = vld [vmem:[%s206 + $0x1b0] sm:$0xff]
                %263 = vst [vmem:[%s207 + $0xd8] sm:$0xff] %v262
                %v264 = vld [vmem:[%s206 + $0x1c0] sm:$0xff]
                %265 = vst [vmem:[%s207 + $0xe0] sm:$0xff] %v264
                %v266 = vld [vmem:[%s206 + $0x1d0] sm:$0xff]
                %267 = vst [vmem:[%s207 + $0xe8] sm:$0xff] %v266
                %v268 = vld [vmem:[%s206 + $0x1e0] sm:$0xff]
                %269 = vst [vmem:[%s207 + $0xf0] sm:$0xff] %v268
                %v270 = vld [vmem:[%s206 + $0x1f0] sm:$0xff]
                %271 = vst [vmem:[%s207 + $0xf8] sm:$0xff] %v270
                %v272 = vld [vmem:[%s206 + $0x200] sm:$0xff]
                %273 = vst [vmem:[%s207 + $0x100] sm:$0xff] %v272
                %v274 = vld [vmem:[%s206 + $0x210] sm:$0xff]
                %275 = vst [vmem:[%s207 + $0x108] sm:$0xff] %v274
                %v276 = vld [vmem:[%s206 + $0x220] sm:$0xff]
                %277 = vst [vmem:[%s207 + $0x110] sm:$0xff] %v276
                %v278 = vld [vmem:[%s206 + $0x230] sm:$0xff]
                %279 = vst [vmem:[%s207 + $0x118] sm:$0xff] %v278
                %v280 = vld [vmem:[%s206 + $0x240] sm:$0xff]
                %281 = vst [vmem:[%s207 + $0x120] sm:$0xff] %v280
                %v282 = vld [vmem:[%s206 + $0x250] sm:$0xff]
                %283 = vst [vmem:[%s207 + $0x128] sm:$0xff] %v282
                %v284 = vld [vmem:[%s206 + $0x260] sm:$0xff]
                %285 = vst [vmem:[%s207 + $0x130] sm:$0xff] %v284
                %v286 = vld [vmem:[%s206 + $0x270] sm:$0xff]
                %287 = vst [vmem:[%s207 + $0x138] sm:$0xff] %v286
                %v288 = vld [vmem:[%s206 + $0x280] sm:$0xff]
                %289 = vst [vmem:[%s207 + $0x140] sm:$0xff] %v288
                %v290 = vld [vmem:[%s206 + $0x290] sm:$0xff]
                %291 = vst [vmem:[%s207 + $0x148] sm:$0xff] %v290
                %v292 = vld [vmem:[%s206 + $0x2a0] sm:$0xff]
                %293 = vst [vmem:[%s207 + $0x150] sm:$0xff] %v292
                %v294 = vld [vmem:[%s206 + $0x2b0] sm:$0xff]
                %295 = vst [vmem:[%s207 + $0x158] sm:$0xff] %v294
                %v296 = vld [vmem:[%s206 + $0x2c0] sm:$0xff]
                %297 = vst [vmem:[%s207 + $0x160] sm:$0xff] %v296
                %v298 = vld [vmem:[%s206 + $0x2d0] sm:$0xff]
                %299 = vst [vmem:[%s207 + $0x168] sm:$0xff] %v298
                %v300 = vld [vmem:[%s206 + $0x2e0] sm:$0xff]
                %301 = vst [vmem:[%s207 + $0x170] sm:$0xff] %v300
                %v302 = vld [vmem:[%s206 + $0x2f0] sm:$0xff]
                %303 = vst [vmem:[%s207 + $0x178] sm:$0xff] %v302
                %v304 = vld [vmem:[%s206 + $0x300] sm:$0xff]
                %305 = vst [vmem:[%s207 + $0x180] sm:$0xff] %v304
                %v306 = vld [vmem:[%s206 + $0x310] sm:$0xff]
                %307 = vst [vmem:[%s207 + $0x188] sm:$0xff] %v306
                %v308 = vld [vmem:[%s206 + $0x320] sm:$0xff]
                %309 = vst [vmem:[%s207 + $0x190] sm:$0xff] %v308
                %v310 = vld [vmem:[%s206 + $0x330] sm:$0xff]
                %311 = vst [vmem:[%s207 + $0x198] sm:$0xff] %v310
                %v312 = vld [vmem:[%s206 + $0x340] sm:$0xff]
                %313 = vst [vmem:[%s207 + $0x1a0] sm:$0xff] %v312
                %v314 = vld [vmem:[%s206 + $0x350] sm:$0xff]
                %315 = vst [vmem:[%s207 + $0x1a8] sm:$0xff] %v314
                %v316 = vld [vmem:[%s206 + $0x360] sm:$0xff]
                %317 = vst [vmem:[%s207 + $0x1b0] sm:$0xff] %v316
                %v318 = vld [vmem:[%s206 + $0x370] sm:$0xff]
                %319 = vst [vmem:[%s207 + $0x1b8] sm:$0xff] %v318
                %v320 = vld [vmem:[%s206 + $0x380] sm:$0xff]
                %321 = vst [vmem:[%s207 + $0x1c0] sm:$0xff] %v320
                %v322 = vld [vmem:[%s206 + $0x390] sm:$0xff]
                %323 = vst [vmem:[%s207 + $0x1c8] sm:$0xff] %v322
                %v324 = vld [vmem:[%s206 + $0x3a0] sm:$0xff]
                %325 = vst [vmem:[%s207 + $0x1d0] sm:$0xff] %v324
                %v326 = vld [vmem:[%s206 + $0x3b0] sm:$0xff]
                %327 = vst [vmem:[%s207 + $0x1d8] sm:$0xff] %v326
                %v328 = vld [vmem:[%s206 + $0x3c0] sm:$0xff]
                %329 = vst [vmem:[%s207 + $0x1e0] sm:$0xff] %v328
                %v330 = vld [vmem:[%s206 + $0x3d0] sm:$0xff]
                %331 = vst [vmem:[%s207 + $0x1e8] sm:$0xff] %v330
                %v332 = vld [vmem:[%s206 + $0x3e0] sm:$0xff]
                %333 = vst [vmem:[%s207 + $0x1f0] sm:$0xff] %v332
                %v334 = vld [vmem:[%s206 + $0x3f0] sm:$0xff]
                %335 = vst [vmem:[%s207 + $0x1f8] sm:$0xff] %v334
                %v336 = vld [vmem:[%s206 + $0x400] sm:$0xff]
                %337 = vst [vmem:[%s207 + $0x200] sm:$0xff] %v336
                %v338 = vld [vmem:[%s206 + $0x410] sm:$0xff]
                %339 = vst [vmem:[%s207 + $0x208] sm:$0xff] %v338
                %v340 = vld [vmem:[%s206 + $0x420] sm:$0xff]
                %341 = vst [vmem:[%s207 + $0x210] sm:$0xff] %v340
                %v342 = vld [vmem:[%s206 + $0x430] sm:$0xff]
                %343 = vst [vmem:[%s207 + $0x218] sm:$0xff] %v342
                %v344 = vld [vmem:[%s206 + $0x440] sm:$0xff]
                %345 = vst [vmem:[%s207 + $0x220] sm:$0xff] %v344
                %v346 = vld [vmem:[%s206 + $0x450] sm:$0xff]
                %347 = vst [vmem:[%s207 + $0x228] sm:$0xff] %v346
                %v348 = vld [vmem:[%s206 + $0x460] sm:$0xff]
                %349 = vst [vmem:[%s207 + $0x230] sm:$0xff] %v348
                %v350 = vld [vmem:[%s206 + $0x470] sm:$0xff]
                %351 = vst [vmem:[%s207 + $0x238] sm:$0xff] %v350
              $region41: #{relu_conv_bn.1} parent=35 // loop_footer
                %s205 = sadd.s32 1, %s201
              $region42: #{relu_conv_bn.1} parent=35 // loop_footer_branch
                %200 = sbr.rel target = $region38
              $region43: #{relu_conv_bn.1} parent=35 // loop_exit
                _
            $region36: #{relu_conv_bn.1} parent=27 // pred_fallthru
              _
          $region28: #{relu_conv_bn.1} parent=23 // pred_fallthru
            _
          %508 = vnop
        $region24: #{relu_conv_bn.1} parent=19 // pred_fallthru
          _
        // Predicated region
        $region59: #{relu_conv_bn.1} parent=19 // pred_check
          %p509 = pneg %p78
        $region60: #{relu_conv_bn.1} parent=19 // pred_check_branch
          %511 = sbr.rel (%p509) target = $region62
        $region61: #{relu_conv_bn.1} parent=19 // pred_region
          %p512 = scmp.lt.s32.totalorder %s11, 1
          %s513 = scalar_select %p512, %s11, 1
          %s514 = scalar_lea.vmem %s2, %s513
        $region62: #{relu_conv_bn.1} parent=19 // pred_fallthru
          _
        // Predicated region
        $region63: #{relu_conv_bn.1} parent=19 // pred_check
          %p515 = pneg %p104
        $region64: #{relu_conv_bn.1} parent=19 // pred_check_branch
          %517 = sbr.rel (%p515) target = $region66
        $region65: #{relu_conv_bn.1} parent=19 // pred_region
          %p518 = scmp.lt.s32.totalorder %s11, 1
          %s519 = scalar_select %p518, %s11, 1
          %s520 = scalar_lea.vmem %s3, %s519
        $region66: #{relu_conv_bn.1} parent=19 // pred_fallthru
          _
        // Predicated region
        $region67: #{relu_conv_bn.1} parent=19 // pred_check
          %p521 = pneg %p130
        $region68: #{relu_conv_bn.1} parent=19 // pred_check_branch
          %523 = sbr.rel (%p521) target = $region70
        $region69: #{relu_conv_bn.1} parent=19 // pred_region
          %p524 = scmp.lt.s32.totalorder %s11, 1
          %s525 = scalar_select %p524, %s11, 1
          %s526 = scalar_lea.vmem %s4, %s525
        $region70: #{relu_conv_bn.1} parent=19 // pred_fallthru
          _
      $region20: #{relu_conv_bn.1} parent=5 // pred_fallthru
        _
      %p527 = scmp.le.s32.totalorder 1, %s11
      %p528 = scmp.lt.s32.totalorder %s11, 3
      %p529 = pnand %p527, %p528
      %p530 = pneg %p529
      // Predicated region
      $region71: #{relu_conv_bn.1} parent=5 // pred_check
        _
      $region72: #{relu_conv_bn.1} parent=5 // pred_check_branch
        %532 = sbr.rel (%p529) target = $region74
      $region73: #{relu_conv_bn.1} parent=5 // pred_region
        %s533 = ssub.s32 %s11, 1
        %s534 = sand.u32 %s45, 1
        %s535 = sand.u32 %s45, 1
        %s536 = smul.addr %s535, 576
        %s537 = scalar_lea.vmem [#allocation2], %s536
        // Predicated region
        $region75: #{relu_conv_bn.1} parent=73 // pred_check
          %p538 = pneg %p58
        $region76: #{relu_conv_bn.1} parent=73 // pred_check_branch
          %540 = sbr.rel (%p538) target = $region78
        $region77: #{relu_conv_bn.1} parent=73 // pred_region
          _
        $region78: #{relu_conv_bn.1} parent=73 // pred_fallthru
          _
        %p541 = pneg %p32
        %p542 = pneg %p29
        %s543 = sand.u32 %s45, 1
        %s544 = sand.u32 %s45, 1
        %s545 = smul.addr %s544, 576
        %s546 = scalar_lea.vmem [#allocation2], %s545
        %p547 = pneg %p58
        %p548 = pneg %p55
        %p549 = scmp.lt.s32.totalorder %s16, 1
        %s550 = scalar_select %p549, %s16, 1
        %s551 = scalar_lea.vmem %s2, %s550
        %p552 = pneg %p84
        %p553 = pneg %p81
        %p554 = scmp.lt.s32.totalorder %s16, 1
        %s555 = scalar_select %p554, %s16, 1
        %s556 = scalar_lea.vmem %s3, %s555
        %p557 = pneg %p110
        %p558 = pneg %p107
        %p559 = scmp.lt.s32.totalorder %s16, 1
        %s560 = scalar_select %p559, %s16, 1
        %s561 = scalar_lea.vmem %s4, %s560
        %p562 = pneg %p136
        %p563 = pneg %p133
        %p564 = pneg %p162
        %p565 = pneg %p159
        %s566 = sand.u32 %s149, 1
        %s567 = sand.u32 %s149, 1
        %s568 = smul.addr %s567, 56
        %s569 = scalar_lea.vmem [#allocation3], %s568
        %p570 = scmp.lt.s32.totalorder %s16, 1
        %s571 = scalar_select %p570, %s16, 1
        %s572 = scalar_lea.vmem %s2, %s571
        %p573 = scmp.lt.s32.totalorder %s16, 1
        %s574 = scalar_select %p573, %s16, 1
        %s575 = scalar_lea.vmem %s3, %s574
        %p576 = scmp.lt.s32.totalorder %s16, 1
        %s577 = scalar_select %p576, %s16, 1
        %s578 = scalar_lea.vmem %s4, %s577
        %v580 = vld [vmem:[%s537] sm:$0xff]
        %v581 = vld [vmem:[%s537 + $0x8] sm:$0xff]
        %v582 = vld [vmem:[%s537 + $0x10] sm:$0xff]
        %v583 = vld [vmem:[%s537 + $0x18] sm:$0xff]
        %v584 = vld [vmem:[%s537 + $0x20] sm:$0xff]
        %v585 = vld [vmem:[%s537 + $0x28] sm:$0xff]
        %v586 = vld [vmem:[%s537 + $0x30] sm:$0xff]
        %v587 = vld [vmem:[%s537 + $0x38] sm:$0xff]
        %v588 = vld [vmem:[%s537 + $0x40] sm:$0xff]
        %v589 = vld [vmem:[%s537 + $0x48] sm:$0xff]
        %v590 = vld [vmem:[%s537 + $0x50] sm:$0xff]
        %v591 = vld [vmem:[%s537 + $0x58] sm:$0xff]
        %v592 = vld [vmem:[%s537 + $0x60] sm:$0xff]
        %v593 = vld [vmem:[%s537 + $0x68] sm:$0xff]
        %v594 = vld [vmem:[%s537 + $0x70] sm:$0xff]
        %v595 = vld [vmem:[%s537 + $0x78] sm:$0xff]
        %v596 = vld [vmem:[%s537 + $0x80] sm:$0xff]
        %v597 = vld [vmem:[%s537 + $0x88] sm:$0xff]
        %v598 = vld [vmem:[%s537 + $0x90] sm:$0xff]
        %v599 = vld [vmem:[%s537 + $0x98] sm:$0xff]
        %v600 = vld [vmem:[%s537 + $0xa0] sm:$0xff]
        %v601 = vld [vmem:[%s537 + $0xa8] sm:$0xff]
        %v602 = vld [vmem:[%s537 + $0xb0] sm:$0xff]
        %v603 = vld [vmem:[%s537 + $0xb8] sm:$0xff]
        %v604 = vld [vmem:[%s537 + $0xc0] sm:$0xff]
        %v605 = vld [vmem:[%s537 + $0xc8] sm:$0xff]
        %v606 = vld [vmem:[%s537 + $0xd0] sm:$0xff]
        %v607 = vld [vmem:[%s537 + $0xd8] sm:$0xff]
        %v608 = vld [vmem:[%s537 + $0xe0] sm:$0xff]
        %v609 = vld [vmem:[%s537 + $0xe8] sm:$0xff]
        %v610 = vld [vmem:[%s537 + $0xf0] sm:$0xff]
        %v611 = vld [vmem:[%s537 + $0xf8] sm:$0xff]
        %v612 = vld [vmem:[%s537 + $0x100] sm:$0xff]
        %v613 = vld [vmem:[%s537 + $0x108] sm:$0xff]
        %v614 = vld [vmem:[%s537 + $0x110] sm:$0xff]
        %v615 = vld [vmem:[%s537 + $0x118] sm:$0xff]
        %v616 = vld [vmem:[%s537 + $0x120] sm:$0xff]
        %v617 = vld [vmem:[%s537 + $0x128] sm:$0xff]
        %v618 = vld [vmem:[%s537 + $0x130] sm:$0xff]
        %v619 = vld [vmem:[%s537 + $0x138] sm:$0xff]
        %v620 = vld [vmem:[%s537 + $0x140] sm:$0xff]
        %v621 = vld [vmem:[%s537 + $0x148] sm:$0xff]
        %v622 = vld [vmem:[%s537 + $0x150] sm:$0xff]
        %v623 = vld [vmem:[%s537 + $0x158] sm:$0xff]
        %v624 = vld [vmem:[%s537 + $0x160] sm:$0xff]
        %v625 = vld [vmem:[%s537 + $0x168] sm:$0xff]
        %v626 = vld [vmem:[%s537 + $0x170] sm:$0xff]
        %v627 = vld [vmem:[%s537 + $0x178] sm:$0xff]
        %v628 = vld [vmem:[%s537 + $0x180] sm:$0xff]
        %v629 = vld [vmem:[%s537 + $0x188] sm:$0xff]
        %v630 = vld [vmem:[%s537 + $0x190] sm:$0xff]
        %v631 = vld [vmem:[%s537 + $0x198] sm:$0xff]
        %v632 = vld [vmem:[%s537 + $0x1a0] sm:$0xff]
        %v633 = vld [vmem:[%s537 + $0x1a8] sm:$0xff]
        %v634 = vld [vmem:[%s537 + $0x1b0] sm:$0xff]
        %v635 = vld [vmem:[%s537 + $0x1b8] sm:$0xff]
        %v636 = vld [vmem:[%s537 + $0x1c0] sm:$0xff]
        %v637 = vld [vmem:[%s537 + $0x1c8] sm:$0xff]
        %v638 = vld [vmem:[%s537 + $0x1d0] sm:$0xff]
        %v639 = vld [vmem:[%s537 + $0x1d8] sm:$0xff]
        %v640 = vld [vmem:[%s537 + $0x1e0] sm:$0xff]
        %v641 = vld [vmem:[%s537 + $0x1e8] sm:$0xff]
        %v642 = vld [vmem:[%s537 + $0x1f0] sm:$0xff]
        %v643 = vld [vmem:[%s537 + $0x1f8] sm:$0xff]
        %v644 = vld [vmem:[%s537 + $0x200] sm:$0xff]
        %v645 = vld [vmem:[%s537 + $0x208] sm:$0xff]
        %v646 = vld [vmem:[%s537 + $0x210] sm:$0xff]
        %v647 = vld [vmem:[%s537 + $0x218] sm:$0xff]
        %v648 = vld [vmem:[%s537 + $0x220] sm:$0xff]
        %v649 = vld [vmem:[%s537 + $0x228] sm:$0xff]
        %v650 = vld [vmem:[%s537 + $0x230] sm:$0xff]
        %v651 = vld [vmem:[%s537 + $0x238] sm:$0xff]
        %v652 = vunpack.c.l.s8.bf16 %v580
        %v653 = vunpack.c.h.s8.bf16 %v580
        %v654 = vunpack.c.l.s8.bf16 %v581
        %v655 = vunpack.c.h.s8.bf16 %v581
        %v656 = vunpack.c.l.s8.bf16 %v582
        %v657 = vunpack.c.h.s8.bf16 %v582
        %v658 = vunpack.c.l.s8.bf16 %v583
        %v659 = vunpack.c.h.s8.bf16 %v583
        %v660 = vunpack.c.l.s8.bf16 %v584
        %v661 = vunpack.c.h.s8.bf16 %v584
        %v662 = vunpack.c.l.s8.bf16 %v585
        %v663 = vunpack.c.h.s8.bf16 %v585
        %v664 = vunpack.c.l.s8.bf16 %v586
        %v665 = vunpack.c.h.s8.bf16 %v586
        %v666 = vunpack.c.l.s8.bf16 %v587
        %v667 = vunpack.c.h.s8.bf16 %v587
        %v668 = vunpack.c.l.s8.bf16 %v588
        %v669 = vunpack.c.h.s8.bf16 %v588
        %v670 = vunpack.c.l.s8.bf16 %v589
        %v671 = vunpack.c.h.s8.bf16 %v589
        %v672 = vunpack.c.l.s8.bf16 %v590
        %v673 = vunpack.c.h.s8.bf16 %v590
        %v674 = vunpack.c.l.s8.bf16 %v591
        %v675 = vunpack.c.h.s8.bf16 %v591
        %v676 = vunpack.c.l.s8.bf16 %v592
        %v677 = vunpack.c.h.s8.bf16 %v592
        %v678 = vunpack.c.l.s8.bf16 %v593
        %v679 = vunpack.c.h.s8.bf16 %v593
        %v680 = vunpack.c.l.s8.bf16 %v594
        %v681 = vunpack.c.h.s8.bf16 %v594
        %v682 = vunpack.c.l.s8.bf16 %v595
        %v683 = vunpack.c.h.s8.bf16 %v595
        %v684 = vunpack.c.l.s8.bf16 %v596
        %v685 = vunpack.c.h.s8.bf16 %v596
        %v686 = vunpack.c.l.s8.bf16 %v597
        %v687 = vunpack.c.h.s8.bf16 %v597
        %v688 = vunpack.c.l.s8.bf16 %v598
        %v689 = vunpack.c.h.s8.bf16 %v598
        %v690 = vunpack.c.l.s8.bf16 %v599
        %v691 = vunpack.c.h.s8.bf16 %v599
        %v692 = vunpack.c.l.s8.bf16 %v600
        %v693 = vunpack.c.h.s8.bf16 %v600
        %v694 = vunpack.c.l.s8.bf16 %v601
        %v695 = vunpack.c.h.s8.bf16 %v601
        %v696 = vunpack.c.l.s8.bf16 %v602
        %v697 = vunpack.c.h.s8.bf16 %v602
        %v698 = vunpack.c.l.s8.bf16 %v603
        %v699 = vunpack.c.h.s8.bf16 %v603
        %v700 = vunpack.c.l.s8.bf16 %v604
        %v701 = vunpack.c.h.s8.bf16 %v604
        %v702 = vunpack.c.l.s8.bf16 %v605
        %v703 = vunpack.c.h.s8.bf16 %v605
        %v704 = vunpack.c.l.s8.bf16 %v606
        %v705 = vunpack.c.h.s8.bf16 %v606
        %v706 = vunpack.c.l.s8.bf16 %v607
        %v707 = vunpack.c.h.s8.bf16 %v607
        %v708 = vunpack.c.l.s8.bf16 %v608
        %v709 = vunpack.c.h.s8.bf16 %v608
        %v710 = vunpack.c.l.s8.bf16 %v609
        %v711 = vunpack.c.h.s8.bf16 %v609
        %v712 = vunpack.c.l.s8.bf16 %v610
        %v713 = vunpack.c.h.s8.bf16 %v610
        %v714 = vunpack.c.l.s8.bf16 %v611
        %v715 = vunpack.c.h.s8.bf16 %v611
        %v716 = vunpack.c.l.s8.bf16 %v612
        %v717 = vunpack.c.h.s8.bf16 %v612
        %v718 = vunpack.c.l.s8.bf16 %v613
        %v719 = vunpack.c.h.s8.bf16 %v613
        %v720 = vunpack.c.l.s8.bf16 %v614
        %v721 = vunpack.c.h.s8.bf16 %v614
        %v722 = vunpack.c.l.s8.bf16 %v615
        %v723 = vunpack.c.h.s8.bf16 %v615
        %v724 = vunpack.c.l.s8.bf16 %v616
        %v725 = vunpack.c.h.s8.bf16 %v616
        %v726 = vunpack.c.l.s8.bf16 %v617
        %v727 = vunpack.c.h.s8.bf16 %v617
        %v728 = vunpack.c.l.s8.bf16 %v618
        %v729 = vunpack.c.h.s8.bf16 %v618
        %v730 = vunpack.c.l.s8.bf16 %v619
        %v731 = vunpack.c.h.s8.bf16 %v619
        %v732 = vunpack.c.l.s8.bf16 %v620
        %v733 = vunpack.c.h.s8.bf16 %v620
        %v734 = vunpack.c.l.s8.bf16 %v621
        %v735 = vunpack.c.h.s8.bf16 %v621
        %v736 = vunpack.c.l.s8.bf16 %v622
        %v737 = vunpack.c.h.s8.bf16 %v622
        %v738 = vunpack.c.l.s8.bf16 %v623
        %v739 = vunpack.c.h.s8.bf16 %v623
        %v740 = vunpack.c.l.s8.bf16 %v624
        %v741 = vunpack.c.h.s8.bf16 %v624
        %v742 = vunpack.c.l.s8.bf16 %v625
        %v743 = vunpack.c.h.s8.bf16 %v625
        %v744 = vunpack.c.l.s8.bf16 %v626
        %v745 = vunpack.c.h.s8.bf16 %v626
        %v746 = vunpack.c.l.s8.bf16 %v627
        %v747 = vunpack.c.h.s8.bf16 %v627
        %v748 = vunpack.c.l.s8.bf16 %v628
        %v749 = vunpack.c.h.s8.bf16 %v628
        %v750 = vunpack.c.l.s8.bf16 %v629
        %v751 = vunpack.c.h.s8.bf16 %v629
        %v752 = vunpack.c.l.s8.bf16 %v630
        %v753 = vunpack.c.h.s8.bf16 %v630
        %v754 = vunpack.c.l.s8.bf16 %v631
        %v755 = vunpack.c.h.s8.bf16 %v631
        %v756 = vunpack.c.l.s8.bf16 %v632
        %v757 = vunpack.c.h.s8.bf16 %v632
        %v758 = vunpack.c.l.s8.bf16 %v633
        %v759 = vunpack.c.h.s8.bf16 %v633
        %v760 = vunpack.c.l.s8.bf16 %v634
        %v761 = vunpack.c.h.s8.bf16 %v634
        %v762 = vunpack.c.l.s8.bf16 %v635
        %v763 = vunpack.c.h.s8.bf16 %v635
        %v764 = vunpack.c.l.s8.bf16 %v636
        %v765 = vunpack.c.h.s8.bf16 %v636
        %v766 = vunpack.c.l.s8.bf16 %v637
        %v767 = vunpack.c.h.s8.bf16 %v637
        %v768 = vunpack.c.l.s8.bf16 %v638
        %v769 = vunpack.c.h.s8.bf16 %v638
        %v770 = vunpack.c.l.s8.bf16 %v639
        %v771 = vunpack.c.h.s8.bf16 %v639
        %v772 = vunpack.c.l.s8.bf16 %v640
        %v773 = vunpack.c.h.s8.bf16 %v640
        %v774 = vunpack.c.l.s8.bf16 %v641
        %v775 = vunpack.c.h.s8.bf16 %v641
        %v776 = vunpack.c.l.s8.bf16 %v642
        %v777 = vunpack.c.h.s8.bf16 %v642
        %v778 = vunpack.c.l.s8.bf16 %v643
        %v779 = vunpack.c.h.s8.bf16 %v643
        %v780 = vunpack.c.l.s8.bf16 %v644
        %v781 = vunpack.c.h.s8.bf16 %v644
        %v782 = vunpack.c.l.s8.bf16 %v645
        %v783 = vunpack.c.h.s8.bf16 %v645
        %v784 = vunpack.c.l.s8.bf16 %v646
        %v785 = vunpack.c.h.s8.bf16 %v646
        %v786 = vunpack.c.l.s8.bf16 %v647
        %v787 = vunpack.c.h.s8.bf16 %v647
        %v788 = vunpack.c.l.s8.bf16 %v648
        %v789 = vunpack.c.h.s8.bf16 %v648
        %v790 = vunpack.c.l.s8.bf16 %v649
        %v791 = vunpack.c.h.s8.bf16 %v649
        %v792 = vunpack.c.l.s8.bf16 %v650
        %v793 = vunpack.c.h.s8.bf16 %v650
        %v794 = vunpack.c.l.s8.bf16 %v651
        %v795 = vunpack.c.h.s8.bf16 %v651
        %v796 = vld [vmem:[%s0] sm:$0xff]
        %v797 = vld [vmem:[%s0 + $0x8] sm:$0xff]
        %v798 = vld [vmem:[%s0 + $0x10] sm:$0xff]
        %v799 = vld [vmem:[%s0 + $0x18] sm:$0xff]
        %v800 = vld [vmem:[%s0 + $0x20] sm:$0xff]
        %v801 = vld [vmem:[%s0 + $0x28] sm:$0xff]
        %v802 = vld [vmem:[%s0 + $0x30] sm:$0xff]
        %v803 = vld [vmem:[%s0 + $0x38] sm:$0xff]
        %v804 = vld [vmem:[%s0 + $0x40] sm:$0xff]
        %v805 = vld [vmem:[%s0 + $0x48] sm:$0xff]
        %v806 = vld [vmem:[%s0 + $0x50] sm:$0xff]
        %v807 = vld [vmem:[%s0 + $0x58] sm:$0xff]
        %v808 = vld [vmem:[%s0 + $0x60] sm:$0xff]
        %v809 = vld [vmem:[%s0 + $0x68] sm:$0xff]
        %v810 = vld [vmem:[%s0 + $0x70] sm:$0xff]
        %v811 = vld [vmem:[%s0 + $0x78] sm:$0xff]
        %v812 = vld [vmem:[%s0 + $0x80] sm:$0xff]
        %v813 = vld [vmem:[%s0 + $0x88] sm:$0xff]
        %v814 = vld [vmem:[%s0 + $0x90] sm:$0xff]
        %v815 = vld [vmem:[%s0 + $0x98] sm:$0xff]
        %v816 = vld [vmem:[%s0 + $0xa0] sm:$0xff]
        %v817 = vld [vmem:[%s0 + $0xa8] sm:$0xff]
        %v818 = vld [vmem:[%s0 + $0xb0] sm:$0xff]
        %v819 = vld [vmem:[%s0 + $0xb8] sm:$0xff]
        %v820 = vld [vmem:[%s0 + $0xc0] sm:$0xff]
        %v821 = vld [vmem:[%s0 + $0xc8] sm:$0xff]
        %v822 = vld [vmem:[%s0 + $0xd0] sm:$0xff]
        %v823 = vld [vmem:[%s0 + $0xd8] sm:$0xff]
        %v824 = vld [vmem:[%s0 + $0xe0] sm:$0xff]
        %v825 = vld [vmem:[%s0 + $0xe8] sm:$0xff]
        %v826 = vld [vmem:[%s0 + $0xf0] sm:$0xff]
        %v827 = vld [vmem:[%s0 + $0xf8] sm:$0xff]
        %v828 = vld [vmem:[%s0 + $0x100] sm:$0xff]
        %v829 = vld [vmem:[%s0 + $0x108] sm:$0xff]
        %v830 = vld [vmem:[%s0 + $0x110] sm:$0xff]
        %v831 = vld [vmem:[%s0 + $0x118] sm:$0xff]
        %v832 = vld [vmem:[%s0 + $0x120] sm:$0xff]
        %v833 = vld [vmem:[%s0 + $0x128] sm:$0xff]
        %v834 = vld [vmem:[%s0 + $0x130] sm:$0xff]
        %v835 = vld [vmem:[%s0 + $0x138] sm:$0xff]
        %v836 = vld [vmem:[%s0 + $0x140] sm:$0xff]
        %v837 = vld [vmem:[%s0 + $0x148] sm:$0xff]
        %v838 = vld [vmem:[%s0 + $0x150] sm:$0xff]
        %v839 = vld [vmem:[%s0 + $0x158] sm:$0xff]
        %v840 = vld [vmem:[%s0 + $0x160] sm:$0xff]
        %v841 = vld [vmem:[%s0 + $0x168] sm:$0xff]
        %v842 = vld [vmem:[%s0 + $0x170] sm:$0xff]
        %v843 = vld [vmem:[%s0 + $0x178] sm:$0xff]
        %v844 = vld [vmem:[%s0 + $0x180] sm:$0xff]
        %v845 = vld [vmem:[%s0 + $0x188] sm:$0xff]
        %v846 = vld [vmem:[%s0 + $0x190] sm:$0xff]
        %v847 = vld [vmem:[%s0 + $0x198] sm:$0xff]
        %v848 = vld [vmem:[%s0 + $0x1a0] sm:$0xff]
        %v849 = vld [vmem:[%s0 + $0x1a8] sm:$0xff]
        %v850 = vld [vmem:[%s0 + $0x1b0] sm:$0x11]
        %v851 = vld [vmem:[%s0 + $0x1b8] sm:$0x11]
        %v852 = vld [vmem:[%s0 + $0x1c0] sm:$0x11]
        %v853 = vld [vmem:[%s0 + $0x1c8] sm:$0x11]
        %v854 = vld [vmem:[%s0 + $0x1d0] sm:$0x11]
        %v855 = vld [vmem:[%s0 + $0x1d8] sm:$0x11]
        %v856 = vld [vmem:[%s0 + $0x1e0] sm:$0x11]
        %v857 = vld [vmem:[%s0 + $0x1e8] sm:$0x11]
        %v858 = vld [vmem:[%s0 + $0x1f0] sm:$0x11]
        %v922 = vunpack.c.l.b16 %v796
        %v923 = vunpack.c.h.b16 %v796
        %v924 = vunpack.c.l.b16 %v797
        %v925 = vunpack.c.h.b16 %v797
        %v926 = vunpack.c.l.b16 %v798
        %v927 = vunpack.c.h.b16 %v798
        %v928 = vunpack.c.l.b16 %v799
        %v929 = vunpack.c.h.b16 %v799
        %v930 = vunpack.c.l.b16 %v800
        %v931 = vunpack.c.h.b16 %v800
        %v932 = vunpack.c.l.b16 %v801
        %v933 = vunpack.c.h.b16 %v801
        %v934 = vunpack.c.l.b16 %v802
        %v935 = vunpack.c.h.b16 %v802
        %v936 = vunpack.c.l.b16 %v803
        %v937 = vunpack.c.h.b16 %v803
        %v938 = vunpack.c.l.b16 %v804
        %v939 = vunpack.c.h.b16 %v804
        %v940 = vunpack.c.l.b16 %v805
        %v941 = vunpack.c.h.b16 %v805
        %v942 = vunpack.c.l.b16 %v806
        %v943 = vunpack.c.h.b16 %v806
        %v944 = vunpack.c.l.b16 %v807
        %v945 = vunpack.c.h.b16 %v807
        %v946 = vunpack.c.l.b16 %v808
        %v947 = vunpack.c.h.b16 %v808
        %v948 = vunpack.c.l.b16 %v809
        %v949 = vunpack.c.h.b16 %v809
        %v950 = vunpack.c.l.b16 %v810
        %v951 = vunpack.c.h.b16 %v810
        %v952 = vunpack.c.l.b16 %v811
        %v953 = vunpack.c.h.b16 %v811
        %v954 = vunpack.c.l.b16 %v812
        %v955 = vunpack.c.h.b16 %v812
        %v956 = vunpack.c.l.b16 %v813
        %v957 = vunpack.c.h.b16 %v813
        %v958 = vunpack.c.l.b16 %v814
        %v959 = vunpack.c.h.b16 %v814
        %v960 = vunpack.c.l.b16 %v815
        %v961 = vunpack.c.h.b16 %v815
        %v962 = vunpack.c.l.b16 %v816
        %v963 = vunpack.c.h.b16 %v816
        %v964 = vunpack.c.l.b16 %v817
        %v965 = vunpack.c.h.b16 %v817
        %v966 = vunpack.c.l.b16 %v818
        %v967 = vunpack.c.h.b16 %v818
        %v968 = vunpack.c.l.b16 %v819
        %v969 = vunpack.c.h.b16 %v819
        %v970 = vunpack.c.l.b16 %v820
        %v971 = vunpack.c.h.b16 %v820
        %v972 = vunpack.c.l.b16 %v821
        %v973 = vunpack.c.h.b16 %v821
        %v974 = vunpack.c.l.b16 %v822
        %v975 = vunpack.c.h.b16 %v822
        %v976 = vunpack.c.l.b16 %v823
        %v977 = vunpack.c.h.b16 %v823
        %v978 = vunpack.c.l.b16 %v824
        %v979 = vunpack.c.h.b16 %v824
        %v980 = vunpack.c.l.b16 %v825
        %v981 = vunpack.c.h.b16 %v825
        %v982 = vunpack.c.l.b16 %v826
        %v983 = vunpack.c.h.b16 %v826
        %v984 = vunpack.c.l.b16 %v827
        %v985 = vunpack.c.h.b16 %v827
        %v986 = vunpack.c.l.b16 %v828
        %v987 = vunpack.c.h.b16 %v828
        %v988 = vunpack.c.l.b16 %v829
        %v989 = vunpack.c.h.b16 %v829
        %v990 = vunpack.c.l.b16 %v830
        %v991 = vunpack.c.h.b16 %v830
        %v992 = vunpack.c.l.b16 %v831
        %v993 = vunpack.c.h.b16 %v831
        %v994 = vunpack.c.l.b16 %v832
        %v995 = vunpack.c.h.b16 %v832
        %v996 = vunpack.c.l.b16 %v833
        %v997 = vunpack.c.h.b16 %v833
        %v998 = vunpack.c.l.b16 %v834
        %v999 = vunpack.c.h.b16 %v834
        %v1000 = vunpack.c.l.b16 %v835
        %v1001 = vunpack.c.h.b16 %v835
        %v1002 = vunpack.c.l.b16 %v836
        %v1003 = vunpack.c.h.b16 %v836
        %v1004 = vunpack.c.l.b16 %v837
        %v1005 = vunpack.c.h.b16 %v837
        %v1006 = vunpack.c.l.b16 %v838
        %v1007 = vunpack.c.h.b16 %v838
        %v1008 = vunpack.c.l.b16 %v839
        %v1009 = vunpack.c.h.b16 %v839
        %v1010 = vunpack.c.l.b16 %v840
        %v1011 = vunpack.c.h.b16 %v840
        %v1012 = vunpack.c.l.b16 %v841
        %v1013 = vunpack.c.h.b16 %v841
        %v1014 = vunpack.c.l.b16 %v842
        %v1015 = vunpack.c.h.b16 %v842
        %v1016 = vunpack.c.l.b16 %v843
        %v1017 = vunpack.c.h.b16 %v843
        %v1018 = vunpack.c.l.b16 %v844
        %v1019 = vunpack.c.h.b16 %v844
        %v1020 = vunpack.c.l.b16 %v845
        %v1021 = vunpack.c.h.b16 %v845
        %v1022 = vunpack.c.l.b16 %v846
        %v1023 = vunpack.c.h.b16 %v846
        %v1024 = vunpack.c.l.b16 %v847
        %v1025 = vunpack.c.h.b16 %v847
        %v1026 = vunpack.c.l.b16 %v848
        %v1027 = vunpack.c.h.b16 %v848
        %v1028 = vunpack.c.l.b16 %v849
        %v1029 = vunpack.c.h.b16 %v849
        %v1030 = vunpack.c.l.b16 %v850
        %v1031 = vunpack.c.h.b16 %v850
        %v1032 = vunpack.c.l.b16 %v851
        %v1033 = vunpack.c.h.b16 %v851
        %v1034 = vunpack.c.l.b16 %v852
        %v1035 = vunpack.c.h.b16 %v852
        %v1036 = vunpack.c.l.b16 %v853
        %v1037 = vunpack.c.h.b16 %v853
        %v1038 = vunpack.c.l.b16 %v854
        %v1039 = vunpack.c.h.b16 %v854
        %v1040 = vunpack.c.l.b16 %v855
        %v1041 = vunpack.c.h.b16 %v855
        %v1042 = vunpack.c.l.b16 %v856
        %v1043 = vunpack.c.h.b16 %v856
        %v1044 = vunpack.c.l.b16 %v857
        %v1045 = vunpack.c.h.b16 %v857
        %v1046 = vunpack.c.l.b16 %v858
        %v1047 = vunpack.c.h.b16 %v858
        %v1048 = vpack.c.b16 %v940, %v922
        %v1049 = vpack.c.b16 %v941, %v923
        %v1050 = vpack.c.b16 %v942, %v924
        %v1051 = vpack.c.b16 %v943, %v925
        %v1052 = vpack.c.b16 %v944, %v926
        %v1053 = vpack.c.b16 %v945, %v927
        %v1054 = vpack.c.b16 %v946, %v928
        %v1055 = vpack.c.b16 %v947, %v929
        %v1056 = vpack.c.b16 %v948, %v930
        %v1057 = vpack.c.b16 %v949, %v931
        %v1058 = vpack.c.b16 %v950, %v932
        %v1059 = vpack.c.b16 %v951, %v933
        %v1060 = vpack.c.b16 %v952, %v934
        %v1061 = vpack.c.b16 %v953, %v935
        %v1062 = vpack.c.b16 %v954, %v936
        %v1063 = vpack.c.b16 %v955, %v937
        %v1064 = vpack.c.b16 %v956, %v938
        %v1065 = vpack.c.b16 %v957, %v939
        %v1066 = vpack.c.b16 %v976, %v958
        %v1067 = vpack.c.b16 %v977, %v959
        %v1068 = vpack.c.b16 %v978, %v960
        %v1069 = vpack.c.b16 %v979, %v961
        %v1070 = vpack.c.b16 %v980, %v962
        %v1071 = vpack.c.b16 %v981, %v963
        %v1072 = vpack.c.b16 %v982, %v964
        %v1073 = vpack.c.b16 %v983, %v965
        %v1074 = vpack.c.b16 %v984, %v966
        %v1075 = vpack.c.b16 %v985, %v967
        %v1076 = vpack.c.b16 %v986, %v968
        %v1077 = vpack.c.b16 %v987, %v969
        %v1078 = vpack.c.b16 %v988, %v970
        %v1079 = vpack.c.b16 %v989, %v971
        %v1080 = vpack.c.b16 %v990, %v972
        %v1081 = vpack.c.b16 %v991, %v973
        %v1082 = vpack.c.b16 %v992, %v974
        %v1083 = vpack.c.b16 %v993, %v975
        %v1084 = vpack.c.b16 %v1012, %v994
        %v1085 = vpack.c.b16 %v1013, %v995
        %v1086 = vpack.c.b16 %v1014, %v996
        %v1087 = vpack.c.b16 %v1015, %v997
        %v1088 = vpack.c.b16 %v1016, %v998
        %v1089 = vpack.c.b16 %v1017, %v999
        %v1090 = vpack.c.b16 %v1018, %v1000
        %v1091 = vpack.c.b16 %v1019, %v1001
        %v1092 = vpack.c.b16 %v1020, %v1002
        %v1093 = vpack.c.b16 %v1021, %v1003
        %v1094 = vpack.c.b16 %v1022, %v1004
        %v1095 = vpack.c.b16 %v1023, %v1005
        %v1096 = vpack.c.b16 %v1024, %v1006
        %v1097 = vpack.c.b16 %v1025, %v1007
        %v1098 = vpack.c.b16 %v1026, %v1008
        %v1099 = vpack.c.b16 %v1027, %v1009
        %v1100 = vpack.c.b16 %v1028, %v1010
        %v1101 = vpack.c.b16 %v1029, %v1011
        %v1102 = vpack.c.b16 %v1030, %v1030
        %v1103 = vpack.c.b16 %v1031, %v1031
        %v1104 = vpack.c.b16 %v1032, %v1032
        %v1105 = vpack.c.b16 %v1033, %v1033
        %v1106 = vpack.c.b16 %v1034, %v1034
        %v1107 = vpack.c.b16 %v1035, %v1035
        %v1108 = vpack.c.b16 %v1036, %v1036
        %v1109 = vpack.c.b16 %v1037, %v1037
        %v1110 = vpack.c.b16 %v1038, %v1038
        %v1111 = vpack.c.b16 %v1039, %v1039
        %v1112 = vpack.c.b16 %v1040, %v1040
        %v1113 = vpack.c.b16 %v1041, %v1041
        %v1114 = vpack.c.b16 %v1042, %v1042
        %v1115 = vpack.c.b16 %v1043, %v1043
        %v1116 = vpack.c.b16 %v1044, %v1044
        %v1117 = vpack.c.b16 %v1045, %v1045
        %v1118 = vpack.c.b16 %v1046, %v1046
        %v1119 = vpack.c.b16 %v1047, %v1047
        %1192 = vmatprep.subr.bf16.mxu0 0
        %1193 = vmatpush1.bf16.msra.mxu0 %v652
        %1194 = vmatprep.subr.bf16.mxu0 0
        %1195 = vmatpush1.bf16.msra.mxu0 %v653
        %1196 = vmatprep.subr.bf16.mxu0 0
        %1197 = vmatpush1.bf16.msra.mxu0 %v654
        %1198 = vmatprep.subr.bf16.mxu0 0
        %1199 = vmatpush1.bf16.msra.mxu0 %v655
        %1200 = vmatprep.subr.bf16.mxu0 0
        %1201 = vmatpush1.bf16.msra.mxu0 %v656
        %1202 = vmatprep.subr.bf16.mxu0 0
        %1203 = vmatpush1.bf16.msra.mxu0 %v657
        %1204 = vmatprep.subr.bf16.mxu0 0
        %1205 = vmatpush1.bf16.msra.mxu0 %v658
        %1206 = vmatprep.subr.bf16.mxu0 0
        %1207 = vmatpush1.bf16.msra.mxu0 %v659
        %1208 = vmatprep.subr.bf16.mxu0 0
        %1209 = vmatpush1.bf16.msra.mxu0 %v660
        %1210 = vmatprep.subr.bf16.mxu0 0
        %1211 = vmatpush1.bf16.msra.mxu0 %v661
        %1212 = vmatprep.subr.bf16.mxu0 0
        %1213 = vmatpush1.bf16.msra.mxu0 %v662
        %1214 = vmatprep.subr.bf16.mxu0 0
        %1215 = vmatpush1.bf16.msra.mxu0 %v663
        %1216 = vmatprep.subr.bf16.mxu0 0
        %1217 = vmatpush1.bf16.msra.mxu0 %v664
        %1218 = vmatprep.subr.bf16.mxu0 0
        %1219 = vmatpush1.bf16.msra.mxu0 %v665
        %1220 = vmatprep.subr.bf16.mxu0 0
        %1221 = vmatpush1.bf16.msra.mxu0 %v666
        %1222 = vmatprep.subr.bf16.mxu0 0
        %1223 = vmatpush1.bf16.msra.mxu0 %v667
        %1224 = vmatprep.mubr.bf16.mxu0 %v1049
        %1225 = vmatmul.mubr.bf16.gmra.mrb[0].mxu0 %v1048
        %v1226 = vpop.f32.mrb[0].mxu0
        %v1227 = vadd.f32 0.0, %v1226
        %v1228 = vpop.f32.mrb[0].mxu0
        %v1229 = vpop.f32.mrb[0].mxu0
        %v1230 = vadd.f32 0.0, %v1229
        %v1231 = vpop.f32.mrb[0].mxu0
        %1232 = vmatprep.mubr.bf16.mxu0 %v1067
        %1233 = vmatmul.mubr.bf16.gmra.mrb[0].mxu0 %v1066
        %v1234 = vpop.f32.mrb[0].mxu0
        %v1235 = vadd.f32 0.0, %v1234
        %v1236 = vpop.f32.mrb[0].mxu0
        %v1237 = vpop.f32.mrb[0].mxu0
        %v1238 = vadd.f32 0.0, %v1237
        %v1239 = vpop.f32.mrb[0].mxu0
        %1240 = vmatprep.mubr.bf16.mxu0 %v1085
        %1241 = vmatmul.mubr.bf16.gmra.mrb[0].mxu0 %v1084
        %v1242 = vpop.f32.mrb[0].mxu0
        %v1243 = vadd.f32 0.0, %v1242
        %v1244 = vpop.f32.mrb[0].mxu0
        %v1245 = vpop.f32.mrb[0].mxu0
        %v1246 = vadd.f32 0.0, %v1245
        %v1247 = vpop.f32.mrb[0].mxu0
        %1248 = vmatprep.mubr.bf16.mxu0 %v1103
        %1249 = vmatmul.mubr.bf16.gmra.mrb[0].mxu0 %v1102
        %v1250 = vpop.f32.mrb[0].mxu0
        %v1251 = vadd.f32 0.0, %v1250
        %v1252 = vpop.f32.mrb[0].mxu0
        %v1253 = vpop.f32.mrb[0].mxu0
        %v1254 = vpop.f32.mrb[0].mxu0
        %1255 = vdwg.mxu0
        %1256 = vmatprep.subr.bf16.mxu0 0
        %1257 = vmatpush1.bf16.msra.mxu0 %v668
        %1258 = vmatprep.subr.bf16.mxu0 0
        %1259 = vmatpush1.bf16.msra.mxu0 %v669
        %1260 = vmatprep.subr.bf16.mxu0 0
        %1261 = vmatpush1.bf16.msra.mxu0 %v670
        %1262 = vmatprep.subr.bf16.mxu0 0
        %1263 = vmatpush1.bf16.msra.mxu0 %v671
        %1264 = vmatprep.subr.bf16.mxu0 0
        %1265 = vmatpush1.bf16.msra.mxu0 %v672
        %1266 = vmatprep.subr.bf16.mxu0 0
        %1267 = vmatpush1.bf16.msra.mxu0 %v673
        %1268 = vmatprep.subr.bf16.mxu0 0
        %1269 = vmatpush1.bf16.msra.mxu0 %v674
        %1270 = vmatprep.subr.bf16.mxu0 0
        %1271 = vmatpush1.bf16.msra.mxu0 %v675
        %1272 = vmatprep.subr.bf16.mxu0 0
        %1273 = vmatpush1.bf16.msra.mxu0 %v676
        %1274 = vmatprep.subr.bf16.mxu0 0
        %1275 = vmatpush1.bf16.msra.mxu0 %v677
        %1276 = vmatprep.subr.bf16.mxu0 0
        %1277 = vmatpush1.bf16.msra.mxu0 %v678
        %1278 = vmatprep.subr.bf16.mxu0 0
        %1279 = vmatpush1.bf16.msra.mxu0 %v679
        %1280 = vmatprep.subr.bf16.mxu0 0
        %1281 = vmatpush1.bf16.msra.mxu0 %v680
        %1282 = vmatprep.subr.bf16.mxu0 0
        %1283 = vmatpush1.bf16.msra.mxu0 %v681
        %1284 = vmatprep.subr.bf16.mxu0 0
        %1285 = vmatpush1.bf16.msra.mxu0 %v682
        %1286 = vmatprep.subr.bf16.mxu0 0
        %1287 = vmatpush1.bf16.msra.mxu0 %v683
        %1288 = vmatprep.mubr.bf16.mxu0 %v1051
        %1289 = vmatmul.mubr.bf16.gmra.mrb[0].mxu0 %v1050
        %v1290 = vpop.f32.mrb[0].mxu0
        %v1291 = vadd.f32 %v1227, %v1290
        %v1292 = vpop.f32.mrb[0].mxu0
        %v1293 = vpop.f32.mrb[0].mxu0
        %v1294 = vadd.f32 %v1230, %v1293
        %v1295 = vpop.f32.mrb[0].mxu0
        %1296 = vmatprep.mubr.bf16.mxu0 %v1069
        %1297 = vmatmul.mubr.bf16.gmra.mrb[0].mxu0 %v1068
        %v1298 = vpop.f32.mrb[0].mxu0
        %v1299 = vadd.f32 %v1235, %v1298
        %v1300 = vpop.f32.mrb[0].mxu0
        %v1301 = vpop.f32.mrb[0].mxu0
        %v1302 = vadd.f32 %v1238, %v1301
        %v1303 = vpop.f32.mrb[0].mxu0
        %1304 = vmatprep.mubr.bf16.mxu0 %v1087
        %1305 = vmatmul.mubr.bf16.gmra.mrb[0].mxu0 %v1086
        %v1306 = vpop.f32.mrb[0].mxu0
        %v1307 = vadd.f32 %v1243, %v1306
        %v1308 = vpop.f32.mrb[0].mxu0
        %v1309 = vpop.f32.mrb[0].mxu0
        %v1310 = vadd.f32 %v1246, %v1309
        %v1311 = vpop.f32.mrb[0].mxu0
        %1312 = vmatprep.mubr.bf16.mxu0 %v1105
        %1313 = vmatmul.mubr.bf16.gmra.mrb[0].mxu0 %v1104
        %v1314 = vpop.f32.mrb[0].mxu0
        %v1315 = vadd.f32 %v1251, %v1314
        %v1316 = vpop.f32.mrb[0].mxu0
        %v1317 = vpop.f32.mrb[0].mxu0
        %v1318 = vpop.f32.mrb[0].mxu0
        %1319 = vdwg.mxu0
        %1320 = vmatprep.subr.bf16.mxu0 0
        %1321 = vmatpush1.bf16.msra.mxu0 %v684
        %1322 = vmatprep.subr.bf16.mxu0 0
        %1323 = vmatpush1.bf16.msra.mxu0 %v685
        %1324 = vmatprep.subr.bf16.mxu0 0
        %1325 = vmatpush1.bf16.msra.mxu0 %v686
        %1326 = vmatprep.subr.bf16.mxu0 0
        %1327 = vmatpush1.bf16.msra.mxu0 %v687
        %1328 = vmatprep.subr.bf16.mxu0 0
        %1329 = vmatpush1.bf16.msra.mxu0 %v688
        %1330 = vmatprep.subr.bf16.mxu0 0
        %1331 = vmatpush1.bf16.msra.mxu0 %v689
        %1332 = vmatprep.subr.bf16.mxu0 0
        %1333 = vmatpush1.bf16.msra.mxu0 %v690
        %1334 = vmatprep.subr.bf16.mxu0 0
        %1335 = vmatpush1.bf16.msra.mxu0 %v691
        %1336 = vmatprep.subr.bf16.mxu0 0
        %1337 = vmatpush1.bf16.msra.mxu0 %v692
        %1338 = vmatprep.subr.bf16.mxu0 0
        %1339 = vmatpush1.bf16.msra.mxu0 %v693
        %1340 = vmatprep.subr.bf16.mxu0 0
        %1341 = vmatpush1.bf16.msra.mxu0 %v694
        %1342 = vmatprep.subr.bf16.mxu0 0
        %1343 = vmatpush1.bf16.msra.mxu0 %v695
        %1344 = vmatprep.subr.bf16.mxu0 0
        %1345 = vmatpush1.bf16.msra.mxu0 %v696
        %1346 = vmatprep.subr.bf16.mxu0 0
        %1347 = vmatpush1.bf16.msra.mxu0 %v697
        %1348 = vmatprep.subr.bf16.mxu0 0
        %1349 = vmatpush1.bf16.msra.mxu0 %v698
        %1350 = vmatprep.subr.bf16.mxu0 0
        %1351 = vmatpush1.bf16.msra.mxu0 %v699
        %1352 = vmatprep.mubr.bf16.mxu0 %v1053
        %1353 = vmatmul.mubr.bf16.gmra.mrb[0].mxu0 %v1052
        %v1354 = vpop.f32.mrb[0].mxu0
        %v1355 = vadd.f32 %v1291, %v1354
        %v1356 = vpop.f32.mrb[0].mxu0
        %v1357 = vpop.f32.mrb[0].mxu0
        %v1358 = vadd.f32 %v1294, %v1357
        %v1359 = vpop.f32.mrb[0].mxu0
        %1360 = vmatprep.mubr.bf16.mxu0 %v1071
        %1361 = vmatmul.mubr.bf16.gmra.mrb[0].mxu0 %v1070
        %v1362 = vpop.f32.mrb[0].mxu0
        %v1363 = vadd.f32 %v1299, %v1362
        %v1364 = vpop.f32.mrb[0].mxu0
        %v1365 = vpop.f32.mrb[0].mxu0
        %v1366 = vadd.f32 %v1302, %v1365
        %v1367 = vpop.f32.mrb[0].mxu0
        %1368 = vmatprep.mubr.bf16.mxu0 %v1089
        %1369 = vmatmul.mubr.bf16.gmra.mrb[0].mxu0 %v1088
        %v1370 = vpop.f32.mrb[0].mxu0
        %v1371 = vadd.f32 %v1307, %v1370
        %v1372 = vpop.f32.mrb[0].mxu0
        %v1373 = vpop.f32.mrb[0].mxu0
        %v1374 = vadd.f32 %v1310, %v1373
        %v1375 = vpop.f32.mrb[0].mxu0
        %1376 = vmatprep.mubr.bf16.mxu0 %v1107
        %1377 = vmatmul.mubr.bf16.gmra.mrb[0].mxu0 %v1106
        %v1378 = vpop.f32.mrb[0].mxu0
        %v1379 = vadd.f32 %v1315, %v1378
        %v1380 = vpop.f32.mrb[0].mxu0
        %v1381 = vpop.f32.mrb[0].mxu0
        %v1382 = vpop.f32.mrb[0].mxu0
        %1383 = vdwg.mxu0
        %1384 = vmatprep.subr.bf16.mxu0 0
        %1385 = vmatpush1.bf16.msra.mxu0 %v700
        %1386 = vmatprep.subr.bf16.mxu0 0
        %1387 = vmatpush1.bf16.msra.mxu0 %v701
        %1388 = vmatprep.subr.bf16.mxu0 0
        %1389 = vmatpush1.bf16.msra.mxu0 %v702
        %1390 = vmatprep.subr.bf16.mxu0 0
        %1391 = vmatpush1.bf16.msra.mxu0 %v703
        %1392 = vmatprep.subr.bf16.mxu0 0
        %1393 = vmatpush1.bf16.msra.mxu0 %v704
        %1394 = vmatprep.subr.bf16.mxu0 0
        %1395 = vmatpush1.bf16.msra.mxu0 %v705
        %1396 = vmatprep.subr.bf16.mxu0 0
        %1397 = vmatpush1.bf16.msra.mxu0 %v706
        %1398 = vmatprep.subr.bf16.mxu0 0
        %1399 = vmatpush1.bf16.msra.mxu0 %v707
        %1400 = vmatprep.subr.bf16.mxu0 0
        %1401 = vmatpush1.bf16.msra.mxu0 %v708
        %1402 = vmatprep.subr.bf16.mxu0 0
        %1403 = vmatpush1.bf16.msra.mxu0 %v709
        %1404 = vmatprep.subr.bf16.mxu0 0
        %1405 = vmatpush1.bf16.msra.mxu0 %v710
        %1406 = vmatprep.subr.bf16.mxu0 0
        %1407 = vmatpush1.bf16.msra.mxu0 %v711
        %1408 = vmatprep.subr.bf16.mxu0 0
        %1409 = vmatpush1.bf16.msra.mxu0 %v712
        %1410 = vmatprep.subr.bf16.mxu0 0
        %1411 = vmatpush1.bf16.msra.mxu0 %v713
        %1412 = vmatprep.subr.bf16.mxu0 0
        %1413 = vmatpush1.bf16.msra.mxu0 %v714
        %1414 = vmatprep.subr.bf16.mxu0 0
        %1415 = vmatpush1.bf16.msra.mxu0 %v715
        %1416 = vmatprep.mubr.bf16.mxu0 %v1055
        %1417 = vmatmul.mubr.bf16.gmra.mrb[0].mxu0 %v1054
        %v1418 = vpop.f32.mrb[0].mxu0
        %v1419 = vadd.f32 %v1355, %v1418
        %v1420 = vpop.f32.mrb[0].mxu0
        %v1421 = vpop.f32.mrb[0].mxu0
        %v1422 = vadd.f32 %v1358, %v1421
        %v1423 = vpop.f32.mrb[0].mxu0
        %1424 = vmatprep.mubr.bf16.mxu0 %v1073
        %1425 = vmatmul.mubr.bf16.gmra.mrb[0].mxu0 %v1072
        %v1426 = vpop.f32.mrb[0].mxu0
        %v1427 = vadd.f32 %v1363, %v1426
        %v1428 = vpop.f32.mrb[0].mxu0
        %v1429 = vpop.f32.mrb[0].mxu0
        %v1430 = vadd.f32 %v1366, %v1429
        %v1431 = vpop.f32.mrb[0].mxu0
        %1432 = vmatprep.mubr.bf16.mxu0 %v1091
        %1433 = vmatmul.mubr.bf16.gmra.mrb[0].mxu0 %v1090
        %v1434 = vpop.f32.mrb[0].mxu0
        %v1435 = vadd.f32 %v1371, %v1434
        %v1436 = vpop.f32.mrb[0].mxu0
        %v1437 = vpop.f32.mrb[0].mxu0
        %v1438 = vadd.f32 %v1374, %v1437
        %v1439 = vpop.f32.mrb[0].mxu0
        %1440 = vmatprep.mubr.bf16.mxu0 %v1109
        %1441 = vmatmul.mubr.bf16.gmra.mrb[0].mxu0 %v1108
        %v1442 = vpop.f32.mrb[0].mxu0
        %v1443 = vadd.f32 %v1379, %v1442
        %v1444 = vpop.f32.mrb[0].mxu0
        %v1445 = vpop.f32.mrb[0].mxu0
        %v1446 = vpop.f32.mrb[0].mxu0
        %1447 = vdwg.mxu0
        %1448 = vmatprep.subr.bf16.mxu0 0
        %1449 = vmatpush1.bf16.msra.mxu0 %v716
        %1450 = vmatprep.subr.bf16.mxu0 0
        %1451 = vmatpush1.bf16.msra.mxu0 %v717
        %1452 = vmatprep.subr.bf16.mxu0 0
        %1453 = vmatpush1.bf16.msra.mxu0 %v718
        %1454 = vmatprep.subr.bf16.mxu0 0
        %1455 = vmatpush1.bf16.msra.mxu0 %v719
        %1456 = vmatprep.subr.bf16.mxu0 0
        %1457 = vmatpush1.bf16.msra.mxu0 %v720
        %1458 = vmatprep.subr.bf16.mxu0 0
        %1459 = vmatpush1.bf16.msra.mxu0 %v721
        %1460 = vmatprep.subr.bf16.mxu0 0
        %1461 = vmatpush1.bf16.msra.mxu0 %v722
        %1462 = vmatprep.subr.bf16.mxu0 0
        %1463 = vmatpush1.bf16.msra.mxu0 %v723
        %1464 = vmatprep.subr.bf16.mxu0 0
        %1465 = vmatpush1.bf16.msra.mxu0 %v724
        %1466 = vmatprep.subr.bf16.mxu0 0
        %1467 = vmatpush1.bf16.msra.mxu0 %v725
        %1468 = vmatprep.subr.bf16.mxu0 0
        %1469 = vmatpush1.bf16.msra.mxu0 %v726
        %1470 = vmatprep.subr.bf16.mxu0 0
        %1471 = vmatpush1.bf16.msra.mxu0 %v727
        %1472 = vmatprep.subr.bf16.mxu0 0
        %1473 = vmatpush1.bf16.msra.mxu0 %v728
        %1474 = vmatprep.subr.bf16.mxu0 0
        %1475 = vmatpush1.bf16.msra.mxu0 %v729
        %1476 = vmatprep.subr.bf16.mxu0 0
        %1477 = vmatpush1.bf16.msra.mxu0 %v730
        %1478 = vmatprep.subr.bf16.mxu0 0
        %1479 = vmatpush1.bf16.msra.mxu0 %v731
        %1480 = vmatprep.mubr.bf16.mxu0 %v1057
        %1481 = vmatmul.mubr.bf16.gmra.mrb[0].mxu0 %v1056
        %v1482 = vpop.f32.mrb[0].mxu0
        %v1483 = vadd.f32 %v1419, %v1482
        %v1484 = vpop.f32.mrb[0].mxu0
        %v1485 = vpop.f32.mrb[0].mxu0
        %v1486 = vadd.f32 %v1422, %v1485
        %v1487 = vpop.f32.mrb[0].mxu0
        %1488 = vmatprep.mubr.bf16.mxu0 %v1075
        %1489 = vmatmul.mubr.bf16.gmra.mrb[0].mxu0 %v1074
        %v1490 = vpop.f32.mrb[0].mxu0
        %v1491 = vadd.f32 %v1427, %v1490
        %v1492 = vpop.f32.mrb[0].mxu0
        %v1493 = vpop.f32.mrb[0].mxu0
        %v1494 = vadd.f32 %v1430, %v1493
        %v1495 = vpop.f32.mrb[0].mxu0
        %1496 = vmatprep.mubr.bf16.mxu0 %v1093
        %1497 = vmatmul.mubr.bf16.gmra.mrb[0].mxu0 %v1092
        %v1498 = vpop.f32.mrb[0].mxu0
        %v1499 = vadd.f32 %v1435, %v1498
        %v1500 = vpop.f32.mrb[0].mxu0
        %v1501 = vpop.f32.mrb[0].mxu0
        %v1502 = vadd.f32 %v1438, %v1501
        %v1503 = vpop.f32.mrb[0].mxu0
        %1504 = vmatprep.mubr.bf16.mxu0 %v1111
        %1505 = vmatmul.mubr.bf16.gmra.mrb[0].mxu0 %v1110
        %v1506 = vpop.f32.mrb[0].mxu0
        %v1507 = vadd.f32 %v1443, %v1506
        %v1508 = vpop.f32.mrb[0].mxu0
        %v1509 = vpop.f32.mrb[0].mxu0
        %v1510 = vpop.f32.mrb[0].mxu0
        %1511 = vdwg.mxu0
        %1512 = vmatprep.subr.bf16.mxu0 0
        %1513 = vmatpush1.bf16.msra.mxu0 %v732
        %1514 = vmatprep.subr.bf16.mxu0 0
        %1515 = vmatpush1.bf16.msra.mxu0 %v733
        %1516 = vmatprep.subr.bf16.mxu0 0
        %1517 = vmatpush1.bf16.msra.mxu0 %v734
        %1518 = vmatprep.subr.bf16.mxu0 0
        %1519 = vmatpush1.bf16.msra.mxu0 %v735
        %1520 = vmatprep.subr.bf16.mxu0 0
        %1521 = vmatpush1.bf16.msra.mxu0 %v736
        %1522 = vmatprep.subr.bf16.mxu0 0
        %1523 = vmatpush1.bf16.msra.mxu0 %v737
        %1524 = vmatprep.subr.bf16.mxu0 0
        %1525 = vmatpush1.bf16.msra.mxu0 %v738
        %1526 = vmatprep.subr.bf16.mxu0 0
        %1527 = vmatpush1.bf16.msra.mxu0 %v739
        %1528 = vmatprep.subr.bf16.mxu0 0
        %1529 = vmatpush1.bf16.msra.mxu0 %v740
        %1530 = vmatprep.subr.bf16.mxu0 0
        %1531 = vmatpush1.bf16.msra.mxu0 %v741
        %1532 = vmatprep.subr.bf16.mxu0 0
        %1533 = vmatpush1.bf16.msra.mxu0 %v742
        %1534 = vmatprep.subr.bf16.mxu0 0
        %1535 = vmatpush1.bf16.msra.mxu0 %v743
        %1536 = vmatprep.subr.bf16.mxu0 0
        %1537 = vmatpush1.bf16.msra.mxu0 %v744
        %1538 = vmatprep.subr.bf16.mxu0 0
        %1539 = vmatpush1.bf16.msra.mxu0 %v745
        %1540 = vmatprep.subr.bf16.mxu0 0
        %1541 = vmatpush1.bf16.msra.mxu0 %v746
        %1542 = vmatprep.subr.bf16.mxu0 0
        %1543 = vmatpush1.bf16.msra.mxu0 %v747
        %1544 = vmatprep.mubr.bf16.mxu0 %v1059
        %1545 = vmatmul.mubr.bf16.gmra.mrb[0].mxu0 %v1058
        %v1546 = vpop.f32.mrb[0].mxu0
        %v1547 = vadd.f32 %v1483, %v1546
        %v1548 = vpop.f32.mrb[0].mxu0
        %v1549 = vpop.f32.mrb[0].mxu0
        %v1550 = vadd.f32 %v1486, %v1549
        %v1551 = vpop.f32.mrb[0].mxu0
        %1552 = vmatprep.mubr.bf16.mxu0 %v1077
        %1553 = vmatmul.mubr.bf16.gmra.mrb[0].mxu0 %v1076
        %v1554 = vpop.f32.mrb[0].mxu0
        %v1555 = vadd.f32 %v1491, %v1554
        %v1556 = vpop.f32.mrb[0].mxu0
        %v1557 = vpop.f32.mrb[0].mxu0
        %v1558 = vadd.f32 %v1494, %v1557
        %v1559 = vpop.f32.mrb[0].mxu0
        %1560 = vmatprep.mubr.bf16.mxu0 %v1095
        %1561 = vmatmul.mubr.bf16.gmra.mrb[0].mxu0 %v1094
        %v1562 = vpop.f32.mrb[0].mxu0
        %v1563 = vadd.f32 %v1499, %v1562
        %v1564 = vpop.f32.mrb[0].mxu0
        %v1565 = vpop.f32.mrb[0].mxu0
        %v1566 = vadd.f32 %v1502, %v1565
        %v1567 = vpop.f32.mrb[0].mxu0
        %1568 = vmatprep.mubr.bf16.mxu0 %v1113
        %1569 = vmatmul.mubr.bf16.gmra.mrb[0].mxu0 %v1112
        %v1570 = vpop.f32.mrb[0].mxu0
        %v1571 = vadd.f32 %v1507, %v1570
        %v1572 = vpop.f32.mrb[0].mxu0
        %v1573 = vpop.f32.mrb[0].mxu0
        %v1574 = vpop.f32.mrb[0].mxu0
        %1575 = vdwg.mxu0
        %1576 = vmatprep.subr.bf16.mxu0 0
        %1577 = vmatpush1.bf16.msra.mxu0 %v748
        %1578 = vmatprep.subr.bf16.mxu0 0
        %1579 = vmatpush1.bf16.msra.mxu0 %v749
        %1580 = vmatprep.subr.bf16.mxu0 0
        %1581 = vmatpush1.bf16.msra.mxu0 %v750
        %1582 = vmatprep.subr.bf16.mxu0 0
        %1583 = vmatpush1.bf16.msra.mxu0 %v751
        %1584 = vmatprep.subr.bf16.mxu0 0
        %1585 = vmatpush1.bf16.msra.mxu0 %v752
        %1586 = vmatprep.subr.bf16.mxu0 0
        %1587 = vmatpush1.bf16.msra.mxu0 %v753
        %1588 = vmatprep.subr.bf16.mxu0 0
        %1589 = vmatpush1.bf16.msra.mxu0 %v754
        %1590 = vmatprep.subr.bf16.mxu0 0
        %1591 = vmatpush1.bf16.msra.mxu0 %v755
        %1592 = vmatprep.subr.bf16.mxu0 0
        %1593 = vmatpush1.bf16.msra.mxu0 %v756
        %1594 = vmatprep.subr.bf16.mxu0 0
        %1595 = vmatpush1.bf16.msra.mxu0 %v757
        %1596 = vmatprep.subr.bf16.mxu0 0
        %1597 = vmatpush1.bf16.msra.mxu0 %v758
        %1598 = vmatprep.subr.bf16.mxu0 0
        %1599 = vmatpush1.bf16.msra.mxu0 %v759
        %1600 = vmatprep.subr.bf16.mxu0 0
        %1601 = vmatpush1.bf16.msra.mxu0 %v760
        %1602 = vmatprep.subr.bf16.mxu0 0
        %1603 = vmatpush1.bf16.msra.mxu0 %v761
        %1604 = vmatprep.subr.bf16.mxu0 0
        %1605 = vmatpush1.bf16.msra.mxu0 %v762
        %1606 = vmatprep.subr.bf16.mxu0 0
        %1607 = vmatpush1.bf16.msra.mxu0 %v763
        %1608 = vmatprep.mubr.bf16.mxu0 %v1061
        %1609 = vmatmul.mubr.bf16.gmra.mrb[0].mxu0 %v1060
        %v1610 = vpop.f32.mrb[0].mxu0
        %v1611 = vadd.f32 %v1547, %v1610
        %v1612 = vpop.f32.mrb[0].mxu0
        %v1613 = vpop.f32.mrb[0].mxu0
        %v1614 = vadd.f32 %v1550, %v1613
        %v1615 = vpop.f32.mrb[0].mxu0
        %1616 = vmatprep.mubr.bf16.mxu0 %v1079
        %1617 = vmatmul.mubr.bf16.gmra.mrb[0].mxu0 %v1078
        %v1618 = vpop.f32.mrb[0].mxu0
        %v1619 = vadd.f32 %v1555, %v1618
        %v1620 = vpop.f32.mrb[0].mxu0
        %v1621 = vpop.f32.mrb[0].mxu0
        %v1622 = vadd.f32 %v1558, %v1621
        %v1623 = vpop.f32.mrb[0].mxu0
        %1624 = vmatprep.mubr.bf16.mxu0 %v1097
        %1625 = vmatmul.mubr.bf16.gmra.mrb[0].mxu0 %v1096
        %v1626 = vpop.f32.mrb[0].mxu0
        %v1627 = vadd.f32 %v1563, %v1626
        %v1628 = vpop.f32.mrb[0].mxu0
        %v1629 = vpop.f32.mrb[0].mxu0
        %v1630 = vadd.f32 %v1566, %v1629
        %v1631 = vpop.f32.mrb[0].mxu0
        %1632 = vmatprep.mubr.bf16.mxu0 %v1115
        %1633 = vmatmul.mubr.bf16.gmra.mrb[0].mxu0 %v1114
        %v1634 = vpop.f32.mrb[0].mxu0
        %v1635 = vadd.f32 %v1571, %v1634
        %v1636 = vpop.f32.mrb[0].mxu0
        %v1637 = vpop.f32.mrb[0].mxu0
        %v1638 = vpop.f32.mrb[0].mxu0
        %1639 = vdwg.mxu0
        %1640 = vmatprep.subr.bf16.mxu0 0
        %1641 = vmatpush1.bf16.msra.mxu0 %v764
        %1642 = vmatprep.subr.bf16.mxu0 0
        %1643 = vmatpush1.bf16.msra.mxu0 %v765
        %1644 = vmatprep.subr.bf16.mxu0 0
        %1645 = vmatpush1.bf16.msra.mxu0 %v766
        %1646 = vmatprep.subr.bf16.mxu0 0
        %1647 = vmatpush1.bf16.msra.mxu0 %v767
        %1648 = vmatprep.subr.bf16.mxu0 0
        %1649 = vmatpush1.bf16.msra.mxu0 %v768
        %1650 = vmatprep.subr.bf16.mxu0 0
        %1651 = vmatpush1.bf16.msra.mxu0 %v769
        %1652 = vmatprep.subr.bf16.mxu0 0
        %1653 = vmatpush1.bf16.msra.mxu0 %v770
        %1654 = vmatprep.subr.bf16.mxu0 0
        %1655 = vmatpush1.bf16.msra.mxu0 %v771
        %1656 = vmatprep.subr.bf16.mxu0 0
        %1657 = vmatpush1.bf16.msra.mxu0 %v772
        %1658 = vmatprep.subr.bf16.mxu0 0
        %1659 = vmatpush1.bf16.msra.mxu0 %v773
        %1660 = vmatprep.subr.bf16.mxu0 0
        %1661 = vmatpush1.bf16.msra.mxu0 %v774
        %1662 = vmatprep.subr.bf16.mxu0 0
        %1663 = vmatpush1.bf16.msra.mxu0 %v775
        %1664 = vmatprep.subr.bf16.mxu0 0
        %1665 = vmatpush1.bf16.msra.mxu0 %v776
        %1666 = vmatprep.subr.bf16.mxu0 0
        %1667 = vmatpush1.bf16.msra.mxu0 %v777
        %1668 = vmatprep.subr.bf16.mxu0 0
        %1669 = vmatpush1.bf16.msra.mxu0 %v778
        %1670 = vmatprep.subr.bf16.mxu0 0
        %1671 = vmatpush1.bf16.msra.mxu0 %v779
        %1672 = vmatprep.mubr.bf16.mxu0 %v1063
        %1673 = vmatmul.mubr.bf16.gmra.mrb[0].mxu0 %v1062
        %v1674 = vpop.f32.mrb[0].mxu0
        %v1675 = vadd.f32 %v1611, %v1674
        %v1676 = vpop.f32.mrb[0].mxu0
        %v1677 = vpop.f32.mrb[0].mxu0
        %v1678 = vadd.f32 %v1614, %v1677
        %v1679 = vpop.f32.mrb[0].mxu0
        %1680 = vmatprep.mubr.bf16.mxu0 %v1081
        %1681 = vmatmul.mubr.bf16.gmra.mrb[0].mxu0 %v1080
        %v1682 = vpop.f32.mrb[0].mxu0
        %v1683 = vadd.f32 %v1619, %v1682
        %v1684 = vpop.f32.mrb[0].mxu0
        %v1685 = vpop.f32.mrb[0].mxu0
        %v1686 = vadd.f32 %v1622, %v1685
        %v1687 = vpop.f32.mrb[0].mxu0
        %1688 = vmatprep.mubr.bf16.mxu0 %v1099
        %1689 = vmatmul.mubr.bf16.gmra.mrb[0].mxu0 %v1098
        %v1690 = vpop.f32.mrb[0].mxu0
        %v1691 = vadd.f32 %v1627, %v1690
        %v1692 = vpop.f32.mrb[0].mxu0
        %v1693 = vpop.f32.mrb[0].mxu0
        %v1694 = vadd.f32 %v1630, %v1693
        %v1695 = vpop.f32.mrb[0].mxu0
        %1696 = vmatprep.mubr.bf16.mxu0 %v1117
        %1697 = vmatmul.mubr.bf16.gmra.mrb[0].mxu0 %v1116
        %v1698 = vpop.f32.mrb[0].mxu0
        %v1699 = vadd.f32 %v1635, %v1698
        %v1700 = vpop.f32.mrb[0].mxu0
        %v1701 = vpop.f32.mrb[0].mxu0
        %v1702 = vpop.f32.mrb[0].mxu0
        %1703 = vdwg.mxu0
        %1704 = vmatprep.subr.bf16.mxu0 0
        %1705 = vmatpush1.bf16.msra.mxu0 %v780
        %1706 = vmatprep.subr.bf16.mxu0 0
        %1707 = vmatpush1.bf16.msra.mxu0 %v781
        %1708 = vmatprep.subr.bf16.mxu0 0
        %1709 = vmatpush1.bf16.msra.mxu0 %v782
        %1710 = vmatprep.subr.bf16.mxu0 0
        %1711 = vmatpush1.bf16.msra.mxu0 %v783
        %1712 = vmatprep.subr.bf16.mxu0 0
        %1713 = vmatpush1.bf16.msra.mxu0 %v784
        %1714 = vmatprep.subr.bf16.mxu0 0
        %1715 = vmatpush1.bf16.msra.mxu0 %v785
        %1716 = vmatprep.subr.bf16.mxu0 0
        %1717 = vmatpush1.bf16.msra.mxu0 %v786
        %1718 = vmatprep.subr.bf16.mxu0 0
        %1719 = vmatpush1.bf16.msra.mxu0 %v787
        %1720 = vmatprep.subr.bf16.mxu0 0
        %1721 = vmatpush1.bf16.msra.mxu0 %v788
        %1722 = vmatprep.subr.bf16.mxu0 0
        %1723 = vmatpush1.bf16.msra.mxu0 %v789
        %1724 = vmatprep.subr.bf16.mxu0 0
        %1725 = vmatpush1.bf16.msra.mxu0 %v790
        %1726 = vmatprep.subr.bf16.mxu0 0
        %1727 = vmatpush1.bf16.msra.mxu0 %v791
        %1728 = vmatprep.subr.bf16.mxu0 0
        %1729 = vmatpush1.bf16.msra.mxu0 %v792
        %1730 = vmatprep.subr.bf16.mxu0 0
        %1731 = vmatpush1.bf16.msra.mxu0 %v793
        %1732 = vmatprep.subr.bf16.mxu0 0
        %1733 = vmatpush1.bf16.msra.mxu0 %v794
        %1734 = vmatprep.subr.bf16.mxu0 0
        %1735 = vmatpush1.bf16.msra.mxu0 %v795
        %1736 = vmatprep.mubr.bf16.mxu0 %v1065
        %1737 = vmatmul.mubr.bf16.gmra.mrb[0].mxu0 %v1064
        %v1738 = vpop.f32.mrb[0].mxu0
        %v1739 = vadd.f32 %v1675, %v1738
        %v1740 = vpop.f32.mrb[0].mxu0
        %v1741 = vpop.f32.mrb[0].mxu0
        %v1742 = vadd.f32 %v1678, %v1741
        %v1743 = vpop.f32.mrb[0].mxu0
        %1744 = vmatprep.mubr.bf16.mxu0 %v1083
        %1745 = vmatmul.mubr.bf16.gmra.mrb[0].mxu0 %v1082
        %v1746 = vpop.f32.mrb[0].mxu0
        %v1747 = vadd.f32 %v1683, %v1746
        %v1748 = vpop.f32.mrb[0].mxu0
        %v1749 = vpop.f32.mrb[0].mxu0
        %v1750 = vadd.f32 %v1686, %v1749
        %v1751 = vpop.f32.mrb[0].mxu0
        %1752 = vmatprep.mubr.bf16.mxu0 %v1101
        %1753 = vmatmul.mubr.bf16.gmra.mrb[0].mxu0 %v1100
        %v1754 = vpop.f32.mrb[0].mxu0
        %v1755 = vadd.f32 %v1691, %v1754
        %v1756 = vpop.f32.mrb[0].mxu0
        %v1757 = vpop.f32.mrb[0].mxu0
        %v1758 = vadd.f32 %v1694, %v1757
        %v1759 = vpop.f32.mrb[0].mxu0
        %1760 = vmatprep.mubr.bf16.mxu0 %v1119
        %1761 = vmatmul.mubr.bf16.gmra.mrb[0].mxu0 %v1118
        %v1762 = vpop.f32.mrb[0].mxu0
        %v1763 = vadd.f32 %v1699, %v1762
        %v1764 = vpop.f32.mrb[0].mxu0
        %v1765 = vpop.f32.mrb[0].mxu0
        %v1766 = vpop.f32.mrb[0].mxu0
        %1767 = vdwg.mxu0
        %v1768 = vld [vmem:[%s572] sm:$0x1]
        %v1770 = vlaneseq
        %v1771 = vshrl.u32 %v1770, 7
        %v1772 = vsub.s32 0, %v1771
        %v1773 = vrot.slane %v1768, %v1772
        %v1775 = vmul.f32 %v1739, %v1773
        %v1776 = vmul.f32 %v1742, %v1773
        %v1777 = vmul.f32 %v1747, %v1773
        %v1778 = vmul.f32 %v1750, %v1773
        %v1779 = vmul.f32 %v1755, %v1773
        %v1780 = vmul.f32 %v1758, %v1773
        %v1781 = vmul.f32 %v1763, %v1773
        %v1782 = vadd.f32 %v1775, %v1776
        %v1783 = vadd.f32 %v1782, %v1777
        %v1784 = vadd.f32 %v1783, %v1778
        %v1785 = vadd.f32 %v1784, %v1779
        %v1786 = vadd.f32 %v1785, %v1780
        %vm1787 = vcmask 1040384
        %v1788 = vsel %vm1787, %v1781, 0.0
        %v1789 = vadd.f32 %v1786, %v1788
        %v1790 = vrot.slane %v1789, 4
        %v1791 = vadd.f32 %v1789, %v1790
        %v1792 = vrot.slane %v1791, 2
        %v1793 = vadd.f32 %v1791, %v1792
        %v1794 = vrot.slane %v1793, 1
        %v1795 = vadd.f32 %v1793, %v1794
        %v1796 = vmul.f32 %v1775, %v1775
        %v1797 = vmul.f32 %v1776, %v1776
        %v1798 = vmul.f32 %v1777, %v1777
        %v1799 = vmul.f32 %v1778, %v1778
        %v1800 = vmul.f32 %v1779, %v1779
        %v1801 = vmul.f32 %v1780, %v1780
        %v1802 = vmul.f32 %v1781, %v1781
        %v1803 = vadd.f32 %v1796, %v1797
        %v1804 = vadd.f32 %v1803, %v1798
        %v1805 = vadd.f32 %v1804, %v1799
        %v1806 = vadd.f32 %v1805, %v1800
        %v1807 = vadd.f32 %v1806, %v1801
        %v1808 = vsel %vm1787, %v1802, 0.0
        %v1809 = vadd.f32 %v1807, %v1808
        %v1810 = vrot.slane %v1809, 4
        %v1811 = vadd.f32 %v1809, %v1810
        %v1812 = vrot.slane %v1811, 2
        %v1813 = vadd.f32 %v1811, %v1812
        %v1814 = vrot.slane %v1813, 1
        %v1815 = vadd.f32 %v1813, %v1814
        %v1816 = vmul.f32 %v1795, 0.020408163
        %v1817 = vmul.f32 %v1815, 0.020408163
        %v1818 = vmul.f32 %v1816, %v1816
        %v1819 = vsub.f32 %v1817, %v1818
        %v1820 = vadd.f32 %v1819, 1e-05
        %v1821 = vrsqrt.pop %v1820
        %v1822 = vld [vmem:[%s575] sm:$0x1]
        %v1823 = vmul.f32 %v1821, %v1822
        %v1824 = vsub.f32 %v1775, %v1816
        %v1825 = vsub.f32 %v1776, %v1816
        %v1826 = vsub.f32 %v1777, %v1816
        %v1827 = vsub.f32 %v1778, %v1816
        %v1828 = vsub.f32 %v1779, %v1816
        %v1829 = vsub.f32 %v1780, %v1816
        %v1830 = vsub.f32 %v1781, %v1816
        %v1831 = vlaneseq
        %v1832 = vshrl.u32 %v1831, 7
        %v1833 = vsub.s32 0, %v1832
        %v1834 = vrot.slane %v1823, %v1833
        %v1835 = vmul.f32 %v1824, %v1834
        %v1836 = vmul.f32 %v1825, %v1834
        %v1837 = vmul.f32 %v1826, %v1834
        %v1838 = vmul.f32 %v1827, %v1834
        %v1839 = vmul.f32 %v1828, %v1834
        %v1840 = vmul.f32 %v1829, %v1834
        %v1841 = vmul.f32 %v1830, %v1834
        %v1842 = vld [vmem:[%s578] sm:$0x1]
        %v1844 = vlaneseq
        %v1845 = vshrl.u32 %v1844, 7
        %v1846 = vsub.s32 0, %v1845
        %v1847 = vrot.slane %v1842, %v1846
        %v1849 = vadd.f32 %v1835, %v1847
        %v1850 = vadd.f32 %v1836, %v1847
        %v1851 = vadd.f32 %v1837, %v1847
        %v1852 = vadd.f32 %v1838, %v1847
        %v1853 = vadd.f32 %v1839, %v1847
        %v1854 = vadd.f32 %v1840, %v1847
        %v1855 = vadd.f32 %v1841, %v1847
        %1856 = vst [vmem:[%s569] sm:$0xff] %v1849
        %1857 = vst [vmem:[%s569 + $0x8] sm:$0xff] %v1850
        %1858 = vst [vmem:[%s569 + $0x10] sm:$0xff] %v1851
        %1859 = vst [vmem:[%s569 + $0x18] sm:$0xff] %v1852
        %1860 = vst [vmem:[%s569 + $0x20] sm:$0xff] %v1853
        %1861 = vst [vmem:[%s569 + $0x28] sm:$0xff] %v1854
        %1862 = vst [vmem:[%s569 + $0x30] sm:$0x1] %v1855
        %s1863 = sand.u32 %s149, 1
        %s1864 = sand.u32 %s149, 1
        %s1865 = smul.addr %s1864, 56
        %s1866 = scalar_lea.vmem [#allocation3], %s1865
        // Predicated region
        $region79: #{relu_conv_bn.1} parent=73 // pred_check
          %p1867 = pneg %p159
        $region80: #{relu_conv_bn.1} parent=73 // pred_check_branch
          %1869 = sbr.rel (%p1867) target = $region82
        $region81: #{relu_conv_bn.1} parent=73 // pred_region
          %s1870 = smul.addr %s16, 8
          %s1871 = scalar_lea.vmem %s5, %s1870
          // Predicated region
          $region83: #{relu_conv_bn.1} parent=81 // pred_check
            _
          $region84: #{relu_conv_bn.1} parent=81 // pred_check_branch
            %1873 = sbr.rel (0) target = $region86
          $region85: #{relu_conv_bn.1} parent=81 // pred_region
            // Predicated region
            $region87: #{relu_conv_bn.1} parent=85 // pred_check
              _
            $region88: #{relu_conv_bn.1} parent=85 // pred_check_branch
              %1875 = sbr.rel (0) target = $region90
            $region89: #{relu_conv_bn.1} parent=85 // pred_region
              // Predicated region
              $region102: #{relu_conv_bn.1} parent=89 // pred_check
                _
              $region103: #{relu_conv_bn.1} parent=89 // pred_check_branch
                %1902 = sbr.rel (0) target = $region105
              $region104: #{relu_conv_bn.1} parent=89 // pred_region
                loop: start=0, step=1, limit=1
                $region106: #{relu_conv_bn.1} parent=104 // loop_pre_header
                  _
                $region107: #{relu_conv_bn.1} parent=104 // loop_header
                  %s1904 = sphi 0, %s1908
                  %p1905 = scmp.ge.s32.totalorder %s1904, 1
                  %s1909 = sphi %s1866, %s1866
                  %s1910 = sphi %s1871, %s1871
                $region108: #{relu_conv_bn.1} parent=104 // loop_header_branch
                  %1907 = sbr.rel (%p1905) target = $region112
                $region109: #{relu_conv_bn.1} parent=104 // loop_body
                  %v1911 = vld [vmem:[%s1909] sm:$0xff]
                  %1912 = vst [vmem:[%s1910] sm:$0xff] %v1911
                  %v1913 = vld [vmem:[%s1909 + $0x8] sm:$0xff]
                  %1914 = vst [vmem:[%s1910 + $0x10] sm:$0xff] %v1913
                  %v1915 = vld [vmem:[%s1909 + $0x10] sm:$0xff]
                  %1916 = vst [vmem:[%s1910 + $0x20] sm:$0xff] %v1915
                  %v1917 = vld [vmem:[%s1909 + $0x18] sm:$0xff]
                  %1918 = vst [vmem:[%s1910 + $0x30] sm:$0xff] %v1917
                  %v1919 = vld [vmem:[%s1909 + $0x20] sm:$0xff]
                  %1920 = vst [vmem:[%s1910 + $0x40] sm:$0xff] %v1919
                  %v1921 = vld [vmem:[%s1909 + $0x28] sm:$0xff]
                  %1922 = vst [vmem:[%s1910 + $0x50] sm:$0xff] %v1921
                  %v1923 = vld [vmem:[%s1909 + $0x30] sm:$0xff]
                  %1924 = vst [vmem:[%s1910 + $0x60] sm:$0xff] %v1923
                $region110: #{relu_conv_bn.1} parent=104 // loop_footer
                  %s1908 = sadd.s32 1, %s1904
                $region111: #{relu_conv_bn.1} parent=104 // loop_footer_branch
                  %1903 = sbr.rel target = $region107
                $region112: #{relu_conv_bn.1} parent=104 // loop_exit
                  _
              $region105: #{relu_conv_bn.1} parent=89 // pred_fallthru
                _
              // Predicated region
              $region113: #{relu_conv_bn.1} parent=89 // pred_check
                _
              $region114: #{relu_conv_bn.1} parent=89 // pred_check_branch
                %1926 = sbr.rel target = $region116
              $region115: #{relu_conv_bn.1} parent=89 // pred_region
                _
              $region116: #{relu_conv_bn.1} parent=89 // pred_fallthru
                _
            $region90: #{relu_conv_bn.1} parent=85 // pred_fallthru
              _
            // Predicated region
            $region91: #{relu_conv_bn.1} parent=85 // pred_check
              _
            $region92: #{relu_conv_bn.1} parent=85 // pred_check_branch
              %1877 = sbr.rel target = $region94
            $region93: #{relu_conv_bn.1} parent=85 // pred_region
              loop: start=0, step=1, limit=1
              $region95: #{relu_conv_bn.1} parent=93 // loop_pre_header
                _
              $region96: #{relu_conv_bn.1} parent=93 // loop_header
                %s1880 = sphi 0, %s1884
                %p1881 = scmp.ge.s32.totalorder %s1880, 1
                %s1885 = sphi %s1866, %s1866
                %s1886 = sphi %s1871, %s1871
              $region97: #{relu_conv_bn.1} parent=93 // loop_header_branch
                %1883 = sbr.rel (%p1881) target = $region101
              $region98: #{relu_conv_bn.1} parent=93 // loop_body
                %v1887 = vld [vmem:[%s1885] sm:$0xff]
                %1888 = vst [vmem:[%s1886] sm:$0xff] %v1887
                %v1889 = vld [vmem:[%s1885 + $0x8] sm:$0xff]
                %1890 = vst [vmem:[%s1886 + $0x10] sm:$0xff] %v1889
                %v1891 = vld [vmem:[%s1885 + $0x10] sm:$0xff]
                %1892 = vst [vmem:[%s1886 + $0x20] sm:$0xff] %v1891
                %v1893 = vld [vmem:[%s1885 + $0x18] sm:$0xff]
                %1894 = vst [vmem:[%s1886 + $0x30] sm:$0xff] %v1893
                %v1895 = vld [vmem:[%s1885 + $0x20] sm:$0xff]
                %1896 = vst [vmem:[%s1886 + $0x40] sm:$0xff] %v1895
                %v1897 = vld [vmem:[%s1885 + $0x28] sm:$0xff]
                %1898 = vst [vmem:[%s1886 + $0x50] sm:$0xff] %v1897
                %v1899 = vld [vmem:[%s1885 + $0x30] sm:$0xff]
                %1900 = vst [vmem:[%s1886 + $0x60] sm:$0xff] %v1899
              $region99: #{relu_conv_bn.1} parent=93 // loop_footer
                %s1884 = sadd.s32 1, %s1880
              $region100: #{relu_conv_bn.1} parent=93 // loop_footer_branch
                %1879 = sbr.rel target = $region96
              $region101: #{relu_conv_bn.1} parent=93 // loop_exit
                _
            $region94: #{relu_conv_bn.1} parent=85 // pred_fallthru
              _
          $region86: #{relu_conv_bn.1} parent=81 // pred_fallthru
            _
          %1927 = vnop
        $region82: #{relu_conv_bn.1} parent=73 // pred_fallthru
          _
      $region74: #{relu_conv_bn.1} parent=5 // pred_fallthru
        _
      %p1928 = scmp.le.s32.totalorder 2, %s11
      // Predicated region
      $region117: #{relu_conv_bn.1} parent=5 // pred_check
        %p1929 = pneg %p1928
      $region118: #{relu_conv_bn.1} parent=5 // pred_check_branch
        %1931 = sbr.rel (%p1929) target = $region120
      $region119: #{relu_conv_bn.1} parent=5 // pred_region
        %s1932 = ssub.s32 %s11, 2
        // Predicated region
        $region121: #{relu_conv_bn.1} parent=119 // pred_check
          %p1933 = pneg %p165
        $region122: #{relu_conv_bn.1} parent=119 // pred_check_branch
          %1935 = sbr.rel (%p1933) target = $region124
        $region123: #{relu_conv_bn.1} parent=119 // pred_region
          %s1936 = sand.u32 %s150, 1
          %s1937 = sand.u32 %s150, 1
          %s1938 = smul.addr %s1937, 56
          %s1939 = scalar_lea.vmem [#allocation3], %s1938
        $region124: #{relu_conv_bn.1} parent=119 // pred_fallthru
          _
      $region120: #{relu_conv_bn.1} parent=5 // pred_fallthru
        _
    $region6: #{relu_conv_bn.1} parent=1 // loop_footer
      %s15 = sadd.s32 1, %s11
    $region7: #{relu_conv_bn.1} parent=1 // loop_footer_branch
      %10 = sbr.rel target = $region3
    $region8: #{relu_conv_bn.1} parent=1 // loop_exit
      _

</llo_original>
